<compile_context>
chip_gen: v6e
topology: v6e:2x2x1
jax: 0.10.0
libtpu: 0.0.40
codegen_flags: <defaults>
</compile_context>

<pallas_src>
import jax
import jax.numpy as jnp
from jax.experimental import pallas as pl
from jax.experimental.pallas import tpu as pltpu


# ----------------------------- model config ---------------------------------
PARAMS = dict(
    n_features=2,
    n_players=4,
    discrim_rnn_dim=32,
    discrim_num_layers=2,
    dataset="basketball",   # -> y_dim = n_players * 2 * n_features = 16
    cuda=False,
)

H = PARAMS["discrim_rnn_dim"]                         # 32
D = PARAMS["n_players"] * 2 * PARAMS["n_features"]    # 16 (state_dim == action_dim)
NUM_LAYERS = PARAMS["discrim_num_layers"]             # 2 (kernel hardcodes 2 layers)

SEQ = 8
BATCH = 4


# ------------------------------ Pallas kernel -------------------------------
def discriminator_kernel(x_ref, a_ref, wi_ref, wh_ref, bg_ref,
                         w1_ref, b1_ref, w2_ref, b2_ref,
                         out_ref, h1all_ref):
    """Whole forward pass in a single invocation.

    x_ref      : (seq, batch, D)        inputs, time-major
    a_ref      : (seq*batch, D)         actions, pre-flattened (row t*batch+b)
    wi_ref     : (D+H, 3H)              fused input->hidden weights, layers 0|1
    wh_ref     : (2H, 3H)               fused hidden->hidden weights, layers 0|1
    bg_ref     : (2, 4H)                per-layer [b_r | b_z | b_in | b_hn]
    w1_ref     : (H+D, H)               dense1^T: rows 0:H act on p, H: on a
    b1_ref     : (1, H), w2_ref: (H, 1), b2_ref: (1, 1)
    out_ref    : (seq*batch, 1)         sigmoid probabilities
    h1all_ref  : (seq*batch, H)         VMEM scratch, top-layer GRU outputs
    """
    seq, batch, d = x_ref.shape
    h = wh_ref.shape[0] // 2

    # Load all weights/biases once; they stay resident across the unrolled loop.
    wi0 = wi_ref[0:d, :]          # (D, 3H)   layer-0 input weights  [r|z|n]
    wi1 = wi_ref[d:d + h, :]      # (H, 3H)   layer-1 input weights
    wh0 = wh_ref[0:h, :]          # (H, 3H)
    wh1 = wh_ref[h:2 * h, :]      # (H, 3H)
    bg0 = bg_ref[0:1, :]          # (1, 4H)   [b_ir+b_hr | b_iz+b_hz | b_in | b_hn]
    bg1 = bg_ref[1:2, :]          # (1, 4H)

    def gru_cell(x, h_prev, wi, wh, b):
        # PyTorch GRUCell semantics, gate order (r, z, n), fused matmuls.
        gi = jnp.dot(x, wi, preferred_element_type=jnp.float32)       # (B, 3H)
        gh = jnp.dot(h_prev, wh, preferred_element_type=jnp.float32)  # (B, 3H)
        rz = jax.nn.sigmoid(gi[:, :2 * h] + gh[:, :2 * h] + b[:, :2 * h])
        r = rz[:, :h]
        z = rz[:, h:]
        n = jnp.tanh(gi[:, 2 * h:] + b[:, 2 * h:3 * h]
                     + r * (gh[:, 2 * h:] + b[:, 3 * h:]))
        return (1.0 - z) * n + z * h_prev

    h0 = jnp.zeros((batch, h), jnp.float32)
    h1 = jnp.zeros((batch, h), jnp.float32)

    # seq is small and static -> full unroll with compile-time indices
    # (equivalent to lax.fori_loop(..., unroll=True), hidden state in vregs).
    for t in range(seq):
        x_t = x_ref[t]                                  # (batch, D)
        h0 = gru_cell(x_t, h0, wi0, wh0, bg0)
        h1 = gru_cell(h0, h1, wi1, wh1, bg1)
        h1all_ref[t * batch:(t + 1) * batch, :] = h1    # stash top-layer output

    # ---- batched head over all seq*batch rows (off the recurrent path) -----
    p_all = h1all_ref[...]                              # (seq*batch, H)
    a_all = a_ref[...]                                  # (seq*batch, D)
    d1 = (jnp.dot(p_all, w1_ref[0:h, :], preferred_element_type=jnp.float32)
          + jnp.dot(a_all, w1_ref[h:, :], preferred_element_type=jnp.float32)
          + b1_ref[...])
    d1 = jnp.maximum(d1, 0.0)
    logits = jnp.dot(d1, w2_ref[...], preferred_element_type=jnp.float32) + b2_ref[...]
    out_ref[...] = jax.nn.sigmoid(logits).astype(out_ref.dtype)


def pack_params(p):
    """Pack PyTorch-style parameters into the 7 slabs the kernel expects."""
    wi_rows, wh_rows, b_rows = [], [], []
    for layer in p["gru"]:
        w_ih, w_hh = layer["w_ih"], layer["w_hh"]     # (3H, in), (3H, H), gates [r|z|n]
        b_ih, b_hh = layer["b_ih"], layer["b_hh"]     # (3H,), (3H,)
        wi_rows.append(w_ih.T)                        # (in, 3H)
        wh_rows.append(w_hh.T)                        # (H, 3H)
        b_r = b_ih[0:H] + b_hh[0:H]                   # pre-combined r bias
        b_z = b_ih[H:2 * H] + b_hh[H:2 * H]           # pre-combined z bias
        b_in = b_ih[2 * H:3 * H]
        b_hn = b_hh[2 * H:3 * H]                      # stays inside r*(...) term
        b_rows.append(jnp.concatenate([b_r, b_z, b_in, b_hn])[None, :])  # (1, 4H)
    wi_all = jnp.concatenate(wi_rows, axis=0)         # (D+H, 3H)
    wh_all = jnp.concatenate(wh_rows, axis=0)         # (2H, 3H)
    b_gru = jnp.concatenate(b_rows, axis=0)           # (2, 4H)
    w1_all = p["w_d1"].T                              # (H+D, H): [p-part ; a-part]
    b1 = p["b_d1"][None, :]                           # (1, H)
    w2 = p["w_d2"].T                                  # (H, 1)
    b2 = p["b_d2"][None, :]                           # (1, 1)
    return wi_all, wh_all, b_gru, w1_all, b1, w2, b2


def discriminator_forward(x, a, params):
    """x, a: [seq, batch, D] float32 -> prob: [seq, batch, 1] float32."""
    seq, batch, d = x.shape
    assert d == D and a.shape == x.shape

    wi_all, wh_all, b_gru, w1_all, b1, w2, b2 = pack_params(params)
    a2d = a.reshape(seq * batch, d)                   # head is batched over rows

    vmem = pl.BlockSpec(memory_space=pltpu.MemorySpace.VMEM)
    fn = pl.pallas_call(
        discriminator_kernel,
        out_shape=jax.ShapeDtypeStruct((seq * batch, 1), jnp.float32),
        in_specs=[vmem] * 9,
        out_specs=vmem,
        scratch_shapes=[pltpu.VMEM((seq * batch, H), jnp.float32)],
    )
    out2d = fn(x, a2d, wi_all, wh_all, b_gru, w1_all, b1, w2, b2)
    return out2d.reshape(seq, batch, 1)


# ------------------------- deterministic parameters --------------------------
def init_params(key):
    """PyTorch-layout parameters: nn.GRU(D, H, 2), nn.Linear(H+D, H), nn.Linear(H, 1)."""
    keys = iter(jax.random.split(key, 32))

    def w(shape, scale=0.1):
        return jax.random.normal(next(keys), shape, jnp.float32) * scale

    gru = []
    for layer in range(NUM_LAYERS):
        in_dim = D if layer == 0 else H
        gru.append(dict(
            w_ih=w((3 * H, in_dim)),   # gate rows [r | z | n]
            w_hh=w((3 * H, H)),
            b_ih=w((3 * H,)),
            b_hh=w((3 * H,)),
        ))
    return dict(
        gru=gru,
        w_d1=w((H, H + D)),            # dense1: Linear(H+D, H)
        b_d1=w((H,)),
        w_d2=w((1, H)),                # dense2: Linear(H, 1)
        b_d2=w((1,)),
    )


# ------------------------------ pure-JAX reference ---------------------------
def reference_forward(x, a, p):
    seq, batch, _ = x.shape
    hs = [jnp.zeros((batch, H), jnp.float32) for _ in range(NUM_LAYERS)]
    outs = []
    for t in range(seq):
        inp = x[t]
        for layer in range(NUM_LAYERS):
            lp = p["gru"][layer]
            gi = inp @ lp["w_ih"].T + lp["b_ih"]
            gh = hs[layer] @ lp["w_hh"].T + lp["b_hh"]
            r = jax.nn.sigmoid(gi[:, :H] + gh[:, :H])
            z = jax.nn.sigmoid(gi[:, H:2 * H] + gh[:, H:2 * H])
            n = jnp.tanh(gi[:, 2 * H:] + r * gh[:, 2 * H:])
            h_new = (1.0 - z) * n + z * hs[layer]
            hs[layer] = h_new
            inp = h_new
        cat = jnp.concatenate([inp, a[t]], axis=1)
        d1 = jnp.maximum(cat @ p["w_d1"].T + p["b_d1"], 0.0)
        outs.append(jax.nn.sigmoid(d1 @ p["w_d2"].T + p["b_d2"]))
    return jnp.stack(outs, axis=0)


# ----------------------------------- main ------------------------------------
if __name__ == "__main__":
    key = jax.random.PRNGKey(0)
    kx, ka, kp = jax.random.split(key, 3)

    x = jax.random.normal(kx, (SEQ, BATCH, D), jnp.float32)
    a = jax.random.normal(ka, (SEQ, BATCH, D), jnp.float32)
    params = init_params(kp)

    out = discriminator_forward(x, a, params)
    out = jax.block_until_ready(out)

    ref = reference_forward(x, a, params)
    assert out.shape == (SEQ, BATCH, 1)
    assert jnp.allclose(out, ref, rtol=2e-4, atol=2e-5), (
        f"max abs err {jnp.max(jnp.abs(out - ref))}")

    print("KERNEL_OK")
</pallas_src>

<mosaic_0001>
module attributes {stable_mosaic.version = 11 : i64} {
  func.func @discriminator_kernel(%arg0: memref<8x4x16xf32, #tpu.memory_space<vmem>>, %arg1: memref<32x16xf32, #tpu.memory_space<vmem>>, %arg2: memref<48x96xf32, #tpu.memory_space<vmem>>, %arg3: memref<64x96xf32, #tpu.memory_space<vmem>>, %arg4: memref<2x128xf32, #tpu.memory_space<vmem>>, %arg5: memref<48x32xf32, #tpu.memory_space<vmem>>, %arg6: memref<1x32xf32, #tpu.memory_space<vmem>>, %arg7: memref<32x1xf32, #tpu.memory_space<vmem>>, %arg8: memref<1x1xf32, #tpu.memory_space<vmem>>, %arg9: memref<32x1xf32, #tpu.memory_space<vmem>>, %arg10: memref<32x32xf32, #tpu.memory_space<vmem>>) attributes {dimension_semantics = [], scalar_prefetch = 0 : i64, scratch_operands = 1 : i64, tpu.core_type = #tpu.core_type<tc>} {
    %c0 = arith.constant 0 : index
    %c0_0 = arith.constant 0 : index
    %0 = vector.load %arg2[%c0, %c0_0] : memref<48x96xf32, #tpu.memory_space<vmem>>, vector<16x96xf32>
    %c16 = arith.constant 16 : index
    %c0_1 = arith.constant 0 : index
    %1 = vector.load %arg2[%c16, %c0_1] : memref<48x96xf32, #tpu.memory_space<vmem>>, vector<32x96xf32>
    %c0_2 = arith.constant 0 : index
    %c0_3 = arith.constant 0 : index
    %2 = vector.load %arg3[%c0_2, %c0_3] : memref<64x96xf32, #tpu.memory_space<vmem>>, vector<32x96xf32>
    %c32 = arith.constant 32 : index
    %c0_4 = arith.constant 0 : index
    %3 = vector.load %arg3[%c32, %c0_4] : memref<64x96xf32, #tpu.memory_space<vmem>>, vector<32x96xf32>
    %c0_5 = arith.constant 0 : index
    %c0_6 = arith.constant 0 : index
    %4 = vector.load %arg4[%c0_5, %c0_6] : memref<2x128xf32, #tpu.memory_space<vmem>>, vector<1x128xf32>
    %c1 = arith.constant 1 : index
    %c0_7 = arith.constant 0 : index
    %5 = vector.load %arg4[%c1, %c0_7] : memref<2x128xf32, #tpu.memory_space<vmem>>, vector<1x128xf32>
    %cst = arith.constant 0.000000e+00 : f32
    %6 = vector.broadcast %cst : f32 to vector<4x32xf32>
    %cst_8 = arith.constant 0.000000e+00 : f32
    %7 = vector.broadcast %cst_8 : f32 to vector<4x32xf32>
    %c0_9 = arith.constant 0 : index
    %c0_10 = arith.constant 0 : index
    %c0_11 = arith.constant 0 : index
    %8 = vector.load %arg0[%c0_9, %c0_10, %c0_11] : memref<8x4x16xf32, #tpu.memory_space<vmem>>, vector<1x4x16xf32>
    %9 = vector.shape_cast %8 : vector<1x4x16xf32> to vector<4x16xf32>
    %cst_12 = arith.constant dense<0.000000e+00> : vector<4x96xf32>
    %10 = tpu.matmul %9, %0, %cst_12 {dimension_numbers = #tpu.dot_dimension_numbers<[1], [0], [0], [1], [0, 0, 1, 1], [], []>} : vector<4x16xf32>, vector<16x96xf32>, vector<4x96xf32> -> vector<4x96xf32>
    %cst_13 = arith.constant dense<0.000000e+00> : vector<4x96xf32>
    %11 = tpu.matmul %6, %2, %cst_13 {dimension_numbers = #tpu.dot_dimension_numbers<[1], [0], [0], [1], [0, 0, 1, 1], [], []>} : vector<4x32xf32>, vector<32x96xf32>, vector<4x96xf32> -> vector<4x96xf32>
    %12 = vector.extract_strided_slice %10 {offsets = [0, 0], sizes = [4, 64], strides = [1, 1]} : vector<4x96xf32> to vector<4x64xf32>
    %13 = vector.extract_strided_slice %11 {offsets = [0, 0], sizes = [4, 64], strides = [1, 1]} : vector<4x96xf32> to vector<4x64xf32>
    %14 = arith.addf %12, %13 : vector<4x64xf32>
    %15 = vector.extract_strided_slice %4 {offsets = [0, 0], sizes = [1, 64], strides = [1, 1]} : vector<1x128xf32> to vector<1x64xf32>
    %16 = vector.broadcast %15 : vector<1x64xf32> to vector<4x64xf32>
    %17 = arith.addf %14, %16 : vector<4x64xf32>
    %18 = arith.negf %17 : vector<4x64xf32>
    %19 = math.exp %18 : vector<4x64xf32>
    %cst_14 = arith.constant 1.000000e+00 : f32
    %20 = vector.broadcast %cst_14 : f32 to vector<4x64xf32>
    %21 = arith.addf %20, %19 : vector<4x64xf32>
    %22 = arith.divf %20, %21 : vector<4x64xf32>
    %23 = vector.extract_strided_slice %22 {offsets = [0, 0], sizes = [4, 32], strides = [1, 1]} : vector<4x64xf32> to vector<4x32xf32>
    %24 = vector.extract_strided_slice %22 {offsets = [0, 32], sizes = [4, 32], strides = [1, 1]} : vector<4x64xf32> to vector<4x32xf32>
    %25 = vector.extract_strided_slice %10 {offsets = [0, 64], sizes = [4, 32], strides = [1, 1]} : vector<4x96xf32> to vector<4x32xf32>
    %26 = vector.extract_strided_slice %4 {offsets = [0, 64], sizes = [1, 32], strides = [1, 1]} : vector<1x128xf32> to vector<1x32xf32>
    %27 = vector.broadcast %26 : vector<1x32xf32> to vector<4x32xf32>
    %28 = arith.addf %25, %27 : vector<4x32xf32>
    %29 = vector.extract_strided_slice %11 {offsets = [0, 64], sizes = [4, 32], strides = [1, 1]} : vector<4x96xf32> to vector<4x32xf32>
    %30 = vector.extract_strided_slice %4 {offsets = [0, 96], sizes = [1, 32], strides = [1, 1]} : vector<1x128xf32> to vector<1x32xf32>
    %31 = vector.broadcast %30 : vector<1x32xf32> to vector<4x32xf32>
    %32 = arith.addf %29, %31 : vector<4x32xf32>
    %33 = arith.mulf %23, %32 : vector<4x32xf32>
    %34 = arith.addf %28, %33 : vector<4x32xf32>
    %35 = math.tanh %34 : vector<4x32xf32>
    %cst_15 = arith.constant 1.000000e+00 : f32
    %36 = vector.broadcast %cst_15 : f32 to vector<4x32xf32>
    %37 = arith.subf %36, %24 : vector<4x32xf32>
    %38 = arith.mulf %37, %35 : vector<4x32xf32>
    %39 = arith.mulf %24, %6 : vector<4x32xf32>
    %40 = arith.addf %38, %39 : vector<4x32xf32>
    %cst_16 = arith.constant dense<0.000000e+00> : vector<4x96xf32>
    %41 = tpu.matmul %40, %1, %cst_16 {dimension_numbers = #tpu.dot_dimension_numbers<[1], [0], [0], [1], [0, 0, 1, 1], [], []>} : vector<4x32xf32>, vector<32x96xf32>, vector<4x96xf32> -> vector<4x96xf32>
    %cst_17 = arith.constant dense<0.000000e+00> : vector<4x96xf32>
    %42 = tpu.matmul %7, %3, %cst_17 {dimension_numbers = #tpu.dot_dimension_numbers<[1], [0], [0], [1], [0, 0, 1, 1], [], []>} : vector<4x32xf32>, vector<32x96xf32>, vector<4x96xf32> -> vector<4x96xf32>
    %43 = vector.extract_strided_slice %41 {offsets = [0, 0], sizes = [4, 64], strides = [1, 1]} : vector<4x96xf32> to vector<4x64xf32>
    %44 = vector.extract_strided_slice %42 {offsets = [0, 0], sizes = [4, 64], strides = [1, 1]} : vector<4x96xf32> to vector<4x64xf32>
    %45 = arith.addf %43, %44 : vector<4x64xf32>
    %46 = vector.extract_strided_slice %5 {offsets = [0, 0], sizes = [1, 64], strides = [1, 1]} : vector<1x128xf32> to vector<1x64xf32>
    %47 = vector.broadcast %46 : vector<1x64xf32> to vector<4x64xf32>
    %48 = arith.addf %45, %47 : vector<4x64xf32>
    %49 = arith.negf %48 : vector<4x64xf32>
    %50 = math.exp %49 : vector<4x64xf32>
    %cst_18 = arith.constant 1.000000e+00 : f32
    %51 = vector.broadcast %cst_18 : f32 to vector<4x64xf32>
    %52 = arith.addf %51, %50 : vector<4x64xf32>
    %53 = arith.divf %51, %52 : vector<4x64xf32>
    %54 = vector.extract_strided_slice %53 {offsets = [0, 0], sizes = [4, 32], strides = [1, 1]} : vector<4x64xf32> to vector<4x32xf32>
    %55 = vector.extract_strided_slice %53 {offsets = [0, 32], sizes = [4, 32], strides = [1, 1]} : vector<4x64xf32> to vector<4x32xf32>
    %56 = vector.extract_strided_slice %41 {offsets = [0, 64], sizes = [4, 32], strides = [1, 1]} : vector<4x96xf32> to vector<4x32xf32>
    %57 = vector.extract_strided_slice %5 {offsets = [0, 64], sizes = [1, 32], strides = [1, 1]} : vector<1x128xf32> to vector<1x32xf32>
    %58 = vector.broadcast %57 : vector<1x32xf32> to vector<4x32xf32>
    %59 = arith.addf %56, %58 : vector<4x32xf32>
    %60 = vector.extract_strided_slice %42 {offsets = [0, 64], sizes = [4, 32], strides = [1, 1]} : vector<4x96xf32> to vector<4x32xf32>
    %61 = vector.extract_strided_slice %5 {offsets = [0, 96], sizes = [1, 32], strides = [1, 1]} : vector<1x128xf32> to vector<1x32xf32>
    %62 = vector.broadcast %61 : vector<1x32xf32> to vector<4x32xf32>
    %63 = arith.addf %60, %62 : vector<4x32xf32>
    %64 = arith.mulf %54, %63 : vector<4x32xf32>
    %65 = arith.addf %59, %64 : vector<4x32xf32>
    %66 = math.tanh %65 : vector<4x32xf32>
    %cst_19 = arith.constant 1.000000e+00 : f32
    %67 = vector.broadcast %cst_19 : f32 to vector<4x32xf32>
    %68 = arith.subf %67, %55 : vector<4x32xf32>
    %69 = arith.mulf %68, %66 : vector<4x32xf32>
    %70 = arith.mulf %55, %7 : vector<4x32xf32>
    %71 = arith.addf %69, %70 : vector<4x32xf32>
    %c0_20 = arith.constant 0 : index
    %c0_21 = arith.constant 0 : index
    %72 = vector.load %arg10[%c0_20, %c0_21] : memref<32x32xf32, #tpu.memory_space<vmem>>, vector<4x32xf32>
    tpu.vector_store %arg10[%c0_20, %c0_21], %71 {strides = array<i32>} : memref<32x32xf32, #tpu.memory_space<vmem>>, vector<4x32xf32>,
    %c1_22 = arith.constant 1 : index
    %c0_23 = arith.constant 0 : index
    %c0_24 = arith.constant 0 : index
    %73 = vector.load %arg0[%c1_22, %c0_23, %c0_24] : memref<8x4x16xf32, #tpu.memory_space<vmem>>, vector<1x4x16xf32>
    %74 = vector.shape_cast %73 : vector<1x4x16xf32> to vector<4x16xf32>
    %cst_25 = arith.constant dense<0.000000e+00> : vector<4x96xf32>
    %75 = tpu.matmul %74, %0, %cst_25 {dimension_numbers = #tpu.dot_dimension_numbers<[1], [0], [0], [1], [0, 0, 1, 1], [], []>} : vector<4x16xf32>, vector<16x96xf32>, vector<4x96xf32> -> vector<4x96xf32>
    %cst_26 = arith.constant dense<0.000000e+00> : vector<4x96xf32>
    %76 = tpu.matmul %40, %2, %cst_26 {dimension_numbers = #tpu.dot_dimension_numbers<[1], [0], [0], [1], [0, 0, 1, 1], [], []>} : vector<4x32xf32>, vector<32x96xf32>, vector<4x96xf32> -> vector<4x96xf32>
    %77 = vector.extract_strided_slice %75 {offsets = [0, 0], sizes = [4, 64], strides = [1, 1]} : vector<4x96xf32> to vector<4x64xf32>
    %78 = vector.extract_strided_slice %76 {offsets = [0, 0], sizes = [4, 64], strides = [1, 1]} : vector<4x96xf32> to vector<4x64xf32>
    %79 = arith.addf %77, %78 : vector<4x64xf32>
    %80 = vector.extract_strided_slice %4 {offsets = [0, 0], sizes = [1, 64], strides = [1, 1]} : vector<1x128xf32> to vector<1x64xf32>
    %81 = vector.broadcast %80 : vector<1x64xf32> to vector<4x64xf32>
    %82 = arith.addf %79, %81 : vector<4x64xf32>
    %83 = arith.negf %82 : vector<4x64xf32>
    %84 = math.exp %83 : vector<4x64xf32>
    %cst_27 = arith.constant 1.000000e+00 : f32
    %85 = vector.broadcast %cst_27 : f32 to vector<4x64xf32>
    %86 = arith.addf %85, %84 : vector<4x64xf32>
    %87 = arith.divf %85, %86 : vector<4x64xf32>
    %88 = vector.extract_strided_slice %87 {offsets = [0, 0], sizes = [4, 32], strides = [1, 1]} : vector<4x64xf32> to vector<4x32xf32>
    %89 = vector.extract_strided_slice %87 {offsets = [0, 32], sizes = [4, 32], strides = [1, 1]} : vector<4x64xf32> to vector<4x32xf32>
    %90 = vector.extract_strided_slice %75 {offsets = [0, 64], sizes = [4, 32], strides = [1, 1]} : vector<4x96xf32> to vector<4x32xf32>
    %91 = vector.extract_strided_slice %4 {offsets = [0, 64], sizes = [1, 32], strides = [1, 1]} : vector<1x128xf32> to vector<1x32xf32>
    %92 = vector.broadcast %91 : vector<1x32xf32> to vector<4x32xf32>
    %93 = arith.addf %90, %92 : vector<4x32xf32>
    %94 = vector.extract_strided_slice %76 {offsets = [0, 64], sizes = [4, 32], strides = [1, 1]} : vector<4x96xf32> to vector<4x32xf32>
    %95 = vector.extract_strided_slice %4 {offsets = [0, 96], sizes = [1, 32], strides = [1, 1]} : vector<1x128xf32> to vector<1x32xf32>
    %96 = vector.broadcast %95 : vector<1x32xf32> to vector<4x32xf32>
    %97 = arith.addf %94, %96 : vector<4x32xf32>
    %98 = arith.mulf %88, %97 : vector<4x32xf32>
    %99 = arith.addf %93, %98 : vector<4x32xf32>
    %100 = math.tanh %99 : vector<4x32xf32>
    %cst_28 = arith.constant 1.000000e+00 : f32
    %101 = vector.broadcast %cst_28 : f32 to vector<4x32xf32>
    %102 = arith.subf %101, %89 : vector<4x32xf32>
    %103 = arith.mulf %102, %100 : vector<4x32xf32>
    %104 = arith.mulf %89, %40 : vector<4x32xf32>
    %105 = arith.addf %103, %104 : vector<4x32xf32>
    %cst_29 = arith.constant dense<0.000000e+00> : vector<4x96xf32>
    %106 = tpu.matmul %105, %1, %cst_29 {dimension_numbers = #tpu.dot_dimension_numbers<[1], [0], [0], [1], [0, 0, 1, 1], [], []>} : vector<4x32xf32>, vector<32x96xf32>, vector<4x96xf32> -> vector<4x96xf32>
    %cst_30 = arith.constant dense<0.000000e+00> : vector<4x96xf32>
    %107 = tpu.matmul %71, %3, %cst_30 {dimension_numbers = #tpu.dot_dimension_numbers<[1], [0], [0], [1], [0, 0, 1, 1], [], []>} : vector<4x32xf32>, vector<32x96xf32>, vector<4x96xf32> -> vector<4x96xf32>
    %108 = vector.extract_strided_slice %106 {offsets = [0, 0], sizes = [4, 64], strides = [1, 1]} : vector<4x96xf32> to vector<4x64xf32>
    %109 = vector.extract_strided_slice %107 {offsets = [0, 0], sizes = [4, 64], strides = [1, 1]} : vector<4x96xf32> to vector<4x64xf32>
    %110 = arith.addf %108, %109 : vector<4x64xf32>
    %111 = vector.extract_strided_slice %5 {offsets = [0, 0], sizes = [1, 64], strides = [1, 1]} : vector<1x128xf32> to vector<1x64xf32>
    %112 = vector.broadcast %111 : vector<1x64xf32> to vector<4x64xf32>
    %113 = arith.addf %110, %112 : vector<4x64xf32>
    %114 = arith.negf %113 : vector<4x64xf32>
    %115 = math.exp %114 : vector<4x64xf32>
    %cst_31 = arith.constant 1.000000e+00 : f32
    %116 = vector.broadcast %cst_31 : f32 to vector<4x64xf32>
    %117 = arith.addf %116, %115 : vector<4x64xf32>
    %118 = arith.divf %116, %117 : vector<4x64xf32>
    %119 = vector.extract_strided_slice %118 {offsets = [0, 0], sizes = [4, 32], strides = [1, 1]} : vector<4x64xf32> to vector<4x32xf32>
    %120 = vector.extract_strided_slice %118 {offsets = [0, 32], sizes = [4, 32], strides = [1, 1]} : vector<4x64xf32> to vector<4x32xf32>
    %121 = vector.extract_strided_slice %106 {offsets = [0, 64], sizes = [4, 32], strides = [1, 1]} : vector<4x96xf32> to vector<4x32xf32>
    %122 = vector.extract_strided_slice %5 {offsets = [0, 64], sizes = [1, 32], strides = [1, 1]} : vector<1x128xf32> to vector<1x32xf32>
    %123 = vector.broadcast %122 : vector<1x32xf32> to vector<4x32xf32>
    %124 = arith.addf %121, %123 : vector<4x32xf32>
    %125 = vector.extract_strided_slice %107 {offsets = [0, 64], sizes = [4, 32], strides = [1, 1]} : vector<4x96xf32> to vector<4x32xf32>
    %126 = vector.extract_strided_slice %5 {offsets = [0, 96], sizes = [1, 32], strides = [1, 1]} : vector<1x128xf32> to vector<1x32xf32>
    %127 = vector.broadcast %126 : vector<1x32xf32> to vector<4x32xf32>
    %128 = arith.addf %125, %127 : vector<4x32xf32>
    %129 = arith.mulf %119, %128 : vector<4x32xf32>
    %130 = arith.addf %124, %129 : vector<4x32xf32>
    %131 = math.tanh %130 : vector<4x32xf32>
    %cst_32 = arith.constant 1.000000e+00 : f32
    %132 = vector.broadcast %cst_32 : f32 to vector<4x32xf32>
    %133 = arith.subf %132, %120 : vector<4x32xf32>
    %134 = arith.mulf %133, %131 : vector<4x32xf32>
    %135 = arith.mulf %120, %71 : vector<4x32xf32>
    %136 = arith.addf %134, %135 : vector<4x32xf32>
    %c4 = arith.constant 4 : index
    %c0_33 = arith.constant 0 : index
    %137 = vector.load %arg10[%c4, %c0_33] : memref<32x32xf32, #tpu.memory_space<vmem>>, vector<4x32xf32>
    tpu.vector_store %arg10[%c4, %c0_33], %136 {strides = array<i32>} : memref<32x32xf32, #tpu.memory_space<vmem>>, vector<4x32xf32>,
    %c2 = arith.constant 2 : index
    %c0_34 = arith.constant 0 : index
    %c0_35 = arith.constant 0 : index
    %138 = vector.load %arg0[%c2, %c0_34, %c0_35] : memref<8x4x16xf32, #tpu.memory_space<vmem>>, vector<1x4x16xf32>
    %139 = vector.shape_cast %138 : vector<1x4x16xf32> to vector<4x16xf32>
    %cst_36 = arith.constant dense<0.000000e+00> : vector<4x96xf32>
    %140 = tpu.matmul %139, %0, %cst_36 {dimension_numbers = #tpu.dot_dimension_numbers<[1], [0], [0], [1], [0, 0, 1, 1], [], []>} : vector<4x16xf32>, vector<16x96xf32>, vector<4x96xf32> -> vector<4x96xf32>
    %cst_37 = arith.constant dense<0.000000e+00> : vector<4x96xf32>
    %141 = tpu.matmul %105, %2, %cst_37 {dimension_numbers = #tpu.dot_dimension_numbers<[1], [0], [0], [1], [0, 0, 1, 1], [], []>} : vector<4x32xf32>, vector<32x96xf32>, vector<4x96xf32> -> vector<4x96xf32>
    %142 = vector.extract_strided_slice %140 {offsets = [0, 0], sizes = [4, 64], strides = [1, 1]} : vector<4x96xf32> to vector<4x64xf32>
    %143 = vector.extract_strided_slice %141 {offsets = [0, 0], sizes = [4, 64], strides = [1, 1]} : vector<4x96xf32> to vector<4x64xf32>
    %144 = arith.addf %142, %143 : vector<4x64xf32>
    %145 = vector.extract_strided_slice %4 {offsets = [0, 0], sizes = [1, 64], strides = [1, 1]} : vector<1x128xf32> to vector<1x64xf32>
    %146 = vector.broadcast %145 : vector<1x64xf32> to vector<4x64xf32>
    %147 = arith.addf %144, %146 : vector<4x64xf32>
    %148 = arith.negf %147 : vector<4x64xf32>
    %149 = math.exp %148 : vector<4x64xf32>
    %cst_38 = arith.constant 1.000000e+00 : f32
    %150 = vector.broadcast %cst_38 : f32 to vector<4x64xf32>
    %151 = arith.addf %150, %149 : vector<4x64xf32>
    %152 = arith.divf %150, %151 : vector<4x64xf32>
    %153 = vector.extract_strided_slice %152 {offsets = [0, 0], sizes = [4, 32], strides = [1, 1]} : vector<4x64xf32> to vector<4x32xf32>
    %154 = vector.extract_strided_slice %152 {offsets = [0, 32], sizes = [4, 32], strides = [1, 1]} : vector<4x64xf32> to vector<4x32xf32>
    %155 = vector.extract_strided_slice %140 {offsets = [0, 64], sizes = [4, 32], strides = [1, 1]} : vector<4x96xf32> to vector<4x32xf32>
    %156 = vector.extract_strided_slice %4 {offsets = [0, 64], sizes = [1, 32], strides = [1, 1]} : vector<1x128xf32> to vector<1x32xf32>
    %157 = vector.broadcast %156 : vector<1x32xf32> to vector<4x32xf32>
    %158 = arith.addf %155, %157 : vector<4x32xf32>
    %159 = vector.extract_strided_slice %141 {offsets = [0, 64], sizes = [4, 32], strides = [1, 1]} : vector<4x96xf32> to vector<4x32xf32>
    %160 = vector.extract_strided_slice %4 {offsets = [0, 96], sizes = [1, 32], strides = [1, 1]} : vector<1x128xf32> to vector<1x32xf32>
    %161 = vector.broadcast %160 : vector<1x32xf32> to vector<4x32xf32>
    %162 = arith.addf %159, %161 : vector<4x32xf32>
    %163 = arith.mulf %153, %162 : vector<4x32xf32>
    %164 = arith.addf %158, %163 : vector<4x32xf32>
    %165 = math.tanh %164 : vector<4x32xf32>
    %cst_39 = arith.constant 1.000000e+00 : f32
    %166 = vector.broadcast %cst_39 : f32 to vector<4x32xf32>
    %167 = arith.subf %166, %154 : vector<4x32xf32>
    %168 = arith.mulf %167, %165 : vector<4x32xf32>
    %169 = arith.mulf %154, %105 : vector<4x32xf32>
    %170 = arith.addf %168, %169 : vector<4x32xf32>
    %cst_40 = arith.constant dense<0.000000e+00> : vector<4x96xf32>
    %171 = tpu.matmul %170, %1, %cst_40 {dimension_numbers = #tpu.dot_dimension_numbers<[1], [0], [0], [1], [0, 0, 1, 1], [], []>} : vector<4x32xf32>, vector<32x96xf32>, vector<4x96xf32> -> vector<4x96xf32>
    %cst_41 = arith.constant dense<0.000000e+00> : vector<4x96xf32>
    %172 = tpu.matmul %136, %3, %cst_41 {dimension_numbers = #tpu.dot_dimension_numbers<[1], [0], [0], [1], [0, 0, 1, 1], [], []>} : vector<4x32xf32>, vector<32x96xf32>, vector<4x96xf32> -> vector<4x96xf32>
    %173 = vector.extract_strided_slice %171 {offsets = [0, 0], sizes = [4, 64], strides = [1, 1]} : vector<4x96xf32> to vector<4x64xf32>
    %174 = vector.extract_strided_slice %172 {offsets = [0, 0], sizes = [4, 64], strides = [1, 1]} : vector<4x96xf32> to vector<4x64xf32>
    %175 = arith.addf %173, %174 : vector<4x64xf32>
    %176 = vector.extract_strided_slice %5 {offsets = [0, 0], sizes = [1, 64], strides = [1, 1]} : vector<1x128xf32> to vector<1x64xf32>
    %177 = vector.broadcast %176 : vector<1x64xf32> to vector<4x64xf32>
    %178 = arith.addf %175, %177 : vector<4x64xf32>
    %179 = arith.negf %178 : vector<4x64xf32>
    %180 = math.exp %179 : vector<4x64xf32>
    %cst_42 = arith.constant 1.000000e+00 : f32
    %181 = vector.broadcast %cst_42 : f32 to vector<4x64xf32>
    %182 = arith.addf %181, %180 : vector<4x64xf32>
    %183 = arith.divf %181, %182 : vector<4x64xf32>
    %184 = vector.extract_strided_slice %183 {offsets = [0, 0], sizes = [4, 32], strides = [1, 1]} : vector<4x64xf32> to vector<4x32xf32>
    %185 = vector.extract_strided_slice %183 {offsets = [0, 32], sizes = [4, 32], strides = [1, 1]} : vector<4x64xf32> to vector<4x32xf32>
    %186 = vector.extract_strided_slice %171 {offsets = [0, 64], sizes = [4, 32], strides = [1, 1]} : vector<4x96xf32> to vector<4x32xf32>
    %187 = vector.extract_strided_slice %5 {offsets = [0, 64], sizes = [1, 32], strides = [1, 1]} : vector<1x128xf32> to vector<1x32xf32>
    %188 = vector.broadcast %187 : vector<1x32xf32> to vector<4x32xf32>
    %189 = arith.addf %186, %188 : vector<4x32xf32>
    %190 = vector.extract_strided_slice %172 {offsets = [0, 64], sizes = [4, 32], strides = [1, 1]} : vector<4x96xf32> to vector<4x32xf32>
    %191 = vector.extract_strided_slice %5 {offsets = [0, 96], sizes = [1, 32], strides = [1, 1]} : vector<1x128xf32> to vector<1x32xf32>
    %192 = vector.broadcast %191 : vector<1x32xf32> to vector<4x32xf32>
    %193 = arith.addf %190, %192 : vector<4x32xf32>
    %194 = arith.mulf %184, %193 : vector<4x32xf32>
    %195 = arith.addf %189, %194 : vector<4x32xf32>
    %196 = math.tanh %195 : vector<4x32xf32>
    %cst_43 = arith.constant 1.000000e+00 : f32
    %197 = vector.broadcast %cst_43 : f32 to vector<4x32xf32>
    %198 = arith.subf %197, %185 : vector<4x32xf32>
    %199 = arith.mulf %198, %196 : vector<4x32xf32>
    %200 = arith.mulf %185, %136 : vector<4x32xf32>
    %201 = arith.addf %199, %200 : vector<4x32xf32>
    %c8 = arith.constant 8 : index
    %c0_44 = arith.constant 0 : index
    %202 = vector.load %arg10[%c8, %c0_44] : memref<32x32xf32, #tpu.memory_space<vmem>>, vector<4x32xf32>
    tpu.vector_store %arg10[%c8, %c0_44], %201 {strides = array<i32>} : memref<32x32xf32, #tpu.memory_space<vmem>>, vector<4x32xf32>,
    %c3 = arith.constant 3 : index
    %c0_45 = arith.constant 0 : index
    %c0_46 = arith.constant 0 : index
    %203 = vector.load %arg0[%c3, %c0_45, %c0_46] : memref<8x4x16xf32, #tpu.memory_space<vmem>>, vector<1x4x16xf32>
    %204 = vector.shape_cast %203 : vector<1x4x16xf32> to vector<4x16xf32>
    %cst_47 = arith.constant dense<0.000000e+00> : vector<4x96xf32>
    %205 = tpu.matmul %204, %0, %cst_47 {dimension_numbers = #tpu.dot_dimension_numbers<[1], [0], [0], [1], [0, 0, 1, 1], [], []>} : vector<4x16xf32>, vector<16x96xf32>, vector<4x96xf32> -> vector<4x96xf32>
    %cst_48 = arith.constant dense<0.000000e+00> : vector<4x96xf32>
    %206 = tpu.matmul %170, %2, %cst_48 {dimension_numbers = #tpu.dot_dimension_numbers<[1], [0], [0], [1], [0, 0, 1, 1], [], []>} : vector<4x32xf32>, vector<32x96xf32>, vector<4x96xf32> -> vector<4x96xf32>
    %207 = vector.extract_strided_slice %205 {offsets = [0, 0], sizes = [4, 64], strides = [1, 1]} : vector<4x96xf32> to vector<4x64xf32>
    %208 = vector.extract_strided_slice %206 {offsets = [0, 0], sizes = [4, 64], strides = [1, 1]} : vector<4x96xf32> to vector<4x64xf32>
    %209 = arith.addf %207, %208 : vector<4x64xf32>
    %210 = vector.extract_strided_slice %4 {offsets = [0, 0], sizes = [1, 64], strides = [1, 1]} : vector<1x128xf32> to vector<1x64xf32>
    %211 = vector.broadcast %210 : vector<1x64xf32> to vector<4x64xf32>
    %212 = arith.addf %209, %211 : vector<4x64xf32>
    %213 = arith.negf %212 : vector<4x64xf32>
    %214 = math.exp %213 : vector<4x64xf32>
    %cst_49 = arith.constant 1.000000e+00 : f32
    %215 = vector.broadcast %cst_49 : f32 to vector<4x64xf32>
    %216 = arith.addf %215, %214 : vector<4x64xf32>
    %217 = arith.divf %215, %216 : vector<4x64xf32>
    %218 = vector.extract_strided_slice %217 {offsets = [0, 0], sizes = [4, 32], strides = [1, 1]} : vector<4x64xf32> to vector<4x32xf32>
    %219 = vector.extract_strided_slice %217 {offsets = [0, 32], sizes = [4, 32], strides = [1, 1]} : vector<4x64xf32> to vector<4x32xf32>
    %220 = vector.extract_strided_slice %205 {offsets = [0, 64], sizes = [4, 32], strides = [1, 1]} : vector<4x96xf32> to vector<4x32xf32>
    %221 = vector.extract_strided_slice %4 {offsets = [0, 64], sizes = [1, 32], strides = [1, 1]} : vector<1x128xf32> to vector<1x32xf32>
    %222 = vector.broadcast %221 : vector<1x32xf32> to vector<4x32xf32>
    %223 = arith.addf %220, %222 : vector<4x32xf32>
    %224 = vector.extract_strided_slice %206 {offsets = [0, 64], sizes = [4, 32], strides = [1, 1]} : vector<4x96xf32> to vector<4x32xf32>
    %225 = vector.extract_strided_slice %4 {offsets = [0, 96], sizes = [1, 32], strides = [1, 1]} : vector<1x128xf32> to vector<1x32xf32>
    %226 = vector.broadcast %225 : vector<1x32xf32> to vector<4x32xf32>
    %227 = arith.addf %224, %226 : vector<4x32xf32>
    %228 = arith.mulf %218, %227 : vector<4x32xf32>
    %229 = arith.addf %223, %228 : vector<4x32xf32>
    %230 = math.tanh %229 : vector<4x32xf32>
    %cst_50 = arith.constant 1.000000e+00 : f32
    %231 = vector.broadcast %cst_50 : f32 to vector<4x32xf32>
    %232 = arith.subf %231, %219 : vector<4x32xf32>
    %233 = arith.mulf %232, %230 : vector<4x32xf32>
    %234 = arith.mulf %219, %170 : vector<4x32xf32>
    %235 = arith.addf %233, %234 : vector<4x32xf32>
    %cst_51 = arith.constant dense<0.000000e+00> : vector<4x96xf32>
    %236 = tpu.matmul %235, %1, %cst_51 {dimension_numbers = #tpu.dot_dimension_numbers<[1], [0], [0], [1], [0, 0, 1, 1], [], []>} : vector<4x32xf32>, vector<32x96xf32>, vector<4x96xf32> -> vector<4x96xf32>
    %cst_52 = arith.constant dense<0.000000e+00> : vector<4x96xf32>
    %237 = tpu.matmul %201, %3, %cst_52 {dimension_numbers = #tpu.dot_dimension_numbers<[1], [0], [0], [1], [0, 0, 1, 1], [], []>} : vector<4x32xf32>, vector<32x96xf32>, vector<4x96xf32> -> vector<4x96xf32>
    %238 = vector.extract_strided_slice %236 {offsets = [0, 0], sizes = [4, 64], strides = [1, 1]} : vector<4x96xf32> to vector<4x64xf32>
    %239 = vector.extract_strided_slice %237 {offsets = [0, 0], sizes = [4, 64], strides = [1, 1]} : vector<4x96xf32> to vector<4x64xf32>
    %240 = arith.addf %238, %239 : vector<4x64xf32>
    %241 = vector.extract_strided_slice %5 {offsets = [0, 0], sizes = [1, 64], strides = [1, 1]} : vector<1x128xf32> to vector<1x64xf32>
    %242 = vector.broadcast %241 : vector<1x64xf32> to vector<4x64xf32>
    %243 = arith.addf %240, %242 : vector<4x64xf32>
    %244 = arith.negf %243 : vector<4x64xf32>
    %245 = math.exp %244 : vector<4x64xf32>
    %cst_53 = arith.constant 1.000000e+00 : f32
    %246 = vector.broadcast %cst_53 : f32 to vector<4x64xf32>
    %247 = arith.addf %246, %245 : vector<4x64xf32>
    %248 = arith.divf %246, %247 : vector<4x64xf32>
    %249 = vector.extract_strided_slice %248 {offsets = [0, 0], sizes = [4, 32], strides = [1, 1]} : vector<4x64xf32> to vector<4x32xf32>
    %250 = vector.extract_strided_slice %248 {offsets = [0, 32], sizes = [4, 32], strides = [1, 1]} : vector<4x64xf32> to vector<4x32xf32>
    %251 = vector.extract_strided_slice %236 {offsets = [0, 64], sizes = [4, 32], strides = [1, 1]} : vector<4x96xf32> to vector<4x32xf32>
    %252 = vector.extract_strided_slice %5 {offsets = [0, 64], sizes = [1, 32], strides = [1, 1]} : vector<1x128xf32> to vector<1x32xf32>
    %253 = vector.broadcast %252 : vector<1x32xf32> to vector<4x32xf32>
    %254 = arith.addf %251, %253 : vector<4x32xf32>
    %255 = vector.extract_strided_slice %237 {offsets = [0, 64], sizes = [4, 32], strides = [1, 1]} : vector<4x96xf32> to vector<4x32xf32>
    %256 = vector.extract_strided_slice %5 {offsets = [0, 96], sizes = [1, 32], strides = [1, 1]} : vector<1x128xf32> to vector<1x32xf32>
    %257 = vector.broadcast %256 : vector<1x32xf32> to vector<4x32xf32>
    %258 = arith.addf %255, %257 : vector<4x32xf32>
    %259 = arith.mulf %249, %258 : vector<4x32xf32>
    %260 = arith.addf %254, %259 : vector<4x32xf32>
    %261 = math.tanh %260 : vector<4x32xf32>
    %cst_54 = arith.constant 1.000000e+00 : f32
    %262 = vector.broadcast %cst_54 : f32 to vector<4x32xf32>
    %263 = arith.subf %262, %250 : vector<4x32xf32>
    %264 = arith.mulf %263, %261 : vector<4x32xf32>
    %265 = arith.mulf %250, %201 : vector<4x32xf32>
    %266 = arith.addf %264, %265 : vector<4x32xf32>
    %c12 = arith.constant 12 : index
    %c0_55 = arith.constant 0 : index
    %267 = vector.load %arg10[%c12, %c0_55] : memref<32x32xf32, #tpu.memory_space<vmem>>, vector<4x32xf32>
    tpu.vector_store %arg10[%c12, %c0_55], %266 {strides = array<i32>} : memref<32x32xf32, #tpu.memory_space<vmem>>, vector<4x32xf32>,
    %c4_56 = arith.constant 4 : index
    %c0_57 = arith.constant 0 : index
    %c0_58 = arith.constant 0 : index
    %268 = vector.load %arg0[%c4_56, %c0_57, %c0_58] : memref<8x4x16xf32, #tpu.memory_space<vmem>>, vector<1x4x16xf32>
    %269 = vector.shape_cast %268 : vector<1x4x16xf32> to vector<4x16xf32>
    %cst_59 = arith.constant dense<0.000000e+00> : vector<4x96xf32>
    %270 = tpu.matmul %269, %0, %cst_59 {dimension_numbers = #tpu.dot_dimension_numbers<[1], [0], [0], [1], [0, 0, 1, 1], [], []>} : vector<4x16xf32>, vector<16x96xf32>, vector<4x96xf32> -> vector<4x96xf32>
    %cst_60 = arith.constant dense<0.000000e+00> : vector<4x96xf32>
    %271 = tpu.matmul %235, %2, %cst_60 {dimension_numbers = #tpu.dot_dimension_numbers<[1], [0], [0], [1], [0, 0, 1, 1], [], []>} : vector<4x32xf32>, vector<32x96xf32>, vector<4x96xf32> -> vector<4x96xf32>
    %272 = vector.extract_strided_slice %270 {offsets = [0, 0], sizes = [4, 64], strides = [1, 1]} : vector<4x96xf32> to vector<4x64xf32>
    %273 = vector.extract_strided_slice %271 {offsets = [0, 0], sizes = [4, 64], strides = [1, 1]} : vector<4x96xf32> to vector<4x64xf32>
    %274 = arith.addf %272, %273 : vector<4x64xf32>
    %275 = vector.extract_strided_slice %4 {offsets = [0, 0], sizes = [1, 64], strides = [1, 1]} : vector<1x128xf32> to vector<1x64xf32>
    %276 = vector.broadcast %275 : vector<1x64xf32> to vector<4x64xf32>
    %277 = arith.addf %274, %276 : vector<4x64xf32>
    %278 = arith.negf %277 : vector<4x64xf32>
    %279 = math.exp %278 : vector<4x64xf32>
    %cst_61 = arith.constant 1.000000e+00 : f32
    %280 = vector.broadcast %cst_61 : f32 to vector<4x64xf32>
    %281 = arith.addf %280, %279 : vector<4x64xf32>
    %282 = arith.divf %280, %281 : vector<4x64xf32>
    %283 = vector.extract_strided_slice %282 {offsets = [0, 0], sizes = [4, 32], strides = [1, 1]} : vector<4x64xf32> to vector<4x32xf32>
    %284 = vector.extract_strided_slice %282 {offsets = [0, 32], sizes = [4, 32], strides = [1, 1]} : vector<4x64xf32> to vector<4x32xf32>
    %285 = vector.extract_strided_slice %270 {offsets = [0, 64], sizes = [4, 32], strides = [1, 1]} : vector<4x96xf32> to vector<4x32xf32>
    %286 = vector.extract_strided_slice %4 {offsets = [0, 64], sizes = [1, 32], strides = [1, 1]} : vector<1x128xf32> to vector<1x32xf32>
    %287 = vector.broadcast %286 : vector<1x32xf32> to vector<4x32xf32>
    %288 = arith.addf %285, %287 : vector<4x32xf32>
    %289 = vector.extract_strided_slice %271 {offsets = [0, 64], sizes = [4, 32], strides = [1, 1]} : vector<4x96xf32> to vector<4x32xf32>
    %290 = vector.extract_strided_slice %4 {offsets = [0, 96], sizes = [1, 32], strides = [1, 1]} : vector<1x128xf32> to vector<1x32xf32>
    %291 = vector.broadcast %290 : vector<1x32xf32> to vector<4x32xf32>
    %292 = arith.addf %289, %291 : vector<4x32xf32>
    %293 = arith.mulf %283, %292 : vector<4x32xf32>
    %294 = arith.addf %288, %293 : vector<4x32xf32>
    %295 = math.tanh %294 : vector<4x32xf32>
    %cst_62 = arith.constant 1.000000e+00 : f32
    %296 = vector.broadcast %cst_62 : f32 to vector<4x32xf32>
    %297 = arith.subf %296, %284 : vector<4x32xf32>
    %298 = arith.mulf %297, %295 : vector<4x32xf32>
    %299 = arith.mulf %284, %235 : vector<4x32xf32>
    %300 = arith.addf %298, %299 : vector<4x32xf32>
    %cst_63 = arith.constant dense<0.000000e+00> : vector<4x96xf32>
    %301 = tpu.matmul %300, %1, %cst_63 {dimension_numbers = #tpu.dot_dimension_numbers<[1], [0], [0], [1], [0, 0, 1, 1], [], []>} : vector<4x32xf32>, vector<32x96xf32>, vector<4x96xf32> -> vector<4x96xf32>
    %cst_64 = arith.constant dense<0.000000e+00> : vector<4x96xf32>
    %302 = tpu.matmul %266, %3, %cst_64 {dimension_numbers = #tpu.dot_dimension_numbers<[1], [0], [0], [1], [0, 0, 1, 1], [], []>} : vector<4x32xf32>, vector<32x96xf32>, vector<4x96xf32> -> vector<4x96xf32>
    %303 = vector.extract_strided_slice %301 {offsets = [0, 0], sizes = [4, 64], strides = [1, 1]} : vector<4x96xf32> to vector<4x64xf32>
    %304 = vector.extract_strided_slice %302 {offsets = [0, 0], sizes = [4, 64], strides = [1, 1]} : vector<4x96xf32> to vector<4x64xf32>
    %305 = arith.addf %303, %304 : vector<4x64xf32>
    %306 = vector.extract_strided_slice %5 {offsets = [0, 0], sizes = [1, 64], strides = [1, 1]} : vector<1x128xf32> to vector<1x64xf32>
    %307 = vector.broadcast %306 : vector<1x64xf32> to vector<4x64xf32>
    %308 = arith.addf %305, %307 : vector<4x64xf32>
    %309 = arith.negf %308 : vector<4x64xf32>
    %310 = math.exp %309 : vector<4x64xf32>
    %cst_65 = arith.constant 1.000000e+00 : f32
    %311 = vector.broadcast %cst_65 : f32 to vector<4x64xf32>
    %312 = arith.addf %311, %310 : vector<4x64xf32>
    %313 = arith.divf %311, %312 : vector<4x64xf32>
    %314 = vector.extract_strided_slice %313 {offsets = [0, 0], sizes = [4, 32], strides = [1, 1]} : vector<4x64xf32> to vector<4x32xf32>
    %315 = vector.extract_strided_slice %313 {offsets = [0, 32], sizes = [4, 32], strides = [1, 1]} : vector<4x64xf32> to vector<4x32xf32>
    %316 = vector.extract_strided_slice %301 {offsets = [0, 64], sizes = [4, 32], strides = [1, 1]} : vector<4x96xf32> to vector<4x32xf32>
    %317 = vector.extract_strided_slice %5 {offsets = [0, 64], sizes = [1, 32], strides = [1, 1]} : vector<1x128xf32> to vector<1x32xf32>
    %318 = vector.broadcast %317 : vector<1x32xf32> to vector<4x32xf32>
    %319 = arith.addf %316, %318 : vector<4x32xf32>
    %320 = vector.extract_strided_slice %302 {offsets = [0, 64], sizes = [4, 32], strides = [1, 1]} : vector<4x96xf32> to vector<4x32xf32>
    %321 = vector.extract_strided_slice %5 {offsets = [0, 96], sizes = [1, 32], strides = [1, 1]} : vector<1x128xf32> to vector<1x32xf32>
    %322 = vector.broadcast %321 : vector<1x32xf32> to vector<4x32xf32>
    %323 = arith.addf %320, %322 : vector<4x32xf32>
    %324 = arith.mulf %314, %323 : vector<4x32xf32>
    %325 = arith.addf %319, %324 : vector<4x32xf32>
    %326 = math.tanh %325 : vector<4x32xf32>
    %cst_66 = arith.constant 1.000000e+00 : f32
    %327 = vector.broadcast %cst_66 : f32 to vector<4x32xf32>
    %328 = arith.subf %327, %315 : vector<4x32xf32>
    %329 = arith.mulf %328, %326 : vector<4x32xf32>
    %330 = arith.mulf %315, %266 : vector<4x32xf32>
    %331 = arith.addf %329, %330 : vector<4x32xf32>
    %c16_67 = arith.constant 16 : index
    %c0_68 = arith.constant 0 : index
    %332 = vector.load %arg10[%c16_67, %c0_68] : memref<32x32xf32, #tpu.memory_space<vmem>>, vector<4x32xf32>
    tpu.vector_store %arg10[%c16_67, %c0_68], %331 {strides = array<i32>} : memref<32x32xf32, #tpu.memory_space<vmem>>, vector<4x32xf32>,
    %c5 = arith.constant 5 : index
    %c0_69 = arith.constant 0 : index
    %c0_70 = arith.constant 0 : index
    %333 = vector.load %arg0[%c5, %c0_69, %c0_70] : memref<8x4x16xf32, #tpu.memory_space<vmem>>, vector<1x4x16xf32>
    %334 = vector.shape_cast %333 : vector<1x4x16xf32> to vector<4x16xf32>
    %cst_71 = arith.constant dense<0.000000e+00> : vector<4x96xf32>
    %335 = tpu.matmul %334, %0, %cst_71 {dimension_numbers = #tpu.dot_dimension_numbers<[1], [0], [0], [1], [0, 0, 1, 1], [], []>} : vector<4x16xf32>, vector<16x96xf32>, vector<4x96xf32> -> vector<4x96xf32>
    %cst_72 = arith.constant dense<0.000000e+00> : vector<4x96xf32>
    %336 = tpu.matmul %300, %2, %cst_72 {dimension_numbers = #tpu.dot_dimension_numbers<[1], [0], [0], [1], [0, 0, 1, 1], [], []>} : vector<4x32xf32>, vector<32x96xf32>, vector<4x96xf32> -> vector<4x96xf32>
    %337 = vector.extract_strided_slice %335 {offsets = [0, 0], sizes = [4, 64], strides = [1, 1]} : vector<4x96xf32> to vector<4x64xf32>
    %338 = vector.extract_strided_slice %336 {offsets = [0, 0], sizes = [4, 64], strides = [1, 1]} : vector<4x96xf32> to vector<4x64xf32>
    %339 = arith.addf %337, %338 : vector<4x64xf32>
    %340 = vector.extract_strided_slice %4 {offsets = [0, 0], sizes = [1, 64], strides = [1, 1]} : vector<1x128xf32> to vector<1x64xf32>
    %341 = vector.broadcast %340 : vector<1x64xf32> to vector<4x64xf32>
    %342 = arith.addf %339, %341 : vector<4x64xf32>
    %343 = arith.negf %342 : vector<4x64xf32>
    %344 = math.exp %343 : vector<4x64xf32>
    %cst_73 = arith.constant 1.000000e+00 : f32
    %345 = vector.broadcast %cst_73 : f32 to vector<4x64xf32>
    %346 = arith.addf %345, %344 : vector<4x64xf32>
    %347 = arith.divf %345, %346 : vector<4x64xf32>
    %348 = vector.extract_strided_slice %347 {offsets = [0, 0], sizes = [4, 32], strides = [1, 1]} : vector<4x64xf32> to vector<4x32xf32>
    %349 = vector.extract_strided_slice %347 {offsets = [0, 32], sizes = [4, 32], strides = [1, 1]} : vector<4x64xf32> to vector<4x32xf32>
    %350 = vector.extract_strided_slice %335 {offsets = [0, 64], sizes = [4, 32], strides = [1, 1]} : vector<4x96xf32> to vector<4x32xf32>
    %351 = vector.extract_strided_slice %4 {offsets = [0, 64], sizes = [1, 32], strides = [1, 1]} : vector<1x128xf32> to vector<1x32xf32>
    %352 = vector.broadcast %351 : vector<1x32xf32> to vector<4x32xf32>
    %353 = arith.addf %350, %352 : vector<4x32xf32>
    %354 = vector.extract_strided_slice %336 {offsets = [0, 64], sizes = [4, 32], strides = [1, 1]} : vector<4x96xf32> to vector<4x32xf32>
    %355 = vector.extract_strided_slice %4 {offsets = [0, 96], sizes = [1, 32], strides = [1, 1]} : vector<1x128xf32> to vector<1x32xf32>
    %356 = vector.broadcast %355 : vector<1x32xf32> to vector<4x32xf32>
    %357 = arith.addf %354, %356 : vector<4x32xf32>
    %358 = arith.mulf %348, %357 : vector<4x32xf32>
    %359 = arith.addf %353, %358 : vector<4x32xf32>
    %360 = math.tanh %359 : vector<4x32xf32>
    %cst_74 = arith.constant 1.000000e+00 : f32
    %361 = vector.broadcast %cst_74 : f32 to vector<4x32xf32>
    %362 = arith.subf %361, %349 : vector<4x32xf32>
    %363 = arith.mulf %362, %360 : vector<4x32xf32>
    %364 = arith.mulf %349, %300 : vector<4x32xf32>
    %365 = arith.addf %363, %364 : vector<4x32xf32>
    %cst_75 = arith.constant dense<0.000000e+00> : vector<4x96xf32>
    %366 = tpu.matmul %365, %1, %cst_75 {dimension_numbers = #tpu.dot_dimension_numbers<[1], [0], [0], [1], [0, 0, 1, 1], [], []>} : vector<4x32xf32>, vector<32x96xf32>, vector<4x96xf32> -> vector<4x96xf32>
    %cst_76 = arith.constant dense<0.000000e+00> : vector<4x96xf32>
    %367 = tpu.matmul %331, %3, %cst_76 {dimension_numbers = #tpu.dot_dimension_numbers<[1], [0], [0], [1], [0, 0, 1, 1], [], []>} : vector<4x32xf32>, vector<32x96xf32>, vector<4x96xf32> -> vector<4x96xf32>
    %368 = vector.extract_strided_slice %366 {offsets = [0, 0], sizes = [4, 64], strides = [1, 1]} : vector<4x96xf32> to vector<4x64xf32>
    %369 = vector.extract_strided_slice %367 {offsets = [0, 0], sizes = [4, 64], strides = [1, 1]} : vector<4x96xf32> to vector<4x64xf32>
    %370 = arith.addf %368, %369 : vector<4x64xf32>
    %371 = vector.extract_strided_slice %5 {offsets = [0, 0], sizes = [1, 64], strides = [1, 1]} : vector<1x128xf32> to vector<1x64xf32>
    %372 = vector.broadcast %371 : vector<1x64xf32> to vector<4x64xf32>
    %373 = arith.addf %370, %372 : vector<4x64xf32>
    %374 = arith.negf %373 : vector<4x64xf32>
    %375 = math.exp %374 : vector<4x64xf32>
    %cst_77 = arith.constant 1.000000e+00 : f32
    %376 = vector.broadcast %cst_77 : f32 to vector<4x64xf32>
    %377 = arith.addf %376, %375 : vector<4x64xf32>
    %378 = arith.divf %376, %377 : vector<4x64xf32>
    %379 = vector.extract_strided_slice %378 {offsets = [0, 0], sizes = [4, 32], strides = [1, 1]} : vector<4x64xf32> to vector<4x32xf32>
    %380 = vector.extract_strided_slice %378 {offsets = [0, 32], sizes = [4, 32], strides = [1, 1]} : vector<4x64xf32> to vector<4x32xf32>
    %381 = vector.extract_strided_slice %366 {offsets = [0, 64], sizes = [4, 32], strides = [1, 1]} : vector<4x96xf32> to vector<4x32xf32>
    %382 = vector.extract_strided_slice %5 {offsets = [0, 64], sizes = [1, 32], strides = [1, 1]} : vector<1x128xf32> to vector<1x32xf32>
    %383 = vector.broadcast %382 : vector<1x32xf32> to vector<4x32xf32>
    %384 = arith.addf %381, %383 : vector<4x32xf32>
    %385 = vector.extract_strided_slice %367 {offsets = [0, 64], sizes = [4, 32], strides = [1, 1]} : vector<4x96xf32> to vector<4x32xf32>
    %386 = vector.extract_strided_slice %5 {offsets = [0, 96], sizes = [1, 32], strides = [1, 1]} : vector<1x128xf32> to vector<1x32xf32>
    %387 = vector.broadcast %386 : vector<1x32xf32> to vector<4x32xf32>
    %388 = arith.addf %385, %387 : vector<4x32xf32>
    %389 = arith.mulf %379, %388 : vector<4x32xf32>
    %390 = arith.addf %384, %389 : vector<4x32xf32>
    %391 = math.tanh %390 : vector<4x32xf32>
    %cst_78 = arith.constant 1.000000e+00 : f32
    %392 = vector.broadcast %cst_78 : f32 to vector<4x32xf32>
    %393 = arith.subf %392, %380 : vector<4x32xf32>
    %394 = arith.mulf %393, %391 : vector<4x32xf32>
    %395 = arith.mulf %380, %331 : vector<4x32xf32>
    %396 = arith.addf %394, %395 : vector<4x32xf32>
    %c20 = arith.constant 20 : index
    %c0_79 = arith.constant 0 : index
    %397 = vector.load %arg10[%c20, %c0_79] : memref<32x32xf32, #tpu.memory_space<vmem>>, vector<4x32xf32>
    tpu.vector_store %arg10[%c20, %c0_79], %396 {strides = array<i32>} : memref<32x32xf32, #tpu.memory_space<vmem>>, vector<4x32xf32>,
    %c6 = arith.constant 6 : index
    %c0_80 = arith.constant 0 : index
    %c0_81 = arith.constant 0 : index
    %398 = vector.load %arg0[%c6, %c0_80, %c0_81] : memref<8x4x16xf32, #tpu.memory_space<vmem>>, vector<1x4x16xf32>
    %399 = vector.shape_cast %398 : vector<1x4x16xf32> to vector<4x16xf32>
    %cst_82 = arith.constant dense<0.000000e+00> : vector<4x96xf32>
    %400 = tpu.matmul %399, %0, %cst_82 {dimension_numbers = #tpu.dot_dimension_numbers<[1], [0], [0], [1], [0, 0, 1, 1], [], []>} : vector<4x16xf32>, vector<16x96xf32>, vector<4x96xf32> -> vector<4x96xf32>
    %cst_83 = arith.constant dense<0.000000e+00> : vector<4x96xf32>
    %401 = tpu.matmul %365, %2, %cst_83 {dimension_numbers = #tpu.dot_dimension_numbers<[1], [0], [0], [1], [0, 0, 1, 1], [], []>} : vector<4x32xf32>, vector<32x96xf32>, vector<4x96xf32> -> vector<4x96xf32>
    %402 = vector.extract_strided_slice %400 {offsets = [0, 0], sizes = [4, 64], strides = [1, 1]} : vector<4x96xf32> to vector<4x64xf32>
    %403 = vector.extract_strided_slice %401 {offsets = [0, 0], sizes = [4, 64], strides = [1, 1]} : vector<4x96xf32> to vector<4x64xf32>
    %404 = arith.addf %402, %403 : vector<4x64xf32>
    %405 = vector.extract_strided_slice %4 {offsets = [0, 0], sizes = [1, 64], strides = [1, 1]} : vector<1x128xf32> to vector<1x64xf32>
    %406 = vector.broadcast %405 : vector<1x64xf32> to vector<4x64xf32>
    %407 = arith.addf %404, %406 : vector<4x64xf32>
    %408 = arith.negf %407 : vector<4x64xf32>
    %409 = math.exp %408 : vector<4x64xf32>
    %cst_84 = arith.constant 1.000000e+00 : f32
    %410 = vector.broadcast %cst_84 : f32 to vector<4x64xf32>
    %411 = arith.addf %410, %409 : vector<4x64xf32>
    %412 = arith.divf %410, %411 : vector<4x64xf32>
    %413 = vector.extract_strided_slice %412 {offsets = [0, 0], sizes = [4, 32], strides = [1, 1]} : vector<4x64xf32> to vector<4x32xf32>
    %414 = vector.extract_strided_slice %412 {offsets = [0, 32], sizes = [4, 32], strides = [1, 1]} : vector<4x64xf32> to vector<4x32xf32>
    %415 = vector.extract_strided_slice %400 {offsets = [0, 64], sizes = [4, 32], strides = [1, 1]} : vector<4x96xf32> to vector<4x32xf32>
    %416 = vector.extract_strided_slice %4 {offsets = [0, 64], sizes = [1, 32], strides = [1, 1]} : vector<1x128xf32> to vector<1x32xf32>
    %417 = vector.broadcast %416 : vector<1x32xf32> to vector<4x32xf32>
    %418 = arith.addf %415, %417 : vector<4x32xf32>
    %419 = vector.extract_strided_slice %401 {offsets = [0, 64], sizes = [4, 32], strides = [1, 1]} : vector<4x96xf32> to vector<4x32xf32>
    %420 = vector.extract_strided_slice %4 {offsets = [0, 96], sizes = [1, 32], strides = [1, 1]} : vector<1x128xf32> to vector<1x32xf32>
    %421 = vector.broadcast %420 : vector<1x32xf32> to vector<4x32xf32>
    %422 = arith.addf %419, %421 : vector<4x32xf32>
    %423 = arith.mulf %413, %422 : vector<4x32xf32>
    %424 = arith.addf %418, %423 : vector<4x32xf32>
    %425 = math.tanh %424 : vector<4x32xf32>
    %cst_85 = arith.constant 1.000000e+00 : f32
    %426 = vector.broadcast %cst_85 : f32 to vector<4x32xf32>
    %427 = arith.subf %426, %414 : vector<4x32xf32>
    %428 = arith.mulf %427, %425 : vector<4x32xf32>
    %429 = arith.mulf %414, %365 : vector<4x32xf32>
    %430 = arith.addf %428, %429 : vector<4x32xf32>
    %cst_86 = arith.constant dense<0.000000e+00> : vector<4x96xf32>
    %431 = tpu.matmul %430, %1, %cst_86 {dimension_numbers = #tpu.dot_dimension_numbers<[1], [0], [0], [1], [0, 0, 1, 1], [], []>} : vector<4x32xf32>, vector<32x96xf32>, vector<4x96xf32> -> vector<4x96xf32>
    %cst_87 = arith.constant dense<0.000000e+00> : vector<4x96xf32>
    %432 = tpu.matmul %396, %3, %cst_87 {dimension_numbers = #tpu.dot_dimension_numbers<[1], [0], [0], [1], [0, 0, 1, 1], [], []>} : vector<4x32xf32>, vector<32x96xf32>, vector<4x96xf32> -> vector<4x96xf32>
    %433 = vector.extract_strided_slice %431 {offsets = [0, 0], sizes = [4, 64], strides = [1, 1]} : vector<4x96xf32> to vector<4x64xf32>
    %434 = vector.extract_strided_slice %432 {offsets = [0, 0], sizes = [4, 64], strides = [1, 1]} : vector<4x96xf32> to vector<4x64xf32>
    %435 = arith.addf %433, %434 : vector<4x64xf32>
    %436 = vector.extract_strided_slice %5 {offsets = [0, 0], sizes = [1, 64], strides = [1, 1]} : vector<1x128xf32> to vector<1x64xf32>
    %437 = vector.broadcast %436 : vector<1x64xf32> to vector<4x64xf32>
    %438 = arith.addf %435, %437 : vector<4x64xf32>
    %439 = arith.negf %438 : vector<4x64xf32>
    %440 = math.exp %439 : vector<4x64xf32>
    %cst_88 = arith.constant 1.000000e+00 : f32
    %441 = vector.broadcast %cst_88 : f32 to vector<4x64xf32>
    %442 = arith.addf %441, %440 : vector<4x64xf32>
    %443 = arith.divf %441, %442 : vector<4x64xf32>
    %444 = vector.extract_strided_slice %443 {offsets = [0, 0], sizes = [4, 32], strides = [1, 1]} : vector<4x64xf32> to vector<4x32xf32>
    %445 = vector.extract_strided_slice %443 {offsets = [0, 32], sizes = [4, 32], strides = [1, 1]} : vector<4x64xf32> to vector<4x32xf32>
    %446 = vector.extract_strided_slice %431 {offsets = [0, 64], sizes = [4, 32], strides = [1, 1]} : vector<4x96xf32> to vector<4x32xf32>
    %447 = vector.extract_strided_slice %5 {offsets = [0, 64], sizes = [1, 32], strides = [1, 1]} : vector<1x128xf32> to vector<1x32xf32>
    %448 = vector.broadcast %447 : vector<1x32xf32> to vector<4x32xf32>
    %449 = arith.addf %446, %448 : vector<4x32xf32>
    %450 = vector.extract_strided_slice %432 {offsets = [0, 64], sizes = [4, 32], strides = [1, 1]} : vector<4x96xf32> to vector<4x32xf32>
    %451 = vector.extract_strided_slice %5 {offsets = [0, 96], sizes = [1, 32], strides = [1, 1]} : vector<1x128xf32> to vector<1x32xf32>
    %452 = vector.broadcast %451 : vector<1x32xf32> to vector<4x32xf32>
    %453 = arith.addf %450, %452 : vector<4x32xf32>
    %454 = arith.mulf %444, %453 : vector<4x32xf32>
    %455 = arith.addf %449, %454 : vector<4x32xf32>
    %456 = math.tanh %455 : vector<4x32xf32>
    %cst_89 = arith.constant 1.000000e+00 : f32
    %457 = vector.broadcast %cst_89 : f32 to vector<4x32xf32>
    %458 = arith.subf %457, %445 : vector<4x32xf32>
    %459 = arith.mulf %458, %456 : vector<4x32xf32>
    %460 = arith.mulf %445, %396 : vector<4x32xf32>
    %461 = arith.addf %459, %460 : vector<4x32xf32>
    %c24 = arith.constant 24 : index
    %c0_90 = arith.constant 0 : index
    %462 = vector.load %arg10[%c24, %c0_90] : memref<32x32xf32, #tpu.memory_space<vmem>>, vector<4x32xf32>
    tpu.vector_store %arg10[%c24, %c0_90], %461 {strides = array<i32>} : memref<32x32xf32, #tpu.memory_space<vmem>>, vector<4x32xf32>,
    %c7 = arith.constant 7 : index
    %c0_91 = arith.constant 0 : index
    %c0_92 = arith.constant 0 : index
    %463 = vector.load %arg0[%c7, %c0_91, %c0_92] : memref<8x4x16xf32, #tpu.memory_space<vmem>>, vector<1x4x16xf32>
    %464 = vector.shape_cast %463 : vector<1x4x16xf32> to vector<4x16xf32>
    %cst_93 = arith.constant dense<0.000000e+00> : vector<4x96xf32>
    %465 = tpu.matmul %464, %0, %cst_93 {dimension_numbers = #tpu.dot_dimension_numbers<[1], [0], [0], [1], [0, 0, 1, 1], [], []>} : vector<4x16xf32>, vector<16x96xf32>, vector<4x96xf32> -> vector<4x96xf32>
    %cst_94 = arith.constant dense<0.000000e+00> : vector<4x96xf32>
    %466 = tpu.matmul %430, %2, %cst_94 {dimension_numbers = #tpu.dot_dimension_numbers<[1], [0], [0], [1], [0, 0, 1, 1], [], []>} : vector<4x32xf32>, vector<32x96xf32>, vector<4x96xf32> -> vector<4x96xf32>
    %467 = vector.extract_strided_slice %465 {offsets = [0, 0], sizes = [4, 64], strides = [1, 1]} : vector<4x96xf32> to vector<4x64xf32>
    %468 = vector.extract_strided_slice %466 {offsets = [0, 0], sizes = [4, 64], strides = [1, 1]} : vector<4x96xf32> to vector<4x64xf32>
    %469 = arith.addf %467, %468 : vector<4x64xf32>
    %470 = vector.extract_strided_slice %4 {offsets = [0, 0], sizes = [1, 64], strides = [1, 1]} : vector<1x128xf32> to vector<1x64xf32>
    %471 = vector.broadcast %470 : vector<1x64xf32> to vector<4x64xf32>
    %472 = arith.addf %469, %471 : vector<4x64xf32>
    %473 = arith.negf %472 : vector<4x64xf32>
    %474 = math.exp %473 : vector<4x64xf32>
    %cst_95 = arith.constant 1.000000e+00 : f32
    %475 = vector.broadcast %cst_95 : f32 to vector<4x64xf32>
    %476 = arith.addf %475, %474 : vector<4x64xf32>
    %477 = arith.divf %475, %476 : vector<4x64xf32>
    %478 = vector.extract_strided_slice %477 {offsets = [0, 0], sizes = [4, 32], strides = [1, 1]} : vector<4x64xf32> to vector<4x32xf32>
    %479 = vector.extract_strided_slice %477 {offsets = [0, 32], sizes = [4, 32], strides = [1, 1]} : vector<4x64xf32> to vector<4x32xf32>
    %480 = vector.extract_strided_slice %465 {offsets = [0, 64], sizes = [4, 32], strides = [1, 1]} : vector<4x96xf32> to vector<4x32xf32>
    %481 = vector.extract_strided_slice %4 {offsets = [0, 64], sizes = [1, 32], strides = [1, 1]} : vector<1x128xf32> to vector<1x32xf32>
    %482 = vector.broadcast %481 : vector<1x32xf32> to vector<4x32xf32>
    %483 = arith.addf %480, %482 : vector<4x32xf32>
    %484 = vector.extract_strided_slice %466 {offsets = [0, 64], sizes = [4, 32], strides = [1, 1]} : vector<4x96xf32> to vector<4x32xf32>
    %485 = vector.extract_strided_slice %4 {offsets = [0, 96], sizes = [1, 32], strides = [1, 1]} : vector<1x128xf32> to vector<1x32xf32>
    %486 = vector.broadcast %485 : vector<1x32xf32> to vector<4x32xf32>
    %487 = arith.addf %484, %486 : vector<4x32xf32>
    %488 = arith.mulf %478, %487 : vector<4x32xf32>
    %489 = arith.addf %483, %488 : vector<4x32xf32>
    %490 = math.tanh %489 : vector<4x32xf32>
    %cst_96 = arith.constant 1.000000e+00 : f32
    %491 = vector.broadcast %cst_96 : f32 to vector<4x32xf32>
    %492 = arith.subf %491, %479 : vector<4x32xf32>
    %493 = arith.mulf %492, %490 : vector<4x32xf32>
    %494 = arith.mulf %479, %430 : vector<4x32xf32>
    %495 = arith.addf %493, %494 : vector<4x32xf32>
    %cst_97 = arith.constant dense<0.000000e+00> : vector<4x96xf32>
    %496 = tpu.matmul %495, %1, %cst_97 {dimension_numbers = #tpu.dot_dimension_numbers<[1], [0], [0], [1], [0, 0, 1, 1], [], []>} : vector<4x32xf32>, vector<32x96xf32>, vector<4x96xf32> -> vector<4x96xf32>
    %cst_98 = arith.constant dense<0.000000e+00> : vector<4x96xf32>
    %497 = tpu.matmul %461, %3, %cst_98 {dimension_numbers = #tpu.dot_dimension_numbers<[1], [0], [0], [1], [0, 0, 1, 1], [], []>} : vector<4x32xf32>, vector<32x96xf32>, vector<4x96xf32> -> vector<4x96xf32>
    %498 = vector.extract_strided_slice %496 {offsets = [0, 0], sizes = [4, 64], strides = [1, 1]} : vector<4x96xf32> to vector<4x64xf32>
    %499 = vector.extract_strided_slice %497 {offsets = [0, 0], sizes = [4, 64], strides = [1, 1]} : vector<4x96xf32> to vector<4x64xf32>
    %500 = arith.addf %498, %499 : vector<4x64xf32>
    %501 = vector.extract_strided_slice %5 {offsets = [0, 0], sizes = [1, 64], strides = [1, 1]} : vector<1x128xf32> to vector<1x64xf32>
    %502 = vector.broadcast %501 : vector<1x64xf32> to vector<4x64xf32>
    %503 = arith.addf %500, %502 : vector<4x64xf32>
    %504 = arith.negf %503 : vector<4x64xf32>
    %505 = math.exp %504 : vector<4x64xf32>
    %cst_99 = arith.constant 1.000000e+00 : f32
    %506 = vector.broadcast %cst_99 : f32 to vector<4x64xf32>
    %507 = arith.addf %506, %505 : vector<4x64xf32>
    %508 = arith.divf %506, %507 : vector<4x64xf32>
    %509 = vector.extract_strided_slice %508 {offsets = [0, 0], sizes = [4, 32], strides = [1, 1]} : vector<4x64xf32> to vector<4x32xf32>
    %510 = vector.extract_strided_slice %508 {offsets = [0, 32], sizes = [4, 32], strides = [1, 1]} : vector<4x64xf32> to vector<4x32xf32>
    %511 = vector.extract_strided_slice %496 {offsets = [0, 64], sizes = [4, 32], strides = [1, 1]} : vector<4x96xf32> to vector<4x32xf32>
    %512 = vector.extract_strided_slice %5 {offsets = [0, 64], sizes = [1, 32], strides = [1, 1]} : vector<1x128xf32> to vector<1x32xf32>
    %513 = vector.broadcast %512 : vector<1x32xf32> to vector<4x32xf32>
    %514 = arith.addf %511, %513 : vector<4x32xf32>
    %515 = vector.extract_strided_slice %497 {offsets = [0, 64], sizes = [4, 32], strides = [1, 1]} : vector<4x96xf32> to vector<4x32xf32>
    %516 = vector.extract_strided_slice %5 {offsets = [0, 96], sizes = [1, 32], strides = [1, 1]} : vector<1x128xf32> to vector<1x32xf32>
    %517 = vector.broadcast %516 : vector<1x32xf32> to vector<4x32xf32>
    %518 = arith.addf %515, %517 : vector<4x32xf32>
    %519 = arith.mulf %509, %518 : vector<4x32xf32>
    %520 = arith.addf %514, %519 : vector<4x32xf32>
    %521 = math.tanh %520 : vector<4x32xf32>
    %cst_100 = arith.constant 1.000000e+00 : f32
    %522 = vector.broadcast %cst_100 : f32 to vector<4x32xf32>
    %523 = arith.subf %522, %510 : vector<4x32xf32>
    %524 = arith.mulf %523, %521 : vector<4x32xf32>
    %525 = arith.mulf %510, %461 : vector<4x32xf32>
    %526 = arith.addf %524, %525 : vector<4x32xf32>
    %c28 = arith.constant 28 : index
    %c0_101 = arith.constant 0 : index
    %527 = vector.load %arg10[%c28, %c0_101] : memref<32x32xf32, #tpu.memory_space<vmem>>, vector<4x32xf32>
    tpu.vector_store %arg10[%c28, %c0_101], %526 {strides = array<i32>} : memref<32x32xf32, #tpu.memory_space<vmem>>, vector<4x32xf32>,
    %c0_102 = arith.constant 0 : index
    %c0_103 = arith.constant 0 : index
    %528 = vector.load %arg10[%c0_102, %c0_103] : memref<32x32xf32, #tpu.memory_space<vmem>>, vector<32x32xf32>
    %c0_104 = arith.constant 0 : index
    %c0_105 = arith.constant 0 : index
    %529 = vector.load %arg1[%c0_104, %c0_105] : memref<32x16xf32, #tpu.memory_space<vmem>>, vector<32x16xf32>
    %c0_106 = arith.constant 0 : index
    %c0_107 = arith.constant 0 : index
    %530 = vector.load %arg5[%c0_106, %c0_107] : memref<48x32xf32, #tpu.memory_space<vmem>>, vector<32x32xf32>
    %cst_108 = arith.constant dense<0.000000e+00> : vector<32x32xf32>
    %531 = tpu.matmul %528, %530, %cst_108 {dimension_numbers = #tpu.dot_dimension_numbers<[1], [0], [0], [1], [0, 0, 1, 1], [], []>} : vector<32x32xf32>, vector<32x32xf32>, vector<32x32xf32> -> vector<32x32xf32>
    %c32_109 = arith.constant 32 : index
    %c0_110 = arith.constant 0 : index
    %532 = vector.load %arg5[%c32_109, %c0_110] : memref<48x32xf32, #tpu.memory_space<vmem>>, vector<16x32xf32>
    %cst_111 = arith.constant dense<0.000000e+00> : vector<32x32xf32>
    %533 = tpu.matmul %529, %532, %cst_111 {dimension_numbers = #tpu.dot_dimension_numbers<[1], [0], [0], [1], [0, 0, 1, 1], [], []>} : vector<32x16xf32>, vector<16x32xf32>, vector<32x32xf32> -> vector<32x32xf32>
    %534 = arith.addf %531, %533 : vector<32x32xf32>
    %c0_112 = arith.constant 0 : index
    %c0_113 = arith.constant 0 : index
    %535 = vector.load %arg6[%c0_112, %c0_113] : memref<1x32xf32, #tpu.memory_space<vmem>>, vector<1x32xf32>
    %536 = vector.broadcast %535 : vector<1x32xf32> to vector<32x32xf32>
    %537 = arith.addf %534, %536 : vector<32x32xf32>
    %cst_114 = arith.constant 0.000000e+00 : f32
    %538 = vector.broadcast %cst_114 : f32 to vector<32x32xf32>
    %539 = arith.maximumf %537, %538 : vector<32x32xf32>
    %c0_115 = arith.constant 0 : index
    %c0_116 = arith.constant 0 : index
    %540 = vector.load %arg7[%c0_115, %c0_116] : memref<32x1xf32, #tpu.memory_space<vmem>>, vector<32x1xf32>
    %cst_117 = arith.constant dense<0.000000e+00> : vector<32x1xf32>
    %541 = tpu.matmul %539, %540, %cst_117 {dimension_numbers = #tpu.dot_dimension_numbers<[1], [0], [0], [1], [0, 0, 1, 1], [], []>} : vector<32x32xf32>, vector<32x1xf32>, vector<32x1xf32> -> vector<32x1xf32>
    %c0_118 = arith.constant 0 : index
    %c0_119 = arith.constant 0 : index
    %542 = vector.load %arg8[%c0_118, %c0_119] : memref<1x1xf32, #tpu.memory_space<vmem>>, vector<1x1xf32>
    %543 = vector.broadcast %542 : vector<1x1xf32> to vector<32x1xf32>
    %544 = arith.addf %541, %543 : vector<32x1xf32>
    %545 = arith.negf %544 : vector<32x1xf32>
    %546 = math.exp %545 : vector<32x1xf32>
    %cst_120 = arith.constant 1.000000e+00 : f32
    %547 = vector.broadcast %cst_120 : f32 to vector<32x1xf32>
    %548 = arith.addf %547, %546 : vector<32x1xf32>
    %549 = arith.divf %547, %548 : vector<32x1xf32>
    %c0_121 = arith.constant 0 : index
    %c0_122 = arith.constant 0 : index
    %550 = vector.load %arg9[%c0_121, %c0_122] : memref<32x1xf32, #tpu.memory_space<vmem>>, vector<32x1xf32>
    tpu.vector_store %arg9[%c0_121, %c0_122], %549 {strides = array<i32>} : memref<32x1xf32, #tpu.memory_space<vmem>>, vector<32x1xf32>,
    return
  }
}

</mosaic_0001>

<llo_original>
// kernel: tpu_custom_call.1
$region0: #{tpu_custom_call.1}
  #allocation0 [shape = 'u32[]', space=smem, size = 0x4, offset = 0x4, fixed_abs, tag = 'smem constant byte address 0x4 - core index']
  #allocation1 [shape = 'u32[144,128]{1,0:T(1,128)}', space=vmem, size = 0x12000, scoped, tag = 'internal scratch']
  #allocation2 [shape = 'f32[32,32]{1,0:T(8,128)}', space=vmem, size = 0x4000, scoped, tag = 'scratch operand']
  #allocation3 [shape = 'f32[1,1]{1,0:T(1,128)S(1)}', space=vmem, size = 0x200, scoped, tag = 'scoped memory for tpu_custom_call.1']
  %s0 = inlined_call_operand.vmem [shape: f32[8,4,16], index: 0, kind: input, shape index: {}]
  %s1 = inlined_call_operand.vmem [shape: f32[32,16], index: 1, kind: input, shape index: {}]
  %s2 = inlined_call_operand.vmem [shape: f32[48,96], index: 2, kind: input, shape index: {}]
  %s3 = inlined_call_operand.vmem [shape: f32[64,96], index: 3, kind: input, shape index: {}]
  %s4 = inlined_call_operand.vmem [shape: f32[2,128], index: 4, kind: input, shape index: {}]
  %s5 = inlined_call_operand.vmem [shape: f32[48,32], index: 5, kind: input, shape index: {}]
  %s6 = inlined_call_operand.vmem [shape: f32[1,32], index: 6, kind: input, shape index: {}]
  %s7 = inlined_call_operand.vmem [shape: f32[32,1], index: 7, kind: input, shape index: {}]
  %s8 = inlined_call_operand.<no memory space> [shape: f32[1,1], index: 8, kind: input, shape index: {}]
  %s9 = inlined_call_operand.vmem [shape: f32[32,1], index: 9, kind: output, shape index: {}]
  %s10 = sld [smem:[#allocation0]]
  $region46: #{tpu_custom_call.1} parent=0
    _
  %s12 = ssub.s32 1, %s10
  %s13 = scalar_select 0, %s12, %s10
  %v14 = vstv %s8
  %15 = vst [vmem:[#allocation3] sm:$0x1] %v14
  // Predicated region
  $region2: #{tpu_custom_call.1} parent=0 // pred_check
    _
  $region3: #{tpu_custom_call.1} parent=0 // pred_check_branch
    %17 = sbr.rel (0) target = $region5
  $region4: #{tpu_custom_call.1} parent=0 // pred_region
    _
  $region5: #{tpu_custom_call.1} parent=0 // pred_fallthru
    _
  // Predicated region
  $region6: #{tpu_custom_call.1} parent=0 // pred_check
    _
  $region7: #{tpu_custom_call.1} parent=0 // pred_check_branch
    %19 = sbr.rel (0) target = $region9
  $region8: #{tpu_custom_call.1} parent=0 // pred_region
    _
  $region9: #{tpu_custom_call.1} parent=0 // pred_fallthru
    _
  // Predicated region
  $region10: #{tpu_custom_call.1} parent=0 // pred_check
    _
  $region11: #{tpu_custom_call.1} parent=0 // pred_check_branch
    %21 = sbr.rel (0) target = $region13
  $region12: #{tpu_custom_call.1} parent=0 // pred_region
    _
  $region13: #{tpu_custom_call.1} parent=0 // pred_fallthru
    _
  // Predicated region
  $region14: #{tpu_custom_call.1} parent=0 // pred_check
    _
  $region15: #{tpu_custom_call.1} parent=0 // pred_check_branch
    %23 = sbr.rel (0) target = $region17
  $region16: #{tpu_custom_call.1} parent=0 // pred_region
    _
  $region17: #{tpu_custom_call.1} parent=0 // pred_fallthru
    _
  // Predicated region
  $region18: #{tpu_custom_call.1} parent=0 // pred_check
    _
  $region19: #{tpu_custom_call.1} parent=0 // pred_check_branch
    %25 = sbr.rel (0) target = $region21
  $region20: #{tpu_custom_call.1} parent=0 // pred_region
    _
  $region21: #{tpu_custom_call.1} parent=0 // pred_fallthru
    _
  // Predicated region
  $region22: #{tpu_custom_call.1} parent=0 // pred_check
    _
  $region23: #{tpu_custom_call.1} parent=0 // pred_check_branch
    %27 = sbr.rel (0) target = $region25
  $region24: #{tpu_custom_call.1} parent=0 // pred_region
    _
  $region25: #{tpu_custom_call.1} parent=0 // pred_fallthru
    _
  // Predicated region
  $region26: #{tpu_custom_call.1} parent=0 // pred_check
    _
  $region27: #{tpu_custom_call.1} parent=0 // pred_check_branch
    %29 = sbr.rel (0) target = $region29
  $region28: #{tpu_custom_call.1} parent=0 // pred_region
    _
  $region29: #{tpu_custom_call.1} parent=0 // pred_fallthru
    _
  // Predicated region
  $region30: #{tpu_custom_call.1} parent=0 // pred_check
    _
  $region31: #{tpu_custom_call.1} parent=0 // pred_check_branch
    %31 = sbr.rel (0) target = $region33
  $region32: #{tpu_custom_call.1} parent=0 // pred_region
    _
  $region33: #{tpu_custom_call.1} parent=0 // pred_fallthru
    _
  // Predicated region
  $region34: #{tpu_custom_call.1} parent=0 // pred_check
    _
  $region35: #{tpu_custom_call.1} parent=0 // pred_check_branch
    %33 = sbr.rel (0) target = $region37
  $region36: #{tpu_custom_call.1} parent=0 // pred_region
    _
  $region37: #{tpu_custom_call.1} parent=0 // pred_fallthru
    _
  %v34 = vld [vmem:[%s2] sm:$0xff]
  %v35 = vld [vmem:[%s2 + $0x8] sm:$0xff]
  %v36 = vld [vmem:[%s2 + $0x10] sm:$0xff]
  %v37 = vld [vmem:[%s2 + $0x18] sm:$0xff]
  %v38 = vld [vmem:[%s2 + $0x20] sm:$0xff]
  %v39 = vld [vmem:[%s2 + $0x28] sm:$0xff]
  %v40 = vld [vmem:[%s3] sm:$0xff]
  %v41 = vld [vmem:[%s3 + $0x8] sm:$0xff]
  %v42 = vld [vmem:[%s3 + $0x10] sm:$0xff]
  %v43 = vld [vmem:[%s3 + $0x18] sm:$0xff]
  %v44 = vld [vmem:[%s3 + $0x20] sm:$0xff]
  %v45 = vld [vmem:[%s3 + $0x28] sm:$0xff]
  %v46 = vld [vmem:[%s3 + $0x30] sm:$0xff]
  %v47 = vld [vmem:[%s3 + $0x38] sm:$0xff]
  %v48 = vld [vmem:[%s4] sm:$0x1]
  %v49 = vld [vmem:[%s4 + $0x1] sm:$0x1]
  %v50 = vld [vmem:[%s0] sm:$0xf]
  %vm51 = vcmask 130048
  %v53 = vsel %vm51, %v50, 0
  %55 = vmatprep.subr.mxu0 0.0
  %56 = vmatpush1.msra.mxu0 0.0
  %57 = vmatprep.subr.mxu0 0.0
  %58 = vmatpush1.msra.mxu0 0.0
  %59 = vmatprep.subr.mxu0 0.0
  %60 = vmatpush1.msra.mxu0 0.0
  %61 = vmatprep.subr.mxu0 0.0
  %62 = vmatpush1.msra.mxu0 0.0
  %63 = vmatprep.subr.mxu0 0.0
  %64 = vmatpush1.msra.mxu0 0.0
  %65 = vmatprep.subr.mxu0 0.0
  %66 = vmatpush1.msra.mxu0 0.0
  %67 = vmatprep.subr.mxu0 0.0
  %68 = vmatpush1.msra.mxu0 0.0
  %69 = vmatprep.subr.mxu0 0.0
  %70 = vmatpush1.msra.mxu0 0.0
  %71 = vmatprep.subr.mxu0 0.0
  %72 = vmatpush1.msra.mxu0 0.0
  %73 = vmatprep.subr.mxu0 0.0
  %74 = vmatpush1.msra.mxu0 0.0
  %75 = vmatprep.subr.mxu0 0.0
  %76 = vmatpush1.msra.mxu0 0.0
  %77 = vmatprep.subr.mxu0 0.0
  %78 = vmatpush1.msra.mxu0 0.0
  %79 = vmatprep.subr.mxu0 0.0
  %80 = vmatpush1.msra.mxu0 0.0
  %81 = vmatprep.subr.mxu0 0.0
  %82 = vmatpush1.msra.mxu0 0.0
  %83 = vmatprep.subr.mxu0 0.0
  %84 = vmatpush1.msra.mxu0 %v35
  %85 = vmatprep.subr.mxu0 0.0
  %86 = vmatpush1.msra.mxu0 %v34
  %87 = vmatprep.subr.mxu0 0.0
  %88 = vmatpush2.msra.mxu0 0.0
  %89 = vmatprep.subr.mxu0 0.0
  %90 = vmatpush2.msra.mxu0 0.0
  %91 = vmatprep.subr.mxu0 0.0
  %92 = vmatpush2.msra.mxu0 0.0
  %93 = vmatprep.subr.mxu0 0.0
  %94 = vmatpush2.msra.mxu0 0.0
  %95 = vmatprep.subr.mxu0 0.0
  %96 = vmatpush2.msra.mxu0 0.0
  %97 = vmatprep.subr.mxu0 0.0
  %98 = vmatpush2.msra.mxu0 0.0
  %99 = vmatprep.subr.mxu0 0.0
  %100 = vmatpush2.msra.mxu0 0.0
  %101 = vmatprep.subr.mxu0 0.0
  %102 = vmatpush2.msra.mxu0 0.0
  %103 = vmatprep.subr.mxu0 0.0
  %104 = vmatpush2.msra.mxu0 0.0
  %105 = vmatprep.subr.mxu0 0.0
  %106 = vmatpush2.msra.mxu0 0.0
  %107 = vmatprep.subr.mxu0 0.0
  %108 = vmatpush2.msra.mxu0 0.0
  %109 = vmatprep.subr.mxu0 0.0
  %110 = vmatpush2.msra.mxu0 0.0
  %111 = vmatprep.subr.mxu0 0.0
  %112 = vmatpush2.msra.mxu0 0.0
  %113 = vmatprep.subr.mxu0 0.0
  %114 = vmatpush2.msra.mxu0 0.0
  %115 = vmatprep.subr.mxu0 0.0
  %116 = vmatpush2.msra.mxu0 0.0
  %117 = vmatprep.subr.mxu0 0.0
  %118 = vmatpush2.msra.mxu0 0.0
  %119 = vmatprep.mubr.f32.mxu0 0.0
  %120 = vmatmul.mubr.f32.gmra.mxu0 %v53
  %v121 = vpop.f32.mrf.mxu0
  %v122 = vadd.f32 0.0, %v121
  %v123 = vpop.f32.mrf.mxu0
  %124 = vdwg.mxu0
  %vm125 = vcmask 261120
  %v127 = vsel %vm125, 0.0, 0
  %129 = vmatprep.subr.mxu0 0.0
  %130 = vmatpush1.msra.mxu0 0.0
  %131 = vmatprep.subr.mxu0 0.0
  %132 = vmatpush1.msra.mxu0 0.0
  %133 = vmatprep.subr.mxu0 0.0
  %134 = vmatpush1.msra.mxu0 0.0
  %135 = vmatprep.subr.mxu0 0.0
  %136 = vmatpush1.msra.mxu0 0.0
  %137 = vmatprep.subr.mxu0 0.0
  %138 = vmatpush1.msra.mxu0 0.0
  %139 = vmatprep.subr.mxu0 0.0
  %140 = vmatpush1.msra.mxu0 0.0
  %141 = vmatprep.subr.mxu0 0.0
  %142 = vmatpush1.msra.mxu0 0.0
  %143 = vmatprep.subr.mxu0 0.0
  %144 = vmatpush1.msra.mxu0 0.0
  %145 = vmatprep.subr.mxu0 0.0
  %146 = vmatpush1.msra.mxu0 0.0
  %147 = vmatprep.subr.mxu0 0.0
  %148 = vmatpush1.msra.mxu0 0.0
  %149 = vmatprep.subr.mxu0 0.0
  %150 = vmatpush1.msra.mxu0 0.0
  %151 = vmatprep.subr.mxu0 0.0
  %152 = vmatpush1.msra.mxu0 0.0
  %153 = vmatprep.subr.mxu0 0.0
  %154 = vmatpush1.msra.mxu0 %v43
  %155 = vmatprep.subr.mxu0 0.0
  %156 = vmatpush1.msra.mxu0 %v42
  %157 = vmatprep.subr.mxu0 0.0
  %158 = vmatpush1.msra.mxu0 %v41
  %159 = vmatprep.subr.mxu0 0.0
  %160 = vmatpush1.msra.mxu0 %v40
  %161 = vmatprep.subr.mxu0 0.0
  %162 = vmatpush2.msra.mxu0 0.0
  %163 = vmatprep.subr.mxu0 0.0
  %164 = vmatpush2.msra.mxu0 0.0
  %165 = vmatprep.subr.mxu0 0.0
  %166 = vmatpush2.msra.mxu0 0.0
  %167 = vmatprep.subr.mxu0 0.0
  %168 = vmatpush2.msra.mxu0 0.0
  %169 = vmatprep.subr.mxu0 0.0
  %170 = vmatpush2.msra.mxu0 0.0
  %171 = vmatprep.subr.mxu0 0.0
  %172 = vmatpush2.msra.mxu0 0.0
  %173 = vmatprep.subr.mxu0 0.0
  %174 = vmatpush2.msra.mxu0 0.0
  %175 = vmatprep.subr.mxu0 0.0
  %176 = vmatpush2.msra.mxu0 0.0
  %177 = vmatprep.subr.mxu0 0.0
  %178 = vmatpush2.msra.mxu0 0.0
  %179 = vmatprep.subr.mxu0 0.0
  %180 = vmatpush2.msra.mxu0 0.0
  %181 = vmatprep.subr.mxu0 0.0
  %182 = vmatpush2.msra.mxu0 0.0
  %183 = vmatprep.subr.mxu0 0.0
  %184 = vmatpush2.msra.mxu0 0.0
  %185 = vmatprep.subr.mxu0 0.0
  %186 = vmatpush2.msra.mxu0 0.0
  %187 = vmatprep.subr.mxu0 0.0
  %188 = vmatpush2.msra.mxu0 0.0
  %189 = vmatprep.subr.mxu0 0.0
  %190 = vmatpush2.msra.mxu0 0.0
  %191 = vmatprep.subr.mxu0 0.0
  %192 = vmatpush2.msra.mxu0 0.0
  %193 = vmatprep.mubr.f32.mxu0 0.0
  %194 = vmatmul.mubr.f32.gmra.mxu0 %v127
  %v195 = vpop.f32.mrf.mxu0
  %v196 = vadd.f32 0.0, %v195
  %v197 = vpop.f32.mrf.mxu0
  %198 = vdwg.mxu0
  %v199 = vadd.f32 %v122, %v196
  %v200 = vlaneseq
  %v201 = vshrl.u32 %v200, 7
  %v202 = vsub.s32 0, %v201
  %v203 = vrot.slane %v48, %v202
  %v204 = vadd.f32 %v199, %v203
  %v205 = vxor.u32 %v204, 2147483648
  %v206 = vmul.f32 %v205, 1.442695
  %v207 = vpow.pop %v206
  %v208 = vadd.f32 %v207, 1.0
  %v209 = vrcp.pop %v208
  %v210 = vmul.f32 1.0, %v209
  %v211 = vadd.f32 %v122, %v203
  %213 = vrot.lane.b32.xlu0 %v203, 96
  %v214 = vpop.permute.xlu0 %213
  %v216 = vadd.f32 %v196, %v214
  %218 = vrot.lane.b32.xlu0 %v216, 64
  %v219 = vpop.permute.xlu0 %218
  %v221 = vmul.f32 %v210, %v219
  %223 = vrot.lane.b32.xlu0 %v221, 64
  %v224 = vpop.permute.xlu0 %223
  %v226 = vadd.f32 %v211, %v224
  %v227 = vtanh.pop %v226
  %v228 = vsub.f32 1.0, %v210
  %230 = vrot.lane.b32.xlu0 %v227, 96
  %v231 = vpop.permute.xlu0 %230
  %v233 = vmul.f32 %v228, %v231
  %v234 = vmul.f32 %v210, 0.0
  %v235 = vadd.f32 %v233, %v234
  %237 = vrot.lane.b32.xlu0 %v235, 96
  %v238 = vpop.permute.xlu0 %237
  %v239 = vsel %vm125, %v238, 0
  %241 = vmatprep.subr.mxu0 0.0
  %242 = vmatpush1.msra.mxu0 0.0
  %243 = vmatprep.subr.mxu0 0.0
  %244 = vmatpush1.msra.mxu0 0.0
  %245 = vmatprep.subr.mxu0 0.0
  %246 = vmatpush1.msra.mxu0 0.0
  %247 = vmatprep.subr.mxu0 0.0
  %248 = vmatpush1.msra.mxu0 0.0
  %249 = vmatprep.subr.mxu0 0.0
  %250 = vmatpush1.msra.mxu0 0.0
  %251 = vmatprep.subr.mxu0 0.0
  %252 = vmatpush1.msra.mxu0 0.0
  %253 = vmatprep.subr.mxu0 0.0
  %254 = vmatpush1.msra.mxu0 0.0
  %255 = vmatprep.subr.mxu0 0.0
  %256 = vmatpush1.msra.mxu0 0.0
  %257 = vmatprep.subr.mxu0 0.0
  %258 = vmatpush1.msra.mxu0 0.0
  %259 = vmatprep.subr.mxu0 0.0
  %260 = vmatpush1.msra.mxu0 0.0
  %261 = vmatprep.subr.mxu0 0.0
  %262 = vmatpush1.msra.mxu0 0.0
  %263 = vmatprep.subr.mxu0 0.0
  %264 = vmatpush1.msra.mxu0 0.0
  %265 = vmatprep.subr.mxu0 0.0
  %266 = vmatpush1.msra.mxu0 %v39
  %267 = vmatprep.subr.mxu0 0.0
  %268 = vmatpush1.msra.mxu0 %v38
  %269 = vmatprep.subr.mxu0 0.0
  %270 = vmatpush1.msra.mxu0 %v37
  %271 = vmatprep.subr.mxu0 0.0
  %272 = vmatpush1.msra.mxu0 %v36
  %273 = vmatprep.subr.mxu0 0.0
  %274 = vmatpush2.msra.mxu0 0.0
  %275 = vmatprep.subr.mxu0 0.0
  %276 = vmatpush2.msra.mxu0 0.0
  %277 = vmatprep.subr.mxu0 0.0
  %278 = vmatpush2.msra.mxu0 0.0
  %279 = vmatprep.subr.mxu0 0.0
  %280 = vmatpush2.msra.mxu0 0.0
  %281 = vmatprep.subr.mxu0 0.0
  %282 = vmatpush2.msra.mxu0 0.0
  %283 = vmatprep.subr.mxu0 0.0
  %284 = vmatpush2.msra.mxu0 0.0
  %285 = vmatprep.subr.mxu0 0.0
  %286 = vmatpush2.msra.mxu0 0.0
  %287 = vmatprep.subr.mxu0 0.0
  %288 = vmatpush2.msra.mxu0 0.0
  %289 = vmatprep.subr.mxu0 0.0
  %290 = vmatpush2.msra.mxu0 0.0
  %291 = vmatprep.subr.mxu0 0.0
  %292 = vmatpush2.msra.mxu0 0.0
  %293 = vmatprep.subr.mxu0 0.0
  %294 = vmatpush2.msra.mxu0 0.0
  %295 = vmatprep.subr.mxu0 0.0
  %296 = vmatpush2.msra.mxu0 0.0
  %297 = vmatprep.subr.mxu0 0.0
  %298 = vmatpush2.msra.mxu0 0.0
  %299 = vmatprep.subr.mxu0 0.0
  %300 = vmatpush2.msra.mxu0 0.0
  %301 = vmatprep.subr.mxu0 0.0
  %302 = vmatpush2.msra.mxu0 0.0
  %303 = vmatprep.subr.mxu0 0.0
  %304 = vmatpush2.msra.mxu0 0.0
  %305 = vmatprep.mubr.f32.mxu0 0.0
  %306 = vmatmul.mubr.f32.gmra.mxu0 %v239
  %v307 = vpop.f32.mrf.mxu0
  %v308 = vadd.f32 0.0, %v307
  %v309 = vpop.f32.mrf.mxu0
  %310 = vdwg.mxu0
  %311 = vmatprep.subr.mxu0 0.0
  %312 = vmatpush1.msra.mxu0 0.0
  %313 = vmatprep.subr.mxu0 0.0
  %314 = vmatpush1.msra.mxu0 0.0
  %315 = vmatprep.subr.mxu0 0.0
  %316 = vmatpush1.msra.mxu0 0.0
  %317 = vmatprep.subr.mxu0 0.0
  %318 = vmatpush1.msra.mxu0 0.0
  %319 = vmatprep.subr.mxu0 0.0
  %320 = vmatpush1.msra.mxu0 0.0
  %321 = vmatprep.subr.mxu0 0.0
  %322 = vmatpush1.msra.mxu0 0.0
  %323 = vmatprep.subr.mxu0 0.0
  %324 = vmatpush1.msra.mxu0 0.0
  %325 = vmatprep.subr.mxu0 0.0
  %326 = vmatpush1.msra.mxu0 0.0
  %327 = vmatprep.subr.mxu0 0.0
  %328 = vmatpush1.msra.mxu0 0.0
  %329 = vmatprep.subr.mxu0 0.0
  %330 = vmatpush1.msra.mxu0 0.0
  %331 = vmatprep.subr.mxu0 0.0
  %332 = vmatpush1.msra.mxu0 0.0
  %333 = vmatprep.subr.mxu0 0.0
  %334 = vmatpush1.msra.mxu0 0.0
  %335 = vmatprep.subr.mxu0 0.0
  %336 = vmatpush1.msra.mxu0 %v47
  %337 = vmatprep.subr.mxu0 0.0
  %338 = vmatpush1.msra.mxu0 %v46
  %339 = vmatprep.subr.mxu0 0.0
  %340 = vmatpush1.msra.mxu0 %v45
  %341 = vmatprep.subr.mxu0 0.0
  %342 = vmatpush1.msra.mxu0 %v44
  %343 = vmatprep.subr.mxu0 0.0
  %344 = vmatpush2.msra.mxu0 0.0
  %345 = vmatprep.subr.mxu0 0.0
  %346 = vmatpush2.msra.mxu0 0.0
  %347 = vmatprep.subr.mxu0 0.0
  %348 = vmatpush2.msra.mxu0 0.0
  %349 = vmatprep.subr.mxu0 0.0
  %350 = vmatpush2.msra.mxu0 0.0
  %351 = vmatprep.subr.mxu0 0.0
  %352 = vmatpush2.msra.mxu0 0.0
  %353 = vmatprep.subr.mxu0 0.0
  %354 = vmatpush2.msra.mxu0 0.0
  %355 = vmatprep.subr.mxu0 0.0
  %356 = vmatpush2.msra.mxu0 0.0
  %357 = vmatprep.subr.mxu0 0.0
  %358 = vmatpush2.msra.mxu0 0.0
  %359 = vmatprep.subr.mxu0 0.0
  %360 = vmatpush2.msra.mxu0 0.0
  %361 = vmatprep.subr.mxu0 0.0
  %362 = vmatpush2.msra.mxu0 0.0
  %363 = vmatprep.subr.mxu0 0.0
  %364 = vmatpush2.msra.mxu0 0.0
  %365 = vmatprep.subr.mxu0 0.0
  %366 = vmatpush2.msra.mxu0 0.0
  %367 = vmatprep.subr.mxu0 0.0
  %368 = vmatpush2.msra.mxu0 0.0
  %369 = vmatprep.subr.mxu0 0.0
  %370 = vmatpush2.msra.mxu0 0.0
  %371 = vmatprep.subr.mxu0 0.0
  %372 = vmatpush2.msra.mxu0 0.0
  %373 = vmatprep.subr.mxu0 0.0
  %374 = vmatpush2.msra.mxu0 0.0
  %375 = vmatprep.mubr.f32.mxu0 0.0
  %376 = vmatmul.mubr.f32.gmra.mxu0 %v127
  %v377 = vpop.f32.mrf.mxu0
  %v378 = vadd.f32 0.0, %v377
  %v379 = vpop.f32.mrf.mxu0
  %380 = vdwg.mxu0
  %v381 = vadd.f32 %v308, %v378
  %v382 = vlaneseq
  %v383 = vshrl.u32 %v382, 7
  %v384 = vsub.s32 0, %v383
  %v385 = vrot.slane %v49, %v384
  %v386 = vadd.f32 %v381, %v385
  %v387 = vxor.u32 %v386, 2147483648
  %v388 = vmul.f32 %v387, 1.442695
  %v389 = vpow.pop %v388
  %v390 = vadd.f32 %v389, 1.0
  %v391 = vrcp.pop %v390
  %v392 = vmul.f32 1.0, %v391
  %v393 = vadd.f32 %v308, %v385
  %395 = vrot.lane.b32.xlu0 %v385, 96
  %v396 = vpop.permute.xlu0 %395
  %v398 = vadd.f32 %v378, %v396
  %400 = vrot.lane.b32.xlu0 %v398, 64
  %v401 = vpop.permute.xlu0 %400
  %v403 = vmul.f32 %v392, %v401
  %405 = vrot.lane.b32.xlu0 %v403, 64
  %v406 = vpop.permute.xlu0 %405
  %v408 = vadd.f32 %v393, %v406
  %v409 = vtanh.pop %v408
  %v410 = vsub.f32 1.0, %v392
  %412 = vrot.lane.b32.xlu0 %v409, 96
  %v413 = vpop.permute.xlu0 %412
  %v415 = vmul.f32 %v410, %v413
  %v416 = vmul.f32 %v392, 0.0
  %v417 = vadd.f32 %v415, %v416
  %419 = vrot.lane.b32.xlu0 %v417, 96
  %v420 = vpop.permute.xlu0 %419
  %vm422 = vcmask 257024
  %423 = vst.msk [vmem:[#allocation2] sm:$0xf] %vm422, %v420
  %s424 = scalar_lea.vmem %s0, 4
  %v425 = vld [vmem:[%s424] sm:$0xf]
  %v427 = vsel %vm51, %v425, 0
  %429 = vmatprep.subr.mxu0 0.0
  %430 = vmatpush1.msra.mxu0 0.0
  %431 = vmatprep.subr.mxu0 0.0
  %432 = vmatpush1.msra.mxu0 0.0
  %433 = vmatprep.subr.mxu0 0.0
  %434 = vmatpush1.msra.mxu0 0.0
  %435 = vmatprep.subr.mxu0 0.0
  %436 = vmatpush1.msra.mxu0 0.0
  %437 = vmatprep.subr.mxu0 0.0
  %438 = vmatpush1.msra.mxu0 0.0
  %439 = vmatprep.subr.mxu0 0.0
  %440 = vmatpush1.msra.mxu0 0.0
  %441 = vmatprep.subr.mxu0 0.0
  %442 = vmatpush1.msra.mxu0 0.0
  %443 = vmatprep.subr.mxu0 0.0
  %444 = vmatpush1.msra.mxu0 0.0
  %445 = vmatprep.subr.mxu0 0.0
  %446 = vmatpush1.msra.mxu0 0.0
  %447 = vmatprep.subr.mxu0 0.0
  %448 = vmatpush1.msra.mxu0 0.0
  %449 = vmatprep.subr.mxu0 0.0
  %450 = vmatpush1.msra.mxu0 0.0
  %451 = vmatprep.subr.mxu0 0.0
  %452 = vmatpush1.msra.mxu0 0.0
  %453 = vmatprep.subr.mxu0 0.0
  %454 = vmatpush1.msra.mxu0 0.0
  %455 = vmatprep.subr.mxu0 0.0
  %456 = vmatpush1.msra.mxu0 0.0
  %457 = vmatprep.subr.mxu0 0.0
  %458 = vmatpush1.msra.mxu0 %v35
  %459 = vmatprep.subr.mxu0 0.0
  %460 = vmatpush1.msra.mxu0 %v34
  %461 = vmatprep.subr.mxu0 0.0
  %462 = vmatpush2.msra.mxu0 0.0
  %463 = vmatprep.subr.mxu0 0.0
  %464 = vmatpush2.msra.mxu0 0.0
  %465 = vmatprep.subr.mxu0 0.0
  %466 = vmatpush2.msra.mxu0 0.0
  %467 = vmatprep.subr.mxu0 0.0
  %468 = vmatpush2.msra.mxu0 0.0
  %469 = vmatprep.subr.mxu0 0.0
  %470 = vmatpush2.msra.mxu0 0.0
  %471 = vmatprep.subr.mxu0 0.0
  %472 = vmatpush2.msra.mxu0 0.0
  %473 = vmatprep.subr.mxu0 0.0
  %474 = vmatpush2.msra.mxu0 0.0
  %475 = vmatprep.subr.mxu0 0.0
  %476 = vmatpush2.msra.mxu0 0.0
  %477 = vmatprep.subr.mxu0 0.0
  %478 = vmatpush2.msra.mxu0 0.0
  %479 = vmatprep.subr.mxu0 0.0
  %480 = vmatpush2.msra.mxu0 0.0
  %481 = vmatprep.subr.mxu0 0.0
  %482 = vmatpush2.msra.mxu0 0.0
  %483 = vmatprep.subr.mxu0 0.0
  %484 = vmatpush2.msra.mxu0 0.0
  %485 = vmatprep.subr.mxu0 0.0
  %486 = vmatpush2.msra.mxu0 0.0
  %487 = vmatprep.subr.mxu0 0.0
  %488 = vmatpush2.msra.mxu0 0.0
  %489 = vmatprep.subr.mxu0 0.0
  %490 = vmatpush2.msra.mxu0 0.0
  %491 = vmatprep.subr.mxu0 0.0
  %492 = vmatpush2.msra.mxu0 0.0
  %493 = vmatprep.mubr.f32.mxu0 0.0
  %494 = vmatmul.mubr.f32.gmra.mxu0 %v427
  %v495 = vpop.f32.mrf.mxu0
  %v496 = vadd.f32 0.0, %v495
  %v497 = vpop.f32.mrf.mxu0
  %498 = vdwg.mxu0
  %499 = vmatprep.subr.mxu0 0.0
  %500 = vmatpush1.msra.mxu0 0.0
  %501 = vmatprep.subr.mxu0 0.0
  %502 = vmatpush1.msra.mxu0 0.0
  %503 = vmatprep.subr.mxu0 0.0
  %504 = vmatpush1.msra.mxu0 0.0
  %505 = vmatprep.subr.mxu0 0.0
  %506 = vmatpush1.msra.mxu0 0.0
  %507 = vmatprep.subr.mxu0 0.0
  %508 = vmatpush1.msra.mxu0 0.0
  %509 = vmatprep.subr.mxu0 0.0
  %510 = vmatpush1.msra.mxu0 0.0
  %511 = vmatprep.subr.mxu0 0.0
  %512 = vmatpush1.msra.mxu0 0.0
  %513 = vmatprep.subr.mxu0 0.0
  %514 = vmatpush1.msra.mxu0 0.0
  %515 = vmatprep.subr.mxu0 0.0
  %516 = vmatpush1.msra.mxu0 0.0
  %517 = vmatprep.subr.mxu0 0.0
  %518 = vmatpush1.msra.mxu0 0.0
  %519 = vmatprep.subr.mxu0 0.0
  %520 = vmatpush1.msra.mxu0 0.0
  %521 = vmatprep.subr.mxu0 0.0
  %522 = vmatpush1.msra.mxu0 0.0
  %523 = vmatprep.subr.mxu0 0.0
  %524 = vmatpush1.msra.mxu0 %v43
  %525 = vmatprep.subr.mxu0 0.0
  %526 = vmatpush1.msra.mxu0 %v42
  %527 = vmatprep.subr.mxu0 0.0
  %528 = vmatpush1.msra.mxu0 %v41
  %529 = vmatprep.subr.mxu0 0.0
  %530 = vmatpush1.msra.mxu0 %v40
  %531 = vmatprep.subr.mxu0 0.0
  %532 = vmatpush2.msra.mxu0 0.0
  %533 = vmatprep.subr.mxu0 0.0
  %534 = vmatpush2.msra.mxu0 0.0
  %535 = vmatprep.subr.mxu0 0.0
  %536 = vmatpush2.msra.mxu0 0.0
  %537 = vmatprep.subr.mxu0 0.0
  %538 = vmatpush2.msra.mxu0 0.0
  %539 = vmatprep.subr.mxu0 0.0
  %540 = vmatpush2.msra.mxu0 0.0
  %541 = vmatprep.subr.mxu0 0.0
  %542 = vmatpush2.msra.mxu0 0.0
  %543 = vmatprep.subr.mxu0 0.0
  %544 = vmatpush2.msra.mxu0 0.0
  %545 = vmatprep.subr.mxu0 0.0
  %546 = vmatpush2.msra.mxu0 0.0
  %547 = vmatprep.subr.mxu0 0.0
  %548 = vmatpush2.msra.mxu0 0.0
  %549 = vmatprep.subr.mxu0 0.0
  %550 = vmatpush2.msra.mxu0 0.0
  %551 = vmatprep.subr.mxu0 0.0
  %552 = vmatpush2.msra.mxu0 0.0
  %553 = vmatprep.subr.mxu0 0.0
  %554 = vmatpush2.msra.mxu0 0.0
  %555 = vmatprep.subr.mxu0 0.0
  %556 = vmatpush2.msra.mxu0 0.0
  %557 = vmatprep.subr.mxu0 0.0
  %558 = vmatpush2.msra.mxu0 0.0
  %559 = vmatprep.subr.mxu0 0.0
  %560 = vmatpush2.msra.mxu0 0.0
  %561 = vmatprep.subr.mxu0 0.0
  %562 = vmatpush2.msra.mxu0 0.0
  %563 = vmatprep.mubr.f32.mxu0 0.0
  %564 = vmatmul.mubr.f32.gmra.mxu0 %v239
  %v565 = vpop.f32.mrf.mxu0
  %v566 = vadd.f32 0.0, %v565
  %v567 = vpop.f32.mrf.mxu0
  %568 = vdwg.mxu0
  %v569 = vadd.f32 %v496, %v566
  %v570 = vadd.f32 %v569, %v203
  %v571 = vxor.u32 %v570, 2147483648
  %v572 = vmul.f32 %v571, 1.442695
  %v573 = vpow.pop %v572
  %v574 = vadd.f32 %v573, 1.0
  %v575 = vrcp.pop %v574
  %v576 = vmul.f32 1.0, %v575
  %v577 = vadd.f32 %v496, %v203
  %v578 = vadd.f32 %v566, %v214
  %580 = vrot.lane.b32.xlu0 %v578, 64
  %v581 = vpop.permute.xlu0 %580
  %v583 = vmul.f32 %v576, %v581
  %585 = vrot.lane.b32.xlu0 %v583, 64
  %v586 = vpop.permute.xlu0 %585
  %v588 = vadd.f32 %v577, %v586
  %v589 = vtanh.pop %v588
  %v590 = vsub.f32 1.0, %v576
  %592 = vrot.lane.b32.xlu0 %v589, 96
  %v593 = vpop.permute.xlu0 %592
  %v595 = vmul.f32 %v590, %v593
  %v596 = vmul.f32 %v576, %v235
  %v597 = vadd.f32 %v595, %v596
  %599 = vrot.lane.b32.xlu0 %v597, 96
  %v600 = vpop.permute.xlu0 %599
  %v601 = vsel %vm125, %v600, 0
  %603 = vmatprep.subr.mxu0 0.0
  %604 = vmatpush1.msra.mxu0 0.0
  %605 = vmatprep.subr.mxu0 0.0
  %606 = vmatpush1.msra.mxu0 0.0
  %607 = vmatprep.subr.mxu0 0.0
  %608 = vmatpush1.msra.mxu0 0.0
  %609 = vmatprep.subr.mxu0 0.0
  %610 = vmatpush1.msra.mxu0 0.0
  %611 = vmatprep.subr.mxu0 0.0
  %612 = vmatpush1.msra.mxu0 0.0
  %613 = vmatprep.subr.mxu0 0.0
  %614 = vmatpush1.msra.mxu0 0.0
  %615 = vmatprep.subr.mxu0 0.0
  %616 = vmatpush1.msra.mxu0 0.0
  %617 = vmatprep.subr.mxu0 0.0
  %618 = vmatpush1.msra.mxu0 0.0
  %619 = vmatprep.subr.mxu0 0.0
  %620 = vmatpush1.msra.mxu0 0.0
  %621 = vmatprep.subr.mxu0 0.0
  %622 = vmatpush1.msra.mxu0 0.0
  %623 = vmatprep.subr.mxu0 0.0
  %624 = vmatpush1.msra.mxu0 0.0
  %625 = vmatprep.subr.mxu0 0.0
  %626 = vmatpush1.msra.mxu0 0.0
  %627 = vmatprep.subr.mxu0 0.0
  %628 = vmatpush1.msra.mxu0 %v39
  %629 = vmatprep.subr.mxu0 0.0
  %630 = vmatpush1.msra.mxu0 %v38
  %631 = vmatprep.subr.mxu0 0.0
  %632 = vmatpush1.msra.mxu0 %v37
  %633 = vmatprep.subr.mxu0 0.0
  %634 = vmatpush1.msra.mxu0 %v36
  %635 = vmatprep.subr.mxu0 0.0
  %636 = vmatpush2.msra.mxu0 0.0
  %637 = vmatprep.subr.mxu0 0.0
  %638 = vmatpush2.msra.mxu0 0.0
  %639 = vmatprep.subr.mxu0 0.0
  %640 = vmatpush2.msra.mxu0 0.0
  %641 = vmatprep.subr.mxu0 0.0
  %642 = vmatpush2.msra.mxu0 0.0
  %643 = vmatprep.subr.mxu0 0.0
  %644 = vmatpush2.msra.mxu0 0.0
  %645 = vmatprep.subr.mxu0 0.0
  %646 = vmatpush2.msra.mxu0 0.0
  %647 = vmatprep.subr.mxu0 0.0
  %648 = vmatpush2.msra.mxu0 0.0
  %649 = vmatprep.subr.mxu0 0.0
  %650 = vmatpush2.msra.mxu0 0.0
  %651 = vmatprep.subr.mxu0 0.0
  %652 = vmatpush2.msra.mxu0 0.0
  %653 = vmatprep.subr.mxu0 0.0
  %654 = vmatpush2.msra.mxu0 0.0
  %655 = vmatprep.subr.mxu0 0.0
  %656 = vmatpush2.msra.mxu0 0.0
  %657 = vmatprep.subr.mxu0 0.0
  %658 = vmatpush2.msra.mxu0 0.0
  %659 = vmatprep.subr.mxu0 0.0
  %660 = vmatpush2.msra.mxu0 0.0
  %661 = vmatprep.subr.mxu0 0.0
  %662 = vmatpush2.msra.mxu0 0.0
  %663 = vmatprep.subr.mxu0 0.0
  %664 = vmatpush2.msra.mxu0 0.0
  %665 = vmatprep.subr.mxu0 0.0
  %666 = vmatpush2.msra.mxu0 0.0
  %667 = vmatprep.mubr.f32.mxu0 0.0
  %668 = vmatmul.mubr.f32.gmra.mxu0 %v601
  %v669 = vpop.f32.mrf.mxu0
  %v670 = vadd.f32 0.0, %v669
  %v671 = vpop.f32.mrf.mxu0
  %672 = vdwg.mxu0
  %v673 = vsel %vm125, %v420, 0
  %675 = vmatprep.subr.mxu0 0.0
  %676 = vmatpush1.msra.mxu0 0.0
  %677 = vmatprep.subr.mxu0 0.0
  %678 = vmatpush1.msra.mxu0 0.0
  %679 = vmatprep.subr.mxu0 0.0
  %680 = vmatpush1.msra.mxu0 0.0
  %681 = vmatprep.subr.mxu0 0.0
  %682 = vmatpush1.msra.mxu0 0.0
  %683 = vmatprep.subr.mxu0 0.0
  %684 = vmatpush1.msra.mxu0 0.0
  %685 = vmatprep.subr.mxu0 0.0
  %686 = vmatpush1.msra.mxu0 0.0
  %687 = vmatprep.subr.mxu0 0.0
  %688 = vmatpush1.msra.mxu0 0.0
  %689 = vmatprep.subr.mxu0 0.0
  %690 = vmatpush1.msra.mxu0 0.0
  %691 = vmatprep.subr.mxu0 0.0
  %692 = vmatpush1.msra.mxu0 0.0
  %693 = vmatprep.subr.mxu0 0.0
  %694 = vmatpush1.msra.mxu0 0.0
  %695 = vmatprep.subr.mxu0 0.0
  %696 = vmatpush1.msra.mxu0 0.0
  %697 = vmatprep.subr.mxu0 0.0
  %698 = vmatpush1.msra.mxu0 0.0
  %699 = vmatprep.subr.mxu0 0.0
  %700 = vmatpush1.msra.mxu0 %v47
  %701 = vmatprep.subr.mxu0 0.0
  %702 = vmatpush1.msra.mxu0 %v46
  %703 = vmatprep.subr.mxu0 0.0
  %704 = vmatpush1.msra.mxu0 %v45
  %705 = vmatprep.subr.mxu0 0.0
  %706 = vmatpush1.msra.mxu0 %v44
  %707 = vmatprep.subr.mxu0 0.0
  %708 = vmatpush2.msra.mxu0 0.0
  %709 = vmatprep.subr.mxu0 0.0
  %710 = vmatpush2.msra.mxu0 0.0
  %711 = vmatprep.subr.mxu0 0.0
  %712 = vmatpush2.msra.mxu0 0.0
  %713 = vmatprep.subr.mxu0 0.0
  %714 = vmatpush2.msra.mxu0 0.0
  %715 = vmatprep.subr.mxu0 0.0
  %716 = vmatpush2.msra.mxu0 0.0
  %717 = vmatprep.subr.mxu0 0.0
  %718 = vmatpush2.msra.mxu0 0.0
  %719 = vmatprep.subr.mxu0 0.0
  %720 = vmatpush2.msra.mxu0 0.0
  %721 = vmatprep.subr.mxu0 0.0
  %722 = vmatpush2.msra.mxu0 0.0
  %723 = vmatprep.subr.mxu0 0.0
  %724 = vmatpush2.msra.mxu0 0.0
  %725 = vmatprep.subr.mxu0 0.0
  %726 = vmatpush2.msra.mxu0 0.0
  %727 = vmatprep.subr.mxu0 0.0
  %728 = vmatpush2.msra.mxu0 0.0
  %729 = vmatprep.subr.mxu0 0.0
  %730 = vmatpush2.msra.mxu0 0.0
  %731 = vmatprep.subr.mxu0 0.0
  %732 = vmatpush2.msra.mxu0 0.0
  %733 = vmatprep.subr.mxu0 0.0
  %734 = vmatpush2.msra.mxu0 0.0
  %735 = vmatprep.subr.mxu0 0.0
  %736 = vmatpush2.msra.mxu0 0.0
  %737 = vmatprep.subr.mxu0 0.0
  %738 = vmatpush2.msra.mxu0 0.0
  %739 = vmatprep.mubr.f32.mxu0 0.0
  %740 = vmatmul.mubr.f32.gmra.mxu0 %v673
  %v741 = vpop.f32.mrf.mxu0
  %v742 = vadd.f32 0.0, %v741
  %v743 = vpop.f32.mrf.mxu0
  %744 = vdwg.mxu0
  %v745 = vadd.f32 %v670, %v742
  %v746 = vadd.f32 %v745, %v385
  %v747 = vxor.u32 %v746, 2147483648
  %v748 = vmul.f32 %v747, 1.442695
  %v749 = vpow.pop %v748
  %v750 = vadd.f32 %v749, 1.0
  %v751 = vrcp.pop %v750
  %v752 = vmul.f32 1.0, %v751
  %v753 = vadd.f32 %v670, %v385
  %v754 = vadd.f32 %v742, %v396
  %756 = vrot.lane.b32.xlu0 %v754, 64
  %v757 = vpop.permute.xlu0 %756
  %v759 = vmul.f32 %v752, %v757
  %761 = vrot.lane.b32.xlu0 %v759, 64
  %v762 = vpop.permute.xlu0 %761
  %v764 = vadd.f32 %v753, %v762
  %v765 = vtanh.pop %v764
  %v766 = vsub.f32 1.0, %v752
  %768 = vrot.lane.b32.xlu0 %v765, 96
  %v769 = vpop.permute.xlu0 %768
  %v771 = vmul.f32 %v766, %v769
  %v772 = vmul.f32 %v752, %v417
  %v773 = vadd.f32 %v771, %v772
  %775 = vrot.lane.b32.xlu0 %v773, 96
  %v776 = vpop.permute.xlu0 %775
  %778 = vst.msk [vmem:[#allocation2 + $0x4] sm:$0xf] %vm422, %v776
  %s779 = scalar_lea.vmem %s0, 8
  %v780 = vld [vmem:[%s779] sm:$0xf]
  %v782 = vsel %vm51, %v780, 0
  %784 = vmatprep.subr.mxu0 0.0
  %785 = vmatpush1.msra.mxu0 0.0
  %786 = vmatprep.subr.mxu0 0.0
  %787 = vmatpush1.msra.mxu0 0.0
  %788 = vmatprep.subr.mxu0 0.0
  %789 = vmatpush1.msra.mxu0 0.0
  %790 = vmatprep.subr.mxu0 0.0
  %791 = vmatpush1.msra.mxu0 0.0
  %792 = vmatprep.subr.mxu0 0.0
  %793 = vmatpush1.msra.mxu0 0.0
  %794 = vmatprep.subr.mxu0 0.0
  %795 = vmatpush1.msra.mxu0 0.0
  %796 = vmatprep.subr.mxu0 0.0
  %797 = vmatpush1.msra.mxu0 0.0
  %798 = vmatprep.subr.mxu0 0.0
  %799 = vmatpush1.msra.mxu0 0.0
  %800 = vmatprep.subr.mxu0 0.0
  %801 = vmatpush1.msra.mxu0 0.0
  %802 = vmatprep.subr.mxu0 0.0
  %803 = vmatpush1.msra.mxu0 0.0
  %804 = vmatprep.subr.mxu0 0.0
  %805 = vmatpush1.msra.mxu0 0.0
  %806 = vmatprep.subr.mxu0 0.0
  %807 = vmatpush1.msra.mxu0 0.0
  %808 = vmatprep.subr.mxu0 0.0
  %809 = vmatpush1.msra.mxu0 0.0
  %810 = vmatprep.subr.mxu0 0.0
  %811 = vmatpush1.msra.mxu0 0.0
  %812 = vmatprep.subr.mxu0 0.0
  %813 = vmatpush1.msra.mxu0 %v35
  %814 = vmatprep.subr.mxu0 0.0
  %815 = vmatpush1.msra.mxu0 %v34
  %816 = vmatprep.subr.mxu0 0.0
  %817 = vmatpush2.msra.mxu0 0.0
  %818 = vmatprep.subr.mxu0 0.0
  %819 = vmatpush2.msra.mxu0 0.0
  %820 = vmatprep.subr.mxu0 0.0
  %821 = vmatpush2.msra.mxu0 0.0
  %822 = vmatprep.subr.mxu0 0.0
  %823 = vmatpush2.msra.mxu0 0.0
  %824 = vmatprep.subr.mxu0 0.0
  %825 = vmatpush2.msra.mxu0 0.0
  %826 = vmatprep.subr.mxu0 0.0
  %827 = vmatpush2.msra.mxu0 0.0
  %828 = vmatprep.subr.mxu0 0.0
  %829 = vmatpush2.msra.mxu0 0.0
  %830 = vmatprep.subr.mxu0 0.0
  %831 = vmatpush2.msra.mxu0 0.0
  %832 = vmatprep.subr.mxu0 0.0
  %833 = vmatpush2.msra.mxu0 0.0
  %834 = vmatprep.subr.mxu0 0.0
  %835 = vmatpush2.msra.mxu0 0.0
  %836 = vmatprep.subr.mxu0 0.0
  %837 = vmatpush2.msra.mxu0 0.0
  %838 = vmatprep.subr.mxu0 0.0
  %839 = vmatpush2.msra.mxu0 0.0
  %840 = vmatprep.subr.mxu0 0.0
  %841 = vmatpush2.msra.mxu0 0.0
  %842 = vmatprep.subr.mxu0 0.0
  %843 = vmatpush2.msra.mxu0 0.0
  %844 = vmatprep.subr.mxu0 0.0
  %845 = vmatpush2.msra.mxu0 0.0
  %846 = vmatprep.subr.mxu0 0.0
  %847 = vmatpush2.msra.mxu0 0.0
  %848 = vmatprep.mubr.f32.mxu0 0.0
  %849 = vmatmul.mubr.f32.gmra.mxu0 %v782
  %v850 = vpop.f32.mrf.mxu0
  %v851 = vadd.f32 0.0, %v850
  %v852 = vpop.f32.mrf.mxu0
  %853 = vdwg.mxu0
  %854 = vmatprep.subr.mxu0 0.0
  %855 = vmatpush1.msra.mxu0 0.0
  %856 = vmatprep.subr.mxu0 0.0
  %857 = vmatpush1.msra.mxu0 0.0
  %858 = vmatprep.subr.mxu0 0.0
  %859 = vmatpush1.msra.mxu0 0.0
  %860 = vmatprep.subr.mxu0 0.0
  %861 = vmatpush1.msra.mxu0 0.0
  %862 = vmatprep.subr.mxu0 0.0
  %863 = vmatpush1.msra.mxu0 0.0
  %864 = vmatprep.subr.mxu0 0.0
  %865 = vmatpush1.msra.mxu0 0.0
  %866 = vmatprep.subr.mxu0 0.0
  %867 = vmatpush1.msra.mxu0 0.0
  %868 = vmatprep.subr.mxu0 0.0
  %869 = vmatpush1.msra.mxu0 0.0
  %870 = vmatprep.subr.mxu0 0.0
  %871 = vmatpush1.msra.mxu0 0.0
  %872 = vmatprep.subr.mxu0 0.0
  %873 = vmatpush1.msra.mxu0 0.0
  %874 = vmatprep.subr.mxu0 0.0
  %875 = vmatpush1.msra.mxu0 0.0
  %876 = vmatprep.subr.mxu0 0.0
  %877 = vmatpush1.msra.mxu0 0.0
  %878 = vmatprep.subr.mxu0 0.0
  %879 = vmatpush1.msra.mxu0 %v43
  %880 = vmatprep.subr.mxu0 0.0
  %881 = vmatpush1.msra.mxu0 %v42
  %882 = vmatprep.subr.mxu0 0.0
  %883 = vmatpush1.msra.mxu0 %v41
  %884 = vmatprep.subr.mxu0 0.0
  %885 = vmatpush1.msra.mxu0 %v40
  %886 = vmatprep.subr.mxu0 0.0
  %887 = vmatpush2.msra.mxu0 0.0
  %888 = vmatprep.subr.mxu0 0.0
  %889 = vmatpush2.msra.mxu0 0.0
  %890 = vmatprep.subr.mxu0 0.0
  %891 = vmatpush2.msra.mxu0 0.0
  %892 = vmatprep.subr.mxu0 0.0
  %893 = vmatpush2.msra.mxu0 0.0
  %894 = vmatprep.subr.mxu0 0.0
  %895 = vmatpush2.msra.mxu0 0.0
  %896 = vmatprep.subr.mxu0 0.0
  %897 = vmatpush2.msra.mxu0 0.0
  %898 = vmatprep.subr.mxu0 0.0
  %899 = vmatpush2.msra.mxu0 0.0
  %900 = vmatprep.subr.mxu0 0.0
  %901 = vmatpush2.msra.mxu0 0.0
  %902 = vmatprep.subr.mxu0 0.0
  %903 = vmatpush2.msra.mxu0 0.0
  %904 = vmatprep.subr.mxu0 0.0
  %905 = vmatpush2.msra.mxu0 0.0
  %906 = vmatprep.subr.mxu0 0.0
  %907 = vmatpush2.msra.mxu0 0.0
  %908 = vmatprep.subr.mxu0 0.0
  %909 = vmatpush2.msra.mxu0 0.0
  %910 = vmatprep.subr.mxu0 0.0
  %911 = vmatpush2.msra.mxu0 0.0
  %912 = vmatprep.subr.mxu0 0.0
  %913 = vmatpush2.msra.mxu0 0.0
  %914 = vmatprep.subr.mxu0 0.0
  %915 = vmatpush2.msra.mxu0 0.0
  %916 = vmatprep.subr.mxu0 0.0
  %917 = vmatpush2.msra.mxu0 0.0
  %918 = vmatprep.mubr.f32.mxu0 0.0
  %919 = vmatmul.mubr.f32.gmra.mxu0 %v601
  %v920 = vpop.f32.mrf.mxu0
  %v921 = vadd.f32 0.0, %v920
  %v922 = vpop.f32.mrf.mxu0
  %923 = vdwg.mxu0
  %v924 = vadd.f32 %v851, %v921
  %v925 = vadd.f32 %v924, %v203
  %v926 = vxor.u32 %v925, 2147483648
  %v927 = vmul.f32 %v926, 1.442695
  %v928 = vpow.pop %v927
  %v929 = vadd.f32 %v928, 1.0
  %v930 = vrcp.pop %v929
  %v931 = vmul.f32 1.0, %v930
  %v932 = vadd.f32 %v851, %v203
  %v933 = vadd.f32 %v921, %v214
  %935 = vrot.lane.b32.xlu0 %v933, 64
  %v936 = vpop.permute.xlu0 %935
  %v938 = vmul.f32 %v931, %v936
  %940 = vrot.lane.b32.xlu0 %v938, 64
  %v941 = vpop.permute.xlu0 %940
  %v943 = vadd.f32 %v932, %v941
  %v944 = vtanh.pop %v943
  %v945 = vsub.f32 1.0, %v931
  %947 = vrot.lane.b32.xlu0 %v944, 96
  %v948 = vpop.permute.xlu0 %947
  %v950 = vmul.f32 %v945, %v948
  %v951 = vmul.f32 %v931, %v597
  %v952 = vadd.f32 %v950, %v951
  %954 = vrot.lane.b32.xlu0 %v952, 96
  %v955 = vpop.permute.xlu0 %954
  %v956 = vsel %vm125, %v955, 0
  %958 = vmatprep.subr.mxu0 0.0
  %959 = vmatpush1.msra.mxu0 0.0
  %960 = vmatprep.subr.mxu0 0.0
  %961 = vmatpush1.msra.mxu0 0.0
  %962 = vmatprep.subr.mxu0 0.0
  %963 = vmatpush1.msra.mxu0 0.0
  %964 = vmatprep.subr.mxu0 0.0
  %965 = vmatpush1.msra.mxu0 0.0
  %966 = vmatprep.subr.mxu0 0.0
  %967 = vmatpush1.msra.mxu0 0.0
  %968 = vmatprep.subr.mxu0 0.0
  %969 = vmatpush1.msra.mxu0 0.0
  %970 = vmatprep.subr.mxu0 0.0
  %971 = vmatpush1.msra.mxu0 0.0
  %972 = vmatprep.subr.mxu0 0.0
  %973 = vmatpush1.msra.mxu0 0.0
  %974 = vmatprep.subr.mxu0 0.0
  %975 = vmatpush1.msra.mxu0 0.0
  %976 = vmatprep.subr.mxu0 0.0
  %977 = vmatpush1.msra.mxu0 0.0
  %978 = vmatprep.subr.mxu0 0.0
  %979 = vmatpush1.msra.mxu0 0.0
  %980 = vmatprep.subr.mxu0 0.0
  %981 = vmatpush1.msra.mxu0 0.0
  %982 = vmatprep.subr.mxu0 0.0
  %983 = vmatpush1.msra.mxu0 %v39
  %984 = vmatprep.subr.mxu0 0.0
  %985 = vmatpush1.msra.mxu0 %v38
  %986 = vmatprep.subr.mxu0 0.0
  %987 = vmatpush1.msra.mxu0 %v37
  %988 = vmatprep.subr.mxu0 0.0
  %989 = vmatpush1.msra.mxu0 %v36
  %990 = vmatprep.subr.mxu0 0.0
  %991 = vmatpush2.msra.mxu0 0.0
  %992 = vmatprep.subr.mxu0 0.0
  %993 = vmatpush2.msra.mxu0 0.0
  %994 = vmatprep.subr.mxu0 0.0
  %995 = vmatpush2.msra.mxu0 0.0
  %996 = vmatprep.subr.mxu0 0.0
  %997 = vmatpush2.msra.mxu0 0.0
  %998 = vmatprep.subr.mxu0 0.0
  %999 = vmatpush2.msra.mxu0 0.0
  %1000 = vmatprep.subr.mxu0 0.0
  %1001 = vmatpush2.msra.mxu0 0.0
  %1002 = vmatprep.subr.mxu0 0.0
  %1003 = vmatpush2.msra.mxu0 0.0
  %1004 = vmatprep.subr.mxu0 0.0
  %1005 = vmatpush2.msra.mxu0 0.0
  %1006 = vmatprep.subr.mxu0 0.0
  %1007 = vmatpush2.msra.mxu0 0.0
  %1008 = vmatprep.subr.mxu0 0.0
  %1009 = vmatpush2.msra.mxu0 0.0
  %1010 = vmatprep.subr.mxu0 0.0
  %1011 = vmatpush2.msra.mxu0 0.0
  %1012 = vmatprep.subr.mxu0 0.0
  %1013 = vmatpush2.msra.mxu0 0.0
  %1014 = vmatprep.subr.mxu0 0.0
  %1015 = vmatpush2.msra.mxu0 0.0
  %1016 = vmatprep.subr.mxu0 0.0
  %1017 = vmatpush2.msra.mxu0 0.0
  %1018 = vmatprep.subr.mxu0 0.0
  %1019 = vmatpush2.msra.mxu0 0.0
  %1020 = vmatprep.subr.mxu0 0.0
  %1021 = vmatpush2.msra.mxu0 0.0
  %1022 = vmatprep.mubr.f32.mxu0 0.0
  %1023 = vmatmul.mubr.f32.gmra.mxu0 %v956
  %v1024 = vpop.f32.mrf.mxu0
  %v1025 = vadd.f32 0.0, %v1024
  %v1026 = vpop.f32.mrf.mxu0
  %1027 = vdwg.mxu0
  %v1028 = vsel %vm125, %v776, 0
  %1030 = vmatprep.subr.mxu0 0.0
  %1031 = vmatpush1.msra.mxu0 0.0
  %1032 = vmatprep.subr.mxu0 0.0
  %1033 = vmatpush1.msra.mxu0 0.0
  %1034 = vmatprep.subr.mxu0 0.0
  %1035 = vmatpush1.msra.mxu0 0.0
  %1036 = vmatprep.subr.mxu0 0.0
  %1037 = vmatpush1.msra.mxu0 0.0
  %1038 = vmatprep.subr.mxu0 0.0
  %1039 = vmatpush1.msra.mxu0 0.0
  %1040 = vmatprep.subr.mxu0 0.0
  %1041 = vmatpush1.msra.mxu0 0.0
  %1042 = vmatprep.subr.mxu0 0.0
  %1043 = vmatpush1.msra.mxu0 0.0
  %1044 = vmatprep.subr.mxu0 0.0
  %1045 = vmatpush1.msra.mxu0 0.0
  %1046 = vmatprep.subr.mxu0 0.0
  %1047 = vmatpush1.msra.mxu0 0.0
  %1048 = vmatprep.subr.mxu0 0.0
  %1049 = vmatpush1.msra.mxu0 0.0
  %1050 = vmatprep.subr.mxu0 0.0
  %1051 = vmatpush1.msra.mxu0 0.0
  %1052 = vmatprep.subr.mxu0 0.0
  %1053 = vmatpush1.msra.mxu0 0.0
  %1054 = vmatprep.subr.mxu0 0.0
  %1055 = vmatpush1.msra.mxu0 %v47
  %1056 = vmatprep.subr.mxu0 0.0
  %1057 = vmatpush1.msra.mxu0 %v46
  %1058 = vmatprep.subr.mxu0 0.0
  %1059 = vmatpush1.msra.mxu0 %v45
  %1060 = vmatprep.subr.mxu0 0.0
  %1061 = vmatpush1.msra.mxu0 %v44
  %1062 = vmatprep.subr.mxu0 0.0
  %1063 = vmatpush2.msra.mxu0 0.0
  %1064 = vmatprep.subr.mxu0 0.0
  %1065 = vmatpush2.msra.mxu0 0.0
  %1066 = vmatprep.subr.mxu0 0.0
  %1067 = vmatpush2.msra.mxu0 0.0
  %1068 = vmatprep.subr.mxu0 0.0
  %1069 = vmatpush2.msra.mxu0 0.0
  %1070 = vmatprep.subr.mxu0 0.0
  %1071 = vmatpush2.msra.mxu0 0.0
  %1072 = vmatprep.subr.mxu0 0.0
  %1073 = vmatpush2.msra.mxu0 0.0
  %1074 = vmatprep.subr.mxu0 0.0
  %1075 = vmatpush2.msra.mxu0 0.0
  %1076 = vmatprep.subr.mxu0 0.0
  %1077 = vmatpush2.msra.mxu0 0.0
  %1078 = vmatprep.subr.mxu0 0.0
  %1079 = vmatpush2.msra.mxu0 0.0
  %1080 = vmatprep.subr.mxu0 0.0
  %1081 = vmatpush2.msra.mxu0 0.0
  %1082 = vmatprep.subr.mxu0 0.0
  %1083 = vmatpush2.msra.mxu0 0.0
  %1084 = vmatprep.subr.mxu0 0.0
  %1085 = vmatpush2.msra.mxu0 0.0
  %1086 = vmatprep.subr.mxu0 0.0
  %1087 = vmatpush2.msra.mxu0 0.0
  %1088 = vmatprep.subr.mxu0 0.0
  %1089 = vmatpush2.msra.mxu0 0.0
  %1090 = vmatprep.subr.mxu0 0.0
  %1091 = vmatpush2.msra.mxu0 0.0
  %1092 = vmatprep.subr.mxu0 0.0
  %1093 = vmatpush2.msra.mxu0 0.0
  %1094 = vmatprep.mubr.f32.mxu0 0.0
  %1095 = vmatmul.mubr.f32.gmra.mxu0 %v1028
  %v1096 = vpop.f32.mrf.mxu0
  %v1097 = vadd.f32 0.0, %v1096
  %v1098 = vpop.f32.mrf.mxu0
  %1099 = vdwg.mxu0
  %v1100 = vadd.f32 %v1025, %v1097
  %v1101 = vadd.f32 %v1100, %v385
  %v1102 = vxor.u32 %v1101, 2147483648
  %v1103 = vmul.f32 %v1102, 1.442695
  %v1104 = vpow.pop %v1103
  %v1105 = vadd.f32 %v1104, 1.0
  %v1106 = vrcp.pop %v1105
  %v1107 = vmul.f32 1.0, %v1106
  %v1108 = vadd.f32 %v1025, %v385
  %v1109 = vadd.f32 %v1097, %v396
  %1111 = vrot.lane.b32.xlu0 %v1109, 64
  %v1112 = vpop.permute.xlu0 %1111
  %v1114 = vmul.f32 %v1107, %v1112
  %1116 = vrot.lane.b32.xlu0 %v1114, 64
  %v1117 = vpop.permute.xlu0 %1116
  %v1119 = vadd.f32 %v1108, %v1117
  %v1120 = vtanh.pop %v1119
  %v1121 = vsub.f32 1.0, %v1107
  %1123 = vrot.lane.b32.xlu0 %v1120, 96
  %v1124 = vpop.permute.xlu0 %1123
  %v1126 = vmul.f32 %v1121, %v1124
  %v1127 = vmul.f32 %v1107, %v773
  %v1128 = vadd.f32 %v1126, %v1127
  %1130 = vrot.lane.b32.xlu0 %v1128, 96
  %v1131 = vpop.permute.xlu0 %1130
  %1133 = vst.msk [vmem:[#allocation2 + $0x8] sm:$0xf] %vm422, %v1131
  %s1134 = scalar_lea.vmem %s0, 12
  %v1135 = vld [vmem:[%s1134] sm:$0xf]
  %v1137 = vsel %vm51, %v1135, 0
  %1139 = vmatprep.subr.mxu0 0.0
  %1140 = vmatpush1.msra.mxu0 0.0
  %1141 = vmatprep.subr.mxu0 0.0
  %1142 = vmatpush1.msra.mxu0 0.0
  %1143 = vmatprep.subr.mxu0 0.0
  %1144 = vmatpush1.msra.mxu0 0.0
  %1145 = vmatprep.subr.mxu0 0.0
  %1146 = vmatpush1.msra.mxu0 0.0
  %1147 = vmatprep.subr.mxu0 0.0
  %1148 = vmatpush1.msra.mxu0 0.0
  %1149 = vmatprep.subr.mxu0 0.0
  %1150 = vmatpush1.msra.mxu0 0.0
  %1151 = vmatprep.subr.mxu0 0.0
  %1152 = vmatpush1.msra.mxu0 0.0
  %1153 = vmatprep.subr.mxu0 0.0
  %1154 = vmatpush1.msra.mxu0 0.0
  %1155 = vmatprep.subr.mxu0 0.0
  %1156 = vmatpush1.msra.mxu0 0.0
  %1157 = vmatprep.subr.mxu0 0.0
  %1158 = vmatpush1.msra.mxu0 0.0
  %1159 = vmatprep.subr.mxu0 0.0
  %1160 = vmatpush1.msra.mxu0 0.0
  %1161 = vmatprep.subr.mxu0 0.0
  %1162 = vmatpush1.msra.mxu0 0.0
  %1163 = vmatprep.subr.mxu0 0.0
  %1164 = vmatpush1.msra.mxu0 0.0
  %1165 = vmatprep.subr.mxu0 0.0
  %1166 = vmatpush1.msra.mxu0 0.0
  %1167 = vmatprep.subr.mxu0 0.0
  %1168 = vmatpush1.msra.mxu0 %v35
  %1169 = vmatprep.subr.mxu0 0.0
  %1170 = vmatpush1.msra.mxu0 %v34
  %1171 = vmatprep.subr.mxu0 0.0
  %1172 = vmatpush2.msra.mxu0 0.0
  %1173 = vmatprep.subr.mxu0 0.0
  %1174 = vmatpush2.msra.mxu0 0.0
  %1175 = vmatprep.subr.mxu0 0.0
  %1176 = vmatpush2.msra.mxu0 0.0
  %1177 = vmatprep.subr.mxu0 0.0
  %1178 = vmatpush2.msra.mxu0 0.0
  %1179 = vmatprep.subr.mxu0 0.0
  %1180 = vmatpush2.msra.mxu0 0.0
  %1181 = vmatprep.subr.mxu0 0.0
  %1182 = vmatpush2.msra.mxu0 0.0
  %1183 = vmatprep.subr.mxu0 0.0
  %1184 = vmatpush2.msra.mxu0 0.0
  %1185 = vmatprep.subr.mxu0 0.0
  %1186 = vmatpush2.msra.mxu0 0.0
  %1187 = vmatprep.subr.mxu0 0.0
  %1188 = vmatpush2.msra.mxu0 0.0
  %1189 = vmatprep.subr.mxu0 0.0
  %1190 = vmatpush2.msra.mxu0 0.0
  %1191 = vmatprep.subr.mxu0 0.0
  %1192 = vmatpush2.msra.mxu0 0.0
  %1193 = vmatprep.subr.mxu0 0.0
  %1194 = vmatpush2.msra.mxu0 0.0
  %1195 = vmatprep.subr.mxu0 0.0
  %1196 = vmatpush2.msra.mxu0 0.0
  %1197 = vmatprep.subr.mxu0 0.0
  %1198 = vmatpush2.msra.mxu0 0.0
  %1199 = vmatprep.subr.mxu0 0.0
  %1200 = vmatpush2.msra.mxu0 0.0
  %1201 = vmatprep.subr.mxu0 0.0
  %1202 = vmatpush2.msra.mxu0 0.0
  %1203 = vmatprep.mubr.f32.mxu0 0.0
  %1204 = vmatmul.mubr.f32.gmra.mxu0 %v1137
  %v1205 = vpop.f32.mrf.mxu0
  %v1206 = vadd.f32 0.0, %v1205
  %v1207 = vpop.f32.mrf.mxu0
  %1208 = vdwg.mxu0
  %1209 = vmatprep.subr.mxu0 0.0
  %1210 = vmatpush1.msra.mxu0 0.0
  %1211 = vmatprep.subr.mxu0 0.0
  %1212 = vmatpush1.msra.mxu0 0.0
  %1213 = vmatprep.subr.mxu0 0.0
  %1214 = vmatpush1.msra.mxu0 0.0
  %1215 = vmatprep.subr.mxu0 0.0
  %1216 = vmatpush1.msra.mxu0 0.0
  %1217 = vmatprep.subr.mxu0 0.0
  %1218 = vmatpush1.msra.mxu0 0.0
  %1219 = vmatprep.subr.mxu0 0.0
  %1220 = vmatpush1.msra.mxu0 0.0
  %1221 = vmatprep.subr.mxu0 0.0
  %1222 = vmatpush1.msra.mxu0 0.0
  %1223 = vmatprep.subr.mxu0 0.0
  %1224 = vmatpush1.msra.mxu0 0.0
  %1225 = vmatprep.subr.mxu0 0.0
  %1226 = vmatpush1.msra.mxu0 0.0
  %1227 = vmatprep.subr.mxu0 0.0
  %1228 = vmatpush1.msra.mxu0 0.0
  %1229 = vmatprep.subr.mxu0 0.0
  %1230 = vmatpush1.msra.mxu0 0.0
  %1231 = vmatprep.subr.mxu0 0.0
  %1232 = vmatpush1.msra.mxu0 0.0
  %1233 = vmatprep.subr.mxu0 0.0
  %1234 = vmatpush1.msra.mxu0 %v43
  %1235 = vmatprep.subr.mxu0 0.0
  %1236 = vmatpush1.msra.mxu0 %v42
  %1237 = vmatprep.subr.mxu0 0.0
  %1238 = vmatpush1.msra.mxu0 %v41
  %1239 = vmatprep.subr.mxu0 0.0
  %1240 = vmatpush1.msra.mxu0 %v40
  %1241 = vmatprep.subr.mxu0 0.0
  %1242 = vmatpush2.msra.mxu0 0.0
  %1243 = vmatprep.subr.mxu0 0.0
  %1244 = vmatpush2.msra.mxu0 0.0
  %1245 = vmatprep.subr.mxu0 0.0
  %1246 = vmatpush2.msra.mxu0 0.0
  %1247 = vmatprep.subr.mxu0 0.0
  %1248 = vmatpush2.msra.mxu0 0.0
  %1249 = vmatprep.subr.mxu0 0.0
  %1250 = vmatpush2.msra.mxu0 0.0
  %1251 = vmatprep.subr.mxu0 0.0
  %1252 = vmatpush2.msra.mxu0 0.0
  %1253 = vmatprep.subr.mxu0 0.0
  %1254 = vmatpush2.msra.mxu0 0.0
  %1255 = vmatprep.subr.mxu0 0.0
  %1256 = vmatpush2.msra.mxu0 0.0
  %1257 = vmatprep.subr.mxu0 0.0
  %1258 = vmatpush2.msra.mxu0 0.0
  %1259 = vmatprep.subr.mxu0 0.0
  %1260 = vmatpush2.msra.mxu0 0.0
  %1261 = vmatprep.subr.mxu0 0.0
  %1262 = vmatpush2.msra.mxu0 0.0
  %1263 = vmatprep.subr.mxu0 0.0
  %1264 = vmatpush2.msra.mxu0 0.0
  %1265 = vmatprep.subr.mxu0 0.0
  %1266 = vmatpush2.msra.mxu0 0.0
  %1267 = vmatprep.subr.mxu0 0.0
  %1268 = vmatpush2.msra.mxu0 0.0
  %1269 = vmatprep.subr.mxu0 0.0
  %1270 = vmatpush2.msra.mxu0 0.0
  %1271 = vmatprep.subr.mxu0 0.0
  %1272 = vmatpush2.msra.mxu0 0.0
  %1273 = vmatprep.mubr.f32.mxu0 0.0
  %1274 = vmatmul.mubr.f32.gmra.mxu0 %v956
  %v1275 = vpop.f32.mrf.mxu0
  %v1276 = vadd.f32 0.0, %v1275
  %v1277 = vpop.f32.mrf.mxu0
  %1278 = vdwg.mxu0
  %v1279 = vadd.f32 %v1206, %v1276
  %v1280 = vadd.f32 %v1279, %v203
  %v1281 = vxor.u32 %v1280, 2147483648
  %v1282 = vmul.f32 %v1281, 1.442695
  %v1283 = vpow.pop %v1282
  %v1284 = vadd.f32 %v1283, 1.0
  %v1285 = vrcp.pop %v1284
  %v1286 = vmul.f32 1.0, %v1285
  %v1287 = vadd.f32 %v1206, %v203
  %v1288 = vadd.f32 %v1276, %v214
  %1290 = vrot.lane.b32.xlu0 %v1288, 64
  %v1291 = vpop.permute.xlu0 %1290
  %v1293 = vmul.f32 %v1286, %v1291
  %1295 = vrot.lane.b32.xlu0 %v1293, 64
  %v1296 = vpop.permute.xlu0 %1295
  %v1298 = vadd.f32 %v1287, %v1296
  %v1299 = vtanh.pop %v1298
  %v1300 = vsub.f32 1.0, %v1286
  %1302 = vrot.lane.b32.xlu0 %v1299, 96
  %v1303 = vpop.permute.xlu0 %1302
  %v1305 = vmul.f32 %v1300, %v1303
  %v1306 = vmul.f32 %v1286, %v952
  %v1307 = vadd.f32 %v1305, %v1306
  %1309 = vrot.lane.b32.xlu0 %v1307, 96
  %v1310 = vpop.permute.xlu0 %1309
  %v1311 = vsel %vm125, %v1310, 0
  %1313 = vmatprep.subr.mxu0 0.0
  %1314 = vmatpush1.msra.mxu0 0.0
  %1315 = vmatprep.subr.mxu0 0.0
  %1316 = vmatpush1.msra.mxu0 0.0
  %1317 = vmatprep.subr.mxu0 0.0
  %1318 = vmatpush1.msra.mxu0 0.0
  %1319 = vmatprep.subr.mxu0 0.0
  %1320 = vmatpush1.msra.mxu0 0.0
  %1321 = vmatprep.subr.mxu0 0.0
  %1322 = vmatpush1.msra.mxu0 0.0
  %1323 = vmatprep.subr.mxu0 0.0
  %1324 = vmatpush1.msra.mxu0 0.0
  %1325 = vmatprep.subr.mxu0 0.0
  %1326 = vmatpush1.msra.mxu0 0.0
  %1327 = vmatprep.subr.mxu0 0.0
  %1328 = vmatpush1.msra.mxu0 0.0
  %1329 = vmatprep.subr.mxu0 0.0
  %1330 = vmatpush1.msra.mxu0 0.0
  %1331 = vmatprep.subr.mxu0 0.0
  %1332 = vmatpush1.msra.mxu0 0.0
  %1333 = vmatprep.subr.mxu0 0.0
  %1334 = vmatpush1.msra.mxu0 0.0
  %1335 = vmatprep.subr.mxu0 0.0
  %1336 = vmatpush1.msra.mxu0 0.0
  %1337 = vmatprep.subr.mxu0 0.0
  %1338 = vmatpush1.msra.mxu0 %v39
  %1339 = vmatprep.subr.mxu0 0.0
  %1340 = vmatpush1.msra.mxu0 %v38
  %1341 = vmatprep.subr.mxu0 0.0
  %1342 = vmatpush1.msra.mxu0 %v37
  %1343 = vmatprep.subr.mxu0 0.0
  %1344 = vmatpush1.msra.mxu0 %v36
  %1345 = vmatprep.subr.mxu0 0.0
  %1346 = vmatpush2.msra.mxu0 0.0
  %1347 = vmatprep.subr.mxu0 0.0
  %1348 = vmatpush2.msra.mxu0 0.0
  %1349 = vmatprep.subr.mxu0 0.0
  %1350 = vmatpush2.msra.mxu0 0.0
  %1351 = vmatprep.subr.mxu0 0.0
  %1352 = vmatpush2.msra.mxu0 0.0
  %1353 = vmatprep.subr.mxu0 0.0
  %1354 = vmatpush2.msra.mxu0 0.0
  %1355 = vmatprep.subr.mxu0 0.0
  %1356 = vmatpush2.msra.mxu0 0.0
  %1357 = vmatprep.subr.mxu0 0.0
  %1358 = vmatpush2.msra.mxu0 0.0
  %1359 = vmatprep.subr.mxu0 0.0
  %1360 = vmatpush2.msra.mxu0 0.0
  %1361 = vmatprep.subr.mxu0 0.0
  %1362 = vmatpush2.msra.mxu0 0.0
  %1363 = vmatprep.subr.mxu0 0.0
  %1364 = vmatpush2.msra.mxu0 0.0
  %1365 = vmatprep.subr.mxu0 0.0
  %1366 = vmatpush2.msra.mxu0 0.0
  %1367 = vmatprep.subr.mxu0 0.0
  %1368 = vmatpush2.msra.mxu0 0.0
  %1369 = vmatprep.subr.mxu0 0.0
  %1370 = vmatpush2.msra.mxu0 0.0
  %1371 = vmatprep.subr.mxu0 0.0
  %1372 = vmatpush2.msra.mxu0 0.0
  %1373 = vmatprep.subr.mxu0 0.0
  %1374 = vmatpush2.msra.mxu0 0.0
  %1375 = vmatprep.subr.mxu0 0.0
  %1376 = vmatpush2.msra.mxu0 0.0
  %1377 = vmatprep.mubr.f32.mxu0 0.0
  %1378 = vmatmul.mubr.f32.gmra.mxu0 %v1311
  %v1379 = vpop.f32.mrf.mxu0
  %v1380 = vadd.f32 0.0, %v1379
  %v1381 = vpop.f32.mrf.mxu0
  %1382 = vdwg.mxu0
  %v1383 = vsel %vm125, %v1131, 0
  %1385 = vmatprep.subr.mxu0 0.0
  %1386 = vmatpush1.msra.mxu0 0.0
  %1387 = vmatprep.subr.mxu0 0.0
  %1388 = vmatpush1.msra.mxu0 0.0
  %1389 = vmatprep.subr.mxu0 0.0
  %1390 = vmatpush1.msra.mxu0 0.0
  %1391 = vmatprep.subr.mxu0 0.0
  %1392 = vmatpush1.msra.mxu0 0.0
  %1393 = vmatprep.subr.mxu0 0.0
  %1394 = vmatpush1.msra.mxu0 0.0
  %1395 = vmatprep.subr.mxu0 0.0
  %1396 = vmatpush1.msra.mxu0 0.0
  %1397 = vmatprep.subr.mxu0 0.0
  %1398 = vmatpush1.msra.mxu0 0.0
  %1399 = vmatprep.subr.mxu0 0.0
  %1400 = vmatpush1.msra.mxu0 0.0
  %1401 = vmatprep.subr.mxu0 0.0
  %1402 = vmatpush1.msra.mxu0 0.0
  %1403 = vmatprep.subr.mxu0 0.0
  %1404 = vmatpush1.msra.mxu0 0.0
  %1405 = vmatprep.subr.mxu0 0.0
  %1406 = vmatpush1.msra.mxu0 0.0
  %1407 = vmatprep.subr.mxu0 0.0
  %1408 = vmatpush1.msra.mxu0 0.0
  %1409 = vmatprep.subr.mxu0 0.0
  %1410 = vmatpush1.msra.mxu0 %v47
  %1411 = vmatprep.subr.mxu0 0.0
  %1412 = vmatpush1.msra.mxu0 %v46
  %1413 = vmatprep.subr.mxu0 0.0
  %1414 = vmatpush1.msra.mxu0 %v45
  %1415 = vmatprep.subr.mxu0 0.0
  %1416 = vmatpush1.msra.mxu0 %v44
  %1417 = vmatprep.subr.mxu0 0.0
  %1418 = vmatpush2.msra.mxu0 0.0
  %1419 = vmatprep.subr.mxu0 0.0
  %1420 = vmatpush2.msra.mxu0 0.0
  %1421 = vmatprep.subr.mxu0 0.0
  %1422 = vmatpush2.msra.mxu0 0.0
  %1423 = vmatprep.subr.mxu0 0.0
  %1424 = vmatpush2.msra.mxu0 0.0
  %1425 = vmatprep.subr.mxu0 0.0
  %1426 = vmatpush2.msra.mxu0 0.0
  %1427 = vmatprep.subr.mxu0 0.0
  %1428 = vmatpush2.msra.mxu0 0.0
  %1429 = vmatprep.subr.mxu0 0.0
  %1430 = vmatpush2.msra.mxu0 0.0
  %1431 = vmatprep.subr.mxu0 0.0
  %1432 = vmatpush2.msra.mxu0 0.0
  %1433 = vmatprep.subr.mxu0 0.0
  %1434 = vmatpush2.msra.mxu0 0.0
  %1435 = vmatprep.subr.mxu0 0.0
  %1436 = vmatpush2.msra.mxu0 0.0
  %1437 = vmatprep.subr.mxu0 0.0
  %1438 = vmatpush2.msra.mxu0 0.0
  %1439 = vmatprep.subr.mxu0 0.0
  %1440 = vmatpush2.msra.mxu0 0.0
  %1441 = vmatprep.subr.mxu0 0.0
  %1442 = vmatpush2.msra.mxu0 0.0
  %1443 = vmatprep.subr.mxu0 0.0
  %1444 = vmatpush2.msra.mxu0 0.0
  %1445 = vmatprep.subr.mxu0 0.0
  %1446 = vmatpush2.msra.mxu0 0.0
  %1447 = vmatprep.subr.mxu0 0.0
  %1448 = vmatpush2.msra.mxu0 0.0
  %1449 = vmatprep.mubr.f32.mxu0 0.0
  %1450 = vmatmul.mubr.f32.gmra.mxu0 %v1383
  %v1451 = vpop.f32.mrf.mxu0
  %v1452 = vadd.f32 0.0, %v1451
  %v1453 = vpop.f32.mrf.mxu0
  %1454 = vdwg.mxu0
  %v1455 = vadd.f32 %v1380, %v1452
  %v1456 = vadd.f32 %v1455, %v385
  %v1457 = vxor.u32 %v1456, 2147483648
  %v1458 = vmul.f32 %v1457, 1.442695
  %v1459 = vpow.pop %v1458
  %v1460 = vadd.f32 %v1459, 1.0
  %v1461 = vrcp.pop %v1460
  %v1462 = vmul.f32 1.0, %v1461
  %v1463 = vadd.f32 %v1380, %v385
  %v1464 = vadd.f32 %v1452, %v396
  %1466 = vrot.lane.b32.xlu0 %v1464, 64
  %v1467 = vpop.permute.xlu0 %1466
  %v1469 = vmul.f32 %v1462, %v1467
  %1471 = vrot.lane.b32.xlu0 %v1469, 64
  %v1472 = vpop.permute.xlu0 %1471
  %v1474 = vadd.f32 %v1463, %v1472
  %v1475 = vtanh.pop %v1474
  %v1476 = vsub.f32 1.0, %v1462
  %1478 = vrot.lane.b32.xlu0 %v1475, 96
  %v1479 = vpop.permute.xlu0 %1478
  %v1481 = vmul.f32 %v1476, %v1479
  %v1482 = vmul.f32 %v1462, %v1128
  %v1483 = vadd.f32 %v1481, %v1482
  %1485 = vrot.lane.b32.xlu0 %v1483, 96
  %v1486 = vpop.permute.xlu0 %1485
  %1488 = vst.msk [vmem:[#allocation2 + $0xc] sm:$0xf] %vm422, %v1486
  %s1489 = scalar_lea.vmem %s0, 16
  %v1490 = vld [vmem:[%s1489] sm:$0xf]
  %v1492 = vsel %vm51, %v1490, 0
  %1494 = vmatprep.subr.mxu0 0.0
  %1495 = vmatpush1.msra.mxu0 0.0
  %1496 = vmatprep.subr.mxu0 0.0
  %1497 = vmatpush1.msra.mxu0 0.0
  %1498 = vmatprep.subr.mxu0 0.0
  %1499 = vmatpush1.msra.mxu0 0.0
  %1500 = vmatprep.subr.mxu0 0.0
  %1501 = vmatpush1.msra.mxu0 0.0
  %1502 = vmatprep.subr.mxu0 0.0
  %1503 = vmatpush1.msra.mxu0 0.0
  %1504 = vmatprep.subr.mxu0 0.0
  %1505 = vmatpush1.msra.mxu0 0.0
  %1506 = vmatprep.subr.mxu0 0.0
  %1507 = vmatpush1.msra.mxu0 0.0
  %1508 = vmatprep.subr.mxu0 0.0
  %1509 = vmatpush1.msra.mxu0 0.0
  %1510 = vmatprep.subr.mxu0 0.0
  %1511 = vmatpush1.msra.mxu0 0.0
  %1512 = vmatprep.subr.mxu0 0.0
  %1513 = vmatpush1.msra.mxu0 0.0
  %1514 = vmatprep.subr.mxu0 0.0
  %1515 = vmatpush1.msra.mxu0 0.0
  %1516 = vmatprep.subr.mxu0 0.0
  %1517 = vmatpush1.msra.mxu0 0.0
  %1518 = vmatprep.subr.mxu0 0.0
  %1519 = vmatpush1.msra.mxu0 0.0
  %1520 = vmatprep.subr.mxu0 0.0
  %1521 = vmatpush1.msra.mxu0 0.0
  %1522 = vmatprep.subr.mxu0 0.0
  %1523 = vmatpush1.msra.mxu0 %v35
  %1524 = vmatprep.subr.mxu0 0.0
  %1525 = vmatpush1.msra.mxu0 %v34
  %1526 = vmatprep.subr.mxu0 0.0
  %1527 = vmatpush2.msra.mxu0 0.0
  %1528 = vmatprep.subr.mxu0 0.0
  %1529 = vmatpush2.msra.mxu0 0.0
  %1530 = vmatprep.subr.mxu0 0.0
  %1531 = vmatpush2.msra.mxu0 0.0
  %1532 = vmatprep.subr.mxu0 0.0
  %1533 = vmatpush2.msra.mxu0 0.0
  %1534 = vmatprep.subr.mxu0 0.0
  %1535 = vmatpush2.msra.mxu0 0.0
  %1536 = vmatprep.subr.mxu0 0.0
  %1537 = vmatpush2.msra.mxu0 0.0
  %1538 = vmatprep.subr.mxu0 0.0
  %1539 = vmatpush2.msra.mxu0 0.0
  %1540 = vmatprep.subr.mxu0 0.0
  %1541 = vmatpush2.msra.mxu0 0.0
  %1542 = vmatprep.subr.mxu0 0.0
  %1543 = vmatpush2.msra.mxu0 0.0
  %1544 = vmatprep.subr.mxu0 0.0
  %1545 = vmatpush2.msra.mxu0 0.0
  %1546 = vmatprep.subr.mxu0 0.0
  %1547 = vmatpush2.msra.mxu0 0.0
  %1548 = vmatprep.subr.mxu0 0.0
  %1549 = vmatpush2.msra.mxu0 0.0
  %1550 = vmatprep.subr.mxu0 0.0
  %1551 = vmatpush2.msra.mxu0 0.0
  %1552 = vmatprep.subr.mxu0 0.0
  %1553 = vmatpush2.msra.mxu0 0.0
  %1554 = vmatprep.subr.mxu0 0.0
  %1555 = vmatpush2.msra.mxu0 0.0
  %1556 = vmatprep.subr.mxu0 0.0
  %1557 = vmatpush2.msra.mxu0 0.0
  %1558 = vmatprep.mubr.f32.mxu0 0.0
  %1559 = vmatmul.mubr.f32.gmra.mxu0 %v1492
  %v1560 = vpop.f32.mrf.mxu0
  %v1561 = vadd.f32 0.0, %v1560
  %v1562 = vpop.f32.mrf.mxu0
  %1563 = vdwg.mxu0
  %1564 = vmatprep.subr.mxu0 0.0
  %1565 = vmatpush1.msra.mxu0 0.0
  %1566 = vmatprep.subr.mxu0 0.0
  %1567 = vmatpush1.msra.mxu0 0.0
  %1568 = vmatprep.subr.mxu0 0.0
  %1569 = vmatpush1.msra.mxu0 0.0
  %1570 = vmatprep.subr.mxu0 0.0
  %1571 = vmatpush1.msra.mxu0 0.0
  %1572 = vmatprep.subr.mxu0 0.0
  %1573 = vmatpush1.msra.mxu0 0.0
  %1574 = vmatprep.subr.mxu0 0.0
  %1575 = vmatpush1.msra.mxu0 0.0
  %1576 = vmatprep.subr.mxu0 0.0
  %1577 = vmatpush1.msra.mxu0 0.0
  %1578 = vmatprep.subr.mxu0 0.0
  %1579 = vmatpush1.msra.mxu0 0.0
  %1580 = vmatprep.subr.mxu0 0.0
  %1581 = vmatpush1.msra.mxu0 0.0
  %1582 = vmatprep.subr.mxu0 0.0
  %1583 = vmatpush1.msra.mxu0 0.0
  %1584 = vmatprep.subr.mxu0 0.0
  %1585 = vmatpush1.msra.mxu0 0.0
  %1586 = vmatprep.subr.mxu0 0.0
  %1587 = vmatpush1.msra.mxu0 0.0
  %1588 = vmatprep.subr.mxu0 0.0
  %1589 = vmatpush1.msra.mxu0 %v43
  %1590 = vmatprep.subr.mxu0 0.0
  %1591 = vmatpush1.msra.mxu0 %v42
  %1592 = vmatprep.subr.mxu0 0.0
  %1593 = vmatpush1.msra.mxu0 %v41
  %1594 = vmatprep.subr.mxu0 0.0
  %1595 = vmatpush1.msra.mxu0 %v40
  %1596 = vmatprep.subr.mxu0 0.0
  %1597 = vmatpush2.msra.mxu0 0.0
  %1598 = vmatprep.subr.mxu0 0.0
  %1599 = vmatpush2.msra.mxu0 0.0
  %1600 = vmatprep.subr.mxu0 0.0
  %1601 = vmatpush2.msra.mxu0 0.0
  %1602 = vmatprep.subr.mxu0 0.0
  %1603 = vmatpush2.msra.mxu0 0.0
  %1604 = vmatprep.subr.mxu0 0.0
  %1605 = vmatpush2.msra.mxu0 0.0
  %1606 = vmatprep.subr.mxu0 0.0
  %1607 = vmatpush2.msra.mxu0 0.0
  %1608 = vmatprep.subr.mxu0 0.0
  %1609 = vmatpush2.msra.mxu0 0.0
  %1610 = vmatprep.subr.mxu0 0.0
  %1611 = vmatpush2.msra.mxu0 0.0
  %1612 = vmatprep.subr.mxu0 0.0
  %1613 = vmatpush2.msra.mxu0 0.0
  %1614 = vmatprep.subr.mxu0 0.0
  %1615 = vmatpush2.msra.mxu0 0.0
  %1616 = vmatprep.subr.mxu0 0.0
  %1617 = vmatpush2.msra.mxu0 0.0
  %1618 = vmatprep.subr.mxu0 0.0
  %1619 = vmatpush2.msra.mxu0 0.0
  %1620 = vmatprep.subr.mxu0 0.0
  %1621 = vmatpush2.msra.mxu0 0.0
  %1622 = vmatprep.subr.mxu0 0.0
  %1623 = vmatpush2.msra.mxu0 0.0
  %1624 = vmatprep.subr.mxu0 0.0
  %1625 = vmatpush2.msra.mxu0 0.0
  %1626 = vmatprep.subr.mxu0 0.0
  %1627 = vmatpush2.msra.mxu0 0.0
  %1628 = vmatprep.mubr.f32.mxu0 0.0
  %1629 = vmatmul.mubr.f32.gmra.mxu0 %v1311
  %v1630 = vpop.f32.mrf.mxu0
  %v1631 = vadd.f32 0.0, %v1630
  %v1632 = vpop.f32.mrf.mxu0
  %1633 = vdwg.mxu0
  %v1634 = vadd.f32 %v1561, %v1631
  %v1635 = vadd.f32 %v1634, %v203
  %v1636 = vxor.u32 %v1635, 2147483648
  %v1637 = vmul.f32 %v1636, 1.442695
  %v1638 = vpow.pop %v1637
  %v1639 = vadd.f32 %v1638, 1.0
  %v1640 = vrcp.pop %v1639
  %v1641 = vmul.f32 1.0, %v1640
  %v1642 = vadd.f32 %v1561, %v203
  %v1643 = vadd.f32 %v1631, %v214
  %1645 = vrot.lane.b32.xlu0 %v1643, 64
  %v1646 = vpop.permute.xlu0 %1645
  %v1648 = vmul.f32 %v1641, %v1646
  %1650 = vrot.lane.b32.xlu0 %v1648, 64
  %v1651 = vpop.permute.xlu0 %1650
  %v1653 = vadd.f32 %v1642, %v1651
  %v1654 = vtanh.pop %v1653
  %v1655 = vsub.f32 1.0, %v1641
  %1657 = vrot.lane.b32.xlu0 %v1654, 96
  %v1658 = vpop.permute.xlu0 %1657
  %v1660 = vmul.f32 %v1655, %v1658
  %v1661 = vmul.f32 %v1641, %v1307
  %v1662 = vadd.f32 %v1660, %v1661
  %1664 = vrot.lane.b32.xlu0 %v1662, 96
  %v1665 = vpop.permute.xlu0 %1664
  %v1666 = vsel %vm125, %v1665, 0
  %1668 = vmatprep.subr.mxu0 0.0
  %1669 = vmatpush1.msra.mxu0 0.0
  %1670 = vmatprep.subr.mxu0 0.0
  %1671 = vmatpush1.msra.mxu0 0.0
  %1672 = vmatprep.subr.mxu0 0.0
  %1673 = vmatpush1.msra.mxu0 0.0
  %1674 = vmatprep.subr.mxu0 0.0
  %1675 = vmatpush1.msra.mxu0 0.0
  %1676 = vmatprep.subr.mxu0 0.0
  %1677 = vmatpush1.msra.mxu0 0.0
  %1678 = vmatprep.subr.mxu0 0.0
  %1679 = vmatpush1.msra.mxu0 0.0
  %1680 = vmatprep.subr.mxu0 0.0
  %1681 = vmatpush1.msra.mxu0 0.0
  %1682 = vmatprep.subr.mxu0 0.0
  %1683 = vmatpush1.msra.mxu0 0.0
  %1684 = vmatprep.subr.mxu0 0.0
  %1685 = vmatpush1.msra.mxu0 0.0
  %1686 = vmatprep.subr.mxu0 0.0
  %1687 = vmatpush1.msra.mxu0 0.0
  %1688 = vmatprep.subr.mxu0 0.0
  %1689 = vmatpush1.msra.mxu0 0.0
  %1690 = vmatprep.subr.mxu0 0.0
  %1691 = vmatpush1.msra.mxu0 0.0
  %1692 = vmatprep.subr.mxu0 0.0
  %1693 = vmatpush1.msra.mxu0 %v39
  %1694 = vmatprep.subr.mxu0 0.0
  %1695 = vmatpush1.msra.mxu0 %v38
  %1696 = vmatprep.subr.mxu0 0.0
  %1697 = vmatpush1.msra.mxu0 %v37
  %1698 = vmatprep.subr.mxu0 0.0
  %1699 = vmatpush1.msra.mxu0 %v36
  %1700 = vmatprep.subr.mxu0 0.0
  %1701 = vmatpush2.msra.mxu0 0.0
  %1702 = vmatprep.subr.mxu0 0.0
  %1703 = vmatpush2.msra.mxu0 0.0
  %1704 = vmatprep.subr.mxu0 0.0
  %1705 = vmatpush2.msra.mxu0 0.0
  %1706 = vmatprep.subr.mxu0 0.0
  %1707 = vmatpush2.msra.mxu0 0.0
  %1708 = vmatprep.subr.mxu0 0.0
  %1709 = vmatpush2.msra.mxu0 0.0
  %1710 = vmatprep.subr.mxu0 0.0
  %1711 = vmatpush2.msra.mxu0 0.0
  %1712 = vmatprep.subr.mxu0 0.0
  %1713 = vmatpush2.msra.mxu0 0.0
  %1714 = vmatprep.subr.mxu0 0.0
  %1715 = vmatpush2.msra.mxu0 0.0
  %1716 = vmatprep.subr.mxu0 0.0
  %1717 = vmatpush2.msra.mxu0 0.0
  %1718 = vmatprep.subr.mxu0 0.0
  %1719 = vmatpush2.msra.mxu0 0.0
  %1720 = vmatprep.subr.mxu0 0.0
  %1721 = vmatpush2.msra.mxu0 0.0
  %1722 = vmatprep.subr.mxu0 0.0
  %1723 = vmatpush2.msra.mxu0 0.0
  %1724 = vmatprep.subr.mxu0 0.0
  %1725 = vmatpush2.msra.mxu0 0.0
  %1726 = vmatprep.subr.mxu0 0.0
  %1727 = vmatpush2.msra.mxu0 0.0
  %1728 = vmatprep.subr.mxu0 0.0
  %1729 = vmatpush2.msra.mxu0 0.0
  %1730 = vmatprep.subr.mxu0 0.0
  %1731 = vmatpush2.msra.mxu0 0.0
  %1732 = vmatprep.mubr.f32.mxu0 0.0
  %1733 = vmatmul.mubr.f32.gmra.mxu0 %v1666
  %v1734 = vpop.f32.mrf.mxu0
  %v1735 = vadd.f32 0.0, %v1734
  %v1736 = vpop.f32.mrf.mxu0
  %1737 = vdwg.mxu0
  %v1738 = vsel %vm125, %v1486, 0
  %1740 = vmatprep.subr.mxu0 0.0
  %1741 = vmatpush1.msra.mxu0 0.0
  %1742 = vmatprep.subr.mxu0 0.0
  %1743 = vmatpush1.msra.mxu0 0.0
  %1744 = vmatprep.subr.mxu0 0.0
  %1745 = vmatpush1.msra.mxu0 0.0
  %1746 = vmatprep.subr.mxu0 0.0
  %1747 = vmatpush1.msra.mxu0 0.0
  %1748 = vmatprep.subr.mxu0 0.0
  %1749 = vmatpush1.msra.mxu0 0.0
  %1750 = vmatprep.subr.mxu0 0.0
  %1751 = vmatpush1.msra.mxu0 0.0
  %1752 = vmatprep.subr.mxu0 0.0
  %1753 = vmatpush1.msra.mxu0 0.0
  %1754 = vmatprep.subr.mxu0 0.0
  %1755 = vmatpush1.msra.mxu0 0.0
  %1756 = vmatprep.subr.mxu0 0.0
  %1757 = vmatpush1.msra.mxu0 0.0
  %1758 = vmatprep.subr.mxu0 0.0
  %1759 = vmatpush1.msra.mxu0 0.0
  %1760 = vmatprep.subr.mxu0 0.0
  %1761 = vmatpush1.msra.mxu0 0.0
  %1762 = vmatprep.subr.mxu0 0.0
  %1763 = vmatpush1.msra.mxu0 0.0
  %1764 = vmatprep.subr.mxu0 0.0
  %1765 = vmatpush1.msra.mxu0 %v47
  %1766 = vmatprep.subr.mxu0 0.0
  %1767 = vmatpush1.msra.mxu0 %v46
  %1768 = vmatprep.subr.mxu0 0.0
  %1769 = vmatpush1.msra.mxu0 %v45
  %1770 = vmatprep.subr.mxu0 0.0
  %1771 = vmatpush1.msra.mxu0 %v44
  %1772 = vmatprep.subr.mxu0 0.0
  %1773 = vmatpush2.msra.mxu0 0.0
  %1774 = vmatprep.subr.mxu0 0.0
  %1775 = vmatpush2.msra.mxu0 0.0
  %1776 = vmatprep.subr.mxu0 0.0
  %1777 = vmatpush2.msra.mxu0 0.0
  %1778 = vmatprep.subr.mxu0 0.0
  %1779 = vmatpush2.msra.mxu0 0.0
  %1780 = vmatprep.subr.mxu0 0.0
  %1781 = vmatpush2.msra.mxu0 0.0
  %1782 = vmatprep.subr.mxu0 0.0
  %1783 = vmatpush2.msra.mxu0 0.0
  %1784 = vmatprep.subr.mxu0 0.0
  %1785 = vmatpush2.msra.mxu0 0.0
  %1786 = vmatprep.subr.mxu0 0.0
  %1787 = vmatpush2.msra.mxu0 0.0
  %1788 = vmatprep.subr.mxu0 0.0
  %1789 = vmatpush2.msra.mxu0 0.0
  %1790 = vmatprep.subr.mxu0 0.0
  %1791 = vmatpush2.msra.mxu0 0.0
  %1792 = vmatprep.subr.mxu0 0.0
  %1793 = vmatpush2.msra.mxu0 0.0
  %1794 = vmatprep.subr.mxu0 0.0
  %1795 = vmatpush2.msra.mxu0 0.0
  %1796 = vmatprep.subr.mxu0 0.0
  %1797 = vmatpush2.msra.mxu0 0.0
  %1798 = vmatprep.subr.mxu0 0.0
  %1799 = vmatpush2.msra.mxu0 0.0
  %1800 = vmatprep.subr.mxu0 0.0
  %1801 = vmatpush2.msra.mxu0 0.0
  %1802 = vmatprep.subr.mxu0 0.0
  %1803 = vmatpush2.msra.mxu0 0.0
  %1804 = vmatprep.mubr.f32.mxu0 0.0
  %1805 = vmatmul.mubr.f32.gmra.mxu0 %v1738
  %v1806 = vpop.f32.mrf.mxu0
  %v1807 = vadd.f32 0.0, %v1806
  %v1808 = vpop.f32.mrf.mxu0
  %1809 = vdwg.mxu0
  %v1810 = vadd.f32 %v1735, %v1807
  %v1811 = vadd.f32 %v1810, %v385
  %v1812 = vxor.u32 %v1811, 2147483648
  %v1813 = vmul.f32 %v1812, 1.442695
  %v1814 = vpow.pop %v1813
  %v1815 = vadd.f32 %v1814, 1.0
  %v1816 = vrcp.pop %v1815
  %v1817 = vmul.f32 1.0, %v1816
  %v1818 = vadd.f32 %v1735, %v385
  %v1819 = vadd.f32 %v1807, %v396
  %1821 = vrot.lane.b32.xlu0 %v1819, 64
  %v1822 = vpop.permute.xlu0 %1821
  %v1824 = vmul.f32 %v1817, %v1822
  %1826 = vrot.lane.b32.xlu0 %v1824, 64
  %v1827 = vpop.permute.xlu0 %1826
  %v1829 = vadd.f32 %v1818, %v1827
  %v1830 = vtanh.pop %v1829
  %v1831 = vsub.f32 1.0, %v1817
  %1833 = vrot.lane.b32.xlu0 %v1830, 96
  %v1834 = vpop.permute.xlu0 %1833
  %v1836 = vmul.f32 %v1831, %v1834
  %v1837 = vmul.f32 %v1817, %v1483
  %v1838 = vadd.f32 %v1836, %v1837
  %1840 = vrot.lane.b32.xlu0 %v1838, 96
  %v1841 = vpop.permute.xlu0 %1840
  %1843 = vst.msk [vmem:[#allocation2 + $0x10] sm:$0xf] %vm422, %v1841
  %s1844 = scalar_lea.vmem %s0, 20
  %v1845 = vld [vmem:[%s1844] sm:$0xf]
  %v1847 = vsel %vm51, %v1845, 0
  %1849 = vmatprep.subr.mxu0 0.0
  %1850 = vmatpush1.msra.mxu0 0.0
  %1851 = vmatprep.subr.mxu0 0.0
  %1852 = vmatpush1.msra.mxu0 0.0
  %1853 = vmatprep.subr.mxu0 0.0
  %1854 = vmatpush1.msra.mxu0 0.0
  %1855 = vmatprep.subr.mxu0 0.0
  %1856 = vmatpush1.msra.mxu0 0.0
  %1857 = vmatprep.subr.mxu0 0.0
  %1858 = vmatpush1.msra.mxu0 0.0
  %1859 = vmatprep.subr.mxu0 0.0
  %1860 = vmatpush1.msra.mxu0 0.0
  %1861 = vmatprep.subr.mxu0 0.0
  %1862 = vmatpush1.msra.mxu0 0.0
  %1863 = vmatprep.subr.mxu0 0.0
  %1864 = vmatpush1.msra.mxu0 0.0
  %1865 = vmatprep.subr.mxu0 0.0
  %1866 = vmatpush1.msra.mxu0 0.0
  %1867 = vmatprep.subr.mxu0 0.0
  %1868 = vmatpush1.msra.mxu0 0.0
  %1869 = vmatprep.subr.mxu0 0.0
  %1870 = vmatpush1.msra.mxu0 0.0
  %1871 = vmatprep.subr.mxu0 0.0
  %1872 = vmatpush1.msra.mxu0 0.0
  %1873 = vmatprep.subr.mxu0 0.0
  %1874 = vmatpush1.msra.mxu0 0.0
  %1875 = vmatprep.subr.mxu0 0.0
  %1876 = vmatpush1.msra.mxu0 0.0
  %1877 = vmatprep.subr.mxu0 0.0
  %1878 = vmatpush1.msra.mxu0 %v35
  %1879 = vmatprep.subr.mxu0 0.0
  %1880 = vmatpush1.msra.mxu0 %v34
  %1881 = vmatprep.subr.mxu0 0.0
  %1882 = vmatpush2.msra.mxu0 0.0
  %1883 = vmatprep.subr.mxu0 0.0
  %1884 = vmatpush2.msra.mxu0 0.0
  %1885 = vmatprep.subr.mxu0 0.0
  %1886 = vmatpush2.msra.mxu0 0.0
  %1887 = vmatprep.subr.mxu0 0.0
  %1888 = vmatpush2.msra.mxu0 0.0
  %1889 = vmatprep.subr.mxu0 0.0
  %1890 = vmatpush2.msra.mxu0 0.0
  %1891 = vmatprep.subr.mxu0 0.0
  %1892 = vmatpush2.msra.mxu0 0.0
  %1893 = vmatprep.subr.mxu0 0.0
  %1894 = vmatpush2.msra.mxu0 0.0
  %1895 = vmatprep.subr.mxu0 0.0
  %1896 = vmatpush2.msra.mxu0 0.0
  %1897 = vmatprep.subr.mxu0 0.0
  %1898 = vmatpush2.msra.mxu0 0.0
  %1899 = vmatprep.subr.mxu0 0.0
  %1900 = vmatpush2.msra.mxu0 0.0
  %1901 = vmatprep.subr.mxu0 0.0
  %1902 = vmatpush2.msra.mxu0 0.0
  %1903 = vmatprep.subr.mxu0 0.0
  %1904 = vmatpush2.msra.mxu0 0.0
  %1905 = vmatprep.subr.mxu0 0.0
  %1906 = vmatpush2.msra.mxu0 0.0
  %1907 = vmatprep.subr.mxu0 0.0
  %1908 = vmatpush2.msra.mxu0 0.0
  %1909 = vmatprep.subr.mxu0 0.0
  %1910 = vmatpush2.msra.mxu0 0.0
  %1911 = vmatprep.subr.mxu0 0.0
  %1912 = vmatpush2.msra.mxu0 0.0
  %1913 = vmatprep.mubr.f32.mxu0 0.0
  %1914 = vmatmul.mubr.f32.gmra.mxu0 %v1847
  %v1915 = vpop.f32.mrf.mxu0
  %v1916 = vadd.f32 0.0, %v1915
  %v1917 = vpop.f32.mrf.mxu0
  %1918 = vdwg.mxu0
  %1919 = vmatprep.subr.mxu0 0.0
  %1920 = vmatpush1.msra.mxu0 0.0
  %1921 = vmatprep.subr.mxu0 0.0
  %1922 = vmatpush1.msra.mxu0 0.0
  %1923 = vmatprep.subr.mxu0 0.0
  %1924 = vmatpush1.msra.mxu0 0.0
  %1925 = vmatprep.subr.mxu0 0.0
  %1926 = vmatpush1.msra.mxu0 0.0
  %1927 = vmatprep.subr.mxu0 0.0
  %1928 = vmatpush1.msra.mxu0 0.0
  %1929 = vmatprep.subr.mxu0 0.0
  %1930 = vmatpush1.msra.mxu0 0.0
  %1931 = vmatprep.subr.mxu0 0.0
  %1932 = vmatpush1.msra.mxu0 0.0
  %1933 = vmatprep.subr.mxu0 0.0
  %1934 = vmatpush1.msra.mxu0 0.0
  %1935 = vmatprep.subr.mxu0 0.0
  %1936 = vmatpush1.msra.mxu0 0.0
  %1937 = vmatprep.subr.mxu0 0.0
  %1938 = vmatpush1.msra.mxu0 0.0
  %1939 = vmatprep.subr.mxu0 0.0
  %1940 = vmatpush1.msra.mxu0 0.0
  %1941 = vmatprep.subr.mxu0 0.0
  %1942 = vmatpush1.msra.mxu0 0.0
  %1943 = vmatprep.subr.mxu0 0.0
  %1944 = vmatpush1.msra.mxu0 %v43
  %1945 = vmatprep.subr.mxu0 0.0
  %1946 = vmatpush1.msra.mxu0 %v42
  %1947 = vmatprep.subr.mxu0 0.0
  %1948 = vmatpush1.msra.mxu0 %v41
  %1949 = vmatprep.subr.mxu0 0.0
  %1950 = vmatpush1.msra.mxu0 %v40
  %1951 = vmatprep.subr.mxu0 0.0
  %1952 = vmatpush2.msra.mxu0 0.0
  %1953 = vmatprep.subr.mxu0 0.0
  %1954 = vmatpush2.msra.mxu0 0.0
  %1955 = vmatprep.subr.mxu0 0.0
  %1956 = vmatpush2.msra.mxu0 0.0
  %1957 = vmatprep.subr.mxu0 0.0
  %1958 = vmatpush2.msra.mxu0 0.0
  %1959 = vmatprep.subr.mxu0 0.0
  %1960 = vmatpush2.msra.mxu0 0.0
  %1961 = vmatprep.subr.mxu0 0.0
  %1962 = vmatpush2.msra.mxu0 0.0
  %1963 = vmatprep.subr.mxu0 0.0
  %1964 = vmatpush2.msra.mxu0 0.0
  %1965 = vmatprep.subr.mxu0 0.0
  %1966 = vmatpush2.msra.mxu0 0.0
  %1967 = vmatprep.subr.mxu0 0.0
  %1968 = vmatpush2.msra.mxu0 0.0
  %1969 = vmatprep.subr.mxu0 0.0
  %1970 = vmatpush2.msra.mxu0 0.0
  %1971 = vmatprep.subr.mxu0 0.0
  %1972 = vmatpush2.msra.mxu0 0.0
  %1973 = vmatprep.subr.mxu0 0.0
  %1974 = vmatpush2.msra.mxu0 0.0
  %1975 = vmatprep.subr.mxu0 0.0
  %1976 = vmatpush2.msra.mxu0 0.0
  %1977 = vmatprep.subr.mxu0 0.0
  %1978 = vmatpush2.msra.mxu0 0.0
  %1979 = vmatprep.subr.mxu0 0.0
  %1980 = vmatpush2.msra.mxu0 0.0
  %1981 = vmatprep.subr.mxu0 0.0
  %1982 = vmatpush2.msra.mxu0 0.0
  %1983 = vmatprep.mubr.f32.mxu0 0.0
  %1984 = vmatmul.mubr.f32.gmra.mxu0 %v1666
  %v1985 = vpop.f32.mrf.mxu0
  %v1986 = vadd.f32 0.0, %v1985
  %v1987 = vpop.f32.mrf.mxu0
  %1988 = vdwg.mxu0
  %v1989 = vadd.f32 %v1916, %v1986
  %v1990 = vadd.f32 %v1989, %v203
  %v1991 = vxor.u32 %v1990, 2147483648
  %v1992 = vmul.f32 %v1991, 1.442695
  %v1993 = vpow.pop %v1992
  %v1994 = vadd.f32 %v1993, 1.0
  %v1995 = vrcp.pop %v1994
  %v1996 = vmul.f32 1.0, %v1995
  %v1997 = vadd.f32 %v1916, %v203
  %v1998 = vadd.f32 %v1986, %v214
  %2000 = vrot.lane.b32.xlu0 %v1998, 64
  %v2001 = vpop.permute.xlu0 %2000
  %v2003 = vmul.f32 %v1996, %v2001
  %2005 = vrot.lane.b32.xlu0 %v2003, 64
  %v2006 = vpop.permute.xlu0 %2005
  %v2008 = vadd.f32 %v1997, %v2006
  %v2009 = vtanh.pop %v2008
  %v2010 = vsub.f32 1.0, %v1996
  %2012 = vrot.lane.b32.xlu0 %v2009, 96
  %v2013 = vpop.permute.xlu0 %2012
  %v2015 = vmul.f32 %v2010, %v2013
  %v2016 = vmul.f32 %v1996, %v1662
  %v2017 = vadd.f32 %v2015, %v2016
  %2019 = vrot.lane.b32.xlu0 %v2017, 96
  %v2020 = vpop.permute.xlu0 %2019
  %v2021 = vsel %vm125, %v2020, 0
  %2023 = vmatprep.subr.mxu0 0.0
  %2024 = vmatpush1.msra.mxu0 0.0
  %2025 = vmatprep.subr.mxu0 0.0
  %2026 = vmatpush1.msra.mxu0 0.0
  %2027 = vmatprep.subr.mxu0 0.0
  %2028 = vmatpush1.msra.mxu0 0.0
  %2029 = vmatprep.subr.mxu0 0.0
  %2030 = vmatpush1.msra.mxu0 0.0
  %2031 = vmatprep.subr.mxu0 0.0
  %2032 = vmatpush1.msra.mxu0 0.0
  %2033 = vmatprep.subr.mxu0 0.0
  %2034 = vmatpush1.msra.mxu0 0.0
  %2035 = vmatprep.subr.mxu0 0.0
  %2036 = vmatpush1.msra.mxu0 0.0
  %2037 = vmatprep.subr.mxu0 0.0
  %2038 = vmatpush1.msra.mxu0 0.0
  %2039 = vmatprep.subr.mxu0 0.0
  %2040 = vmatpush1.msra.mxu0 0.0
  %2041 = vmatprep.subr.mxu0 0.0
  %2042 = vmatpush1.msra.mxu0 0.0
  %2043 = vmatprep.subr.mxu0 0.0
  %2044 = vmatpush1.msra.mxu0 0.0
  %2045 = vmatprep.subr.mxu0 0.0
  %2046 = vmatpush1.msra.mxu0 0.0
  %2047 = vmatprep.subr.mxu0 0.0
  %2048 = vmatpush1.msra.mxu0 %v39
  %2049 = vmatprep.subr.mxu0 0.0
  %2050 = vmatpush1.msra.mxu0 %v38
  %2051 = vmatprep.subr.mxu0 0.0
  %2052 = vmatpush1.msra.mxu0 %v37
  %2053 = vmatprep.subr.mxu0 0.0
  %2054 = vmatpush1.msra.mxu0 %v36
  %2055 = vmatprep.subr.mxu0 0.0
  %2056 = vmatpush2.msra.mxu0 0.0
  %2057 = vmatprep.subr.mxu0 0.0
  %2058 = vmatpush2.msra.mxu0 0.0
  %2059 = vmatprep.subr.mxu0 0.0
  %2060 = vmatpush2.msra.mxu0 0.0
  %2061 = vmatprep.subr.mxu0 0.0
  %2062 = vmatpush2.msra.mxu0 0.0
  %2063 = vmatprep.subr.mxu0 0.0
  %2064 = vmatpush2.msra.mxu0 0.0
  %2065 = vmatprep.subr.mxu0 0.0
  %2066 = vmatpush2.msra.mxu0 0.0
  %2067 = vmatprep.subr.mxu0 0.0
  %2068 = vmatpush2.msra.mxu0 0.0
  %2069 = vmatprep.subr.mxu0 0.0
  %2070 = vmatpush2.msra.mxu0 0.0
  %2071 = vmatprep.subr.mxu0 0.0
  %2072 = vmatpush2.msra.mxu0 0.0
  %2073 = vmatprep.subr.mxu0 0.0
  %2074 = vmatpush2.msra.mxu0 0.0
  %2075 = vmatprep.subr.mxu0 0.0
  %2076 = vmatpush2.msra.mxu0 0.0
  %2077 = vmatprep.subr.mxu0 0.0
  %2078 = vmatpush2.msra.mxu0 0.0
  %2079 = vmatprep.subr.mxu0 0.0
  %2080 = vmatpush2.msra.mxu0 0.0
  %2081 = vmatprep.subr.mxu0 0.0
  %2082 = vmatpush2.msra.mxu0 0.0
  %2083 = vmatprep.subr.mxu0 0.0
  %2084 = vmatpush2.msra.mxu0 0.0
  %2085 = vmatprep.subr.mxu0 0.0
  %2086 = vmatpush2.msra.mxu0 0.0
  %2087 = vmatprep.mubr.f32.mxu0 0.0
  %2088 = vmatmul.mubr.f32.gmra.mxu0 %v2021
  %v2089 = vpop.f32.mrf.mxu0
  %v2090 = vadd.f32 0.0, %v2089
  %v2091 = vpop.f32.mrf.mxu0
  %2092 = vdwg.mxu0
  %v2093 = vsel %vm125, %v1841, 0
  %2095 = vmatprep.subr.mxu0 0.0
  %2096 = vmatpush1.msra.mxu0 0.0
  %2097 = vmatprep.subr.mxu0 0.0
  %2098 = vmatpush1.msra.mxu0 0.0
  %2099 = vmatprep.subr.mxu0 0.0
  %2100 = vmatpush1.msra.mxu0 0.0
  %2101 = vmatprep.subr.mxu0 0.0
  %2102 = vmatpush1.msra.mxu0 0.0
  %2103 = vmatprep.subr.mxu0 0.0
  %2104 = vmatpush1.msra.mxu0 0.0
  %2105 = vmatprep.subr.mxu0 0.0
  %2106 = vmatpush1.msra.mxu0 0.0
  %2107 = vmatprep.subr.mxu0 0.0
  %2108 = vmatpush1.msra.mxu0 0.0
  %2109 = vmatprep.subr.mxu0 0.0
  %2110 = vmatpush1.msra.mxu0 0.0
  %2111 = vmatprep.subr.mxu0 0.0
  %2112 = vmatpush1.msra.mxu0 0.0
  %2113 = vmatprep.subr.mxu0 0.0
  %2114 = vmatpush1.msra.mxu0 0.0
  %2115 = vmatprep.subr.mxu0 0.0
  %2116 = vmatpush1.msra.mxu0 0.0
  %2117 = vmatprep.subr.mxu0 0.0
  %2118 = vmatpush1.msra.mxu0 0.0
  %2119 = vmatprep.subr.mxu0 0.0
  %2120 = vmatpush1.msra.mxu0 %v47
  %2121 = vmatprep.subr.mxu0 0.0
  %2122 = vmatpush1.msra.mxu0 %v46
  %2123 = vmatprep.subr.mxu0 0.0
  %2124 = vmatpush1.msra.mxu0 %v45
  %2125 = vmatprep.subr.mxu0 0.0
  %2126 = vmatpush1.msra.mxu0 %v44
  %2127 = vmatprep.subr.mxu0 0.0
  %2128 = vmatpush2.msra.mxu0 0.0
  %2129 = vmatprep.subr.mxu0 0.0
  %2130 = vmatpush2.msra.mxu0 0.0
  %2131 = vmatprep.subr.mxu0 0.0
  %2132 = vmatpush2.msra.mxu0 0.0
  %2133 = vmatprep.subr.mxu0 0.0
  %2134 = vmatpush2.msra.mxu0 0.0
  %2135 = vmatprep.subr.mxu0 0.0
  %2136 = vmatpush2.msra.mxu0 0.0
  %2137 = vmatprep.subr.mxu0 0.0
  %2138 = vmatpush2.msra.mxu0 0.0
  %2139 = vmatprep.subr.mxu0 0.0
  %2140 = vmatpush2.msra.mxu0 0.0
  %2141 = vmatprep.subr.mxu0 0.0
  %2142 = vmatpush2.msra.mxu0 0.0
  %2143 = vmatprep.subr.mxu0 0.0
  %2144 = vmatpush2.msra.mxu0 0.0
  %2145 = vmatprep.subr.mxu0 0.0
  %2146 = vmatpush2.msra.mxu0 0.0
  %2147 = vmatprep.subr.mxu0 0.0
  %2148 = vmatpush2.msra.mxu0 0.0
  %2149 = vmatprep.subr.mxu0 0.0
  %2150 = vmatpush2.msra.mxu0 0.0
  %2151 = vmatprep.subr.mxu0 0.0
  %2152 = vmatpush2.msra.mxu0 0.0
  %2153 = vmatprep.subr.mxu0 0.0
  %2154 = vmatpush2.msra.mxu0 0.0
  %2155 = vmatprep.subr.mxu0 0.0
  %2156 = vmatpush2.msra.mxu0 0.0
  %2157 = vmatprep.subr.mxu0 0.0
  %2158 = vmatpush2.msra.mxu0 0.0
  %2159 = vmatprep.mubr.f32.mxu0 0.0
  %2160 = vmatmul.mubr.f32.gmra.mxu0 %v2093
  %v2161 = vpop.f32.mrf.mxu0
  %v2162 = vadd.f32 0.0, %v2161
  %v2163 = vpop.f32.mrf.mxu0
  %2164 = vdwg.mxu0
  %v2165 = vadd.f32 %v2090, %v2162
  %v2166 = vadd.f32 %v2165, %v385
  %v2167 = vxor.u32 %v2166, 2147483648
  %v2168 = vmul.f32 %v2167, 1.442695
  %v2169 = vpow.pop %v2168
  %v2170 = vadd.f32 %v2169, 1.0
  %v2171 = vrcp.pop %v2170
  %v2172 = vmul.f32 1.0, %v2171
  %v2173 = vadd.f32 %v2090, %v385
  %v2174 = vadd.f32 %v2162, %v396
  %2176 = vrot.lane.b32.xlu0 %v2174, 64
  %v2177 = vpop.permute.xlu0 %2176
  %v2179 = vmul.f32 %v2172, %v2177
  %2181 = vrot.lane.b32.xlu0 %v2179, 64
  %v2182 = vpop.permute.xlu0 %2181
  %v2184 = vadd.f32 %v2173, %v2182
  %v2185 = vtanh.pop %v2184
  %v2186 = vsub.f32 1.0, %v2172
  %2188 = vrot.lane.b32.xlu0 %v2185, 96
  %v2189 = vpop.permute.xlu0 %2188
  %v2191 = vmul.f32 %v2186, %v2189
  %v2192 = vmul.f32 %v2172, %v1838
  %v2193 = vadd.f32 %v2191, %v2192
  %2195 = vrot.lane.b32.xlu0 %v2193, 96
  %v2196 = vpop.permute.xlu0 %2195
  %2198 = vst.msk [vmem:[#allocation2 + $0x14] sm:$0xf] %vm422, %v2196
  %s2199 = scalar_lea.vmem %s0, 24
  %v2200 = vld [vmem:[%s2199] sm:$0xf]
  %v2202 = vsel %vm51, %v2200, 0
  %2204 = vmatprep.subr.mxu0 0.0
  %2205 = vmatpush1.msra.mxu0 0.0
  %2206 = vmatprep.subr.mxu0 0.0
  %2207 = vmatpush1.msra.mxu0 0.0
  %2208 = vmatprep.subr.mxu0 0.0
  %2209 = vmatpush1.msra.mxu0 0.0
  %2210 = vmatprep.subr.mxu0 0.0
  %2211 = vmatpush1.msra.mxu0 0.0
  %2212 = vmatprep.subr.mxu0 0.0
  %2213 = vmatpush1.msra.mxu0 0.0
  %2214 = vmatprep.subr.mxu0 0.0
  %2215 = vmatpush1.msra.mxu0 0.0
  %2216 = vmatprep.subr.mxu0 0.0
  %2217 = vmatpush1.msra.mxu0 0.0
  %2218 = vmatprep.subr.mxu0 0.0
  %2219 = vmatpush1.msra.mxu0 0.0
  %2220 = vmatprep.subr.mxu0 0.0
  %2221 = vmatpush1.msra.mxu0 0.0
  %2222 = vmatprep.subr.mxu0 0.0
  %2223 = vmatpush1.msra.mxu0 0.0
  %2224 = vmatprep.subr.mxu0 0.0
  %2225 = vmatpush1.msra.mxu0 0.0
  %2226 = vmatprep.subr.mxu0 0.0
  %2227 = vmatpush1.msra.mxu0 0.0
  %2228 = vmatprep.subr.mxu0 0.0
  %2229 = vmatpush1.msra.mxu0 0.0
  %2230 = vmatprep.subr.mxu0 0.0
  %2231 = vmatpush1.msra.mxu0 0.0
  %2232 = vmatprep.subr.mxu0 0.0
  %2233 = vmatpush1.msra.mxu0 %v35
  %2234 = vmatprep.subr.mxu0 0.0
  %2235 = vmatpush1.msra.mxu0 %v34
  %2236 = vmatprep.subr.mxu0 0.0
  %2237 = vmatpush2.msra.mxu0 0.0
  %2238 = vmatprep.subr.mxu0 0.0
  %2239 = vmatpush2.msra.mxu0 0.0
  %2240 = vmatprep.subr.mxu0 0.0
  %2241 = vmatpush2.msra.mxu0 0.0
  %2242 = vmatprep.subr.mxu0 0.0
  %2243 = vmatpush2.msra.mxu0 0.0
  %2244 = vmatprep.subr.mxu0 0.0
  %2245 = vmatpush2.msra.mxu0 0.0
  %2246 = vmatprep.subr.mxu0 0.0
  %2247 = vmatpush2.msra.mxu0 0.0
  %2248 = vmatprep.subr.mxu0 0.0
  %2249 = vmatpush2.msra.mxu0 0.0
  %2250 = vmatprep.subr.mxu0 0.0
  %2251 = vmatpush2.msra.mxu0 0.0
  %2252 = vmatprep.subr.mxu0 0.0
  %2253 = vmatpush2.msra.mxu0 0.0
  %2254 = vmatprep.subr.mxu0 0.0
  %2255 = vmatpush2.msra.mxu0 0.0
  %2256 = vmatprep.subr.mxu0 0.0
  %2257 = vmatpush2.msra.mxu0 0.0
  %2258 = vmatprep.subr.mxu0 0.0
  %2259 = vmatpush2.msra.mxu0 0.0
  %2260 = vmatprep.subr.mxu0 0.0
  %2261 = vmatpush2.msra.mxu0 0.0
  %2262 = vmatprep.subr.mxu0 0.0
  %2263 = vmatpush2.msra.mxu0 0.0
  %2264 = vmatprep.subr.mxu0 0.0
  %2265 = vmatpush2.msra.mxu0 0.0
  %2266 = vmatprep.subr.mxu0 0.0
  %2267 = vmatpush2.msra.mxu0 0.0
  %2268 = vmatprep.mubr.f32.mxu0 0.0
  %2269 = vmatmul.mubr.f32.gmra.mxu0 %v2202
  %v2270 = vpop.f32.mrf.mxu0
  %v2271 = vadd.f32 0.0, %v2270
  %v2272 = vpop.f32.mrf.mxu0
  %2273 = vdwg.mxu0
  %2274 = vmatprep.subr.mxu0 0.0
  %2275 = vmatpush1.msra.mxu0 0.0
  %2276 = vmatprep.subr.mxu0 0.0
  %2277 = vmatpush1.msra.mxu0 0.0
  %2278 = vmatprep.subr.mxu0 0.0
  %2279 = vmatpush1.msra.mxu0 0.0
  %2280 = vmatprep.subr.mxu0 0.0
  %2281 = vmatpush1.msra.mxu0 0.0
  %2282 = vmatprep.subr.mxu0 0.0
  %2283 = vmatpush1.msra.mxu0 0.0
  %2284 = vmatprep.subr.mxu0 0.0
  %2285 = vmatpush1.msra.mxu0 0.0
  %2286 = vmatprep.subr.mxu0 0.0
  %2287 = vmatpush1.msra.mxu0 0.0
  %2288 = vmatprep.subr.mxu0 0.0
  %2289 = vmatpush1.msra.mxu0 0.0
  %2290 = vmatprep.subr.mxu0 0.0
  %2291 = vmatpush1.msra.mxu0 0.0
  %2292 = vmatprep.subr.mxu0 0.0
  %2293 = vmatpush1.msra.mxu0 0.0
  %2294 = vmatprep.subr.mxu0 0.0
  %2295 = vmatpush1.msra.mxu0 0.0
  %2296 = vmatprep.subr.mxu0 0.0
  %2297 = vmatpush1.msra.mxu0 0.0
  %2298 = vmatprep.subr.mxu0 0.0
  %2299 = vmatpush1.msra.mxu0 %v43
  %2300 = vmatprep.subr.mxu0 0.0
  %2301 = vmatpush1.msra.mxu0 %v42
  %2302 = vmatprep.subr.mxu0 0.0
  %2303 = vmatpush1.msra.mxu0 %v41
  %2304 = vmatprep.subr.mxu0 0.0
  %2305 = vmatpush1.msra.mxu0 %v40
  %2306 = vmatprep.subr.mxu0 0.0
  %2307 = vmatpush2.msra.mxu0 0.0
  %2308 = vmatprep.subr.mxu0 0.0
  %2309 = vmatpush2.msra.mxu0 0.0
  %2310 = vmatprep.subr.mxu0 0.0
  %2311 = vmatpush2.msra.mxu0 0.0
  %2312 = vmatprep.subr.mxu0 0.0
  %2313 = vmatpush2.msra.mxu0 0.0
  %2314 = vmatprep.subr.mxu0 0.0
  %2315 = vmatpush2.msra.mxu0 0.0
  %2316 = vmatprep.subr.mxu0 0.0
  %2317 = vmatpush2.msra.mxu0 0.0
  %2318 = vmatprep.subr.mxu0 0.0
  %2319 = vmatpush2.msra.mxu0 0.0
  %2320 = vmatprep.subr.mxu0 0.0
  %2321 = vmatpush2.msra.mxu0 0.0
  %2322 = vmatprep.subr.mxu0 0.0
  %2323 = vmatpush2.msra.mxu0 0.0
  %2324 = vmatprep.subr.mxu0 0.0
  %2325 = vmatpush2.msra.mxu0 0.0
  %2326 = vmatprep.subr.mxu0 0.0
  %2327 = vmatpush2.msra.mxu0 0.0
  %2328 = vmatprep.subr.mxu0 0.0
  %2329 = vmatpush2.msra.mxu0 0.0
  %2330 = vmatprep.subr.mxu0 0.0
  %2331 = vmatpush2.msra.mxu0 0.0
  %2332 = vmatprep.subr.mxu0 0.0
  %2333 = vmatpush2.msra.mxu0 0.0
  %2334 = vmatprep.subr.mxu0 0.0
  %2335 = vmatpush2.msra.mxu0 0.0
  %2336 = vmatprep.subr.mxu0 0.0
  %2337 = vmatpush2.msra.mxu0 0.0
  %2338 = vmatprep.mubr.f32.mxu0 0.0
  %2339 = vmatmul.mubr.f32.gmra.mxu0 %v2021
  %v2340 = vpop.f32.mrf.mxu0
  %v2341 = vadd.f32 0.0, %v2340
  %v2342 = vpop.f32.mrf.mxu0
  %2343 = vdwg.mxu0
  %v2344 = vadd.f32 %v2271, %v2341
  %v2345 = vadd.f32 %v2344, %v203
  %v2346 = vxor.u32 %v2345, 2147483648
  %v2347 = vmul.f32 %v2346, 1.442695
  %v2348 = vpow.pop %v2347
  %v2349 = vadd.f32 %v2348, 1.0
  %v2350 = vrcp.pop %v2349
  %v2351 = vmul.f32 1.0, %v2350
  %v2352 = vadd.f32 %v2271, %v203
  %v2353 = vadd.f32 %v2341, %v214
  %2355 = vrot.lane.b32.xlu0 %v2353, 64
  %v2356 = vpop.permute.xlu0 %2355
  %v2358 = vmul.f32 %v2351, %v2356
  %2360 = vrot.lane.b32.xlu0 %v2358, 64
  %v2361 = vpop.permute.xlu0 %2360
  %v2363 = vadd.f32 %v2352, %v2361
  %v2364 = vtanh.pop %v2363
  %v2365 = vsub.f32 1.0, %v2351
  %2367 = vrot.lane.b32.xlu0 %v2364, 96
  %v2368 = vpop.permute.xlu0 %2367
  %v2370 = vmul.f32 %v2365, %v2368
  %v2371 = vmul.f32 %v2351, %v2017
  %v2372 = vadd.f32 %v2370, %v2371
  %2374 = vrot.lane.b32.xlu0 %v2372, 96
  %v2375 = vpop.permute.xlu0 %2374
  %v2376 = vsel %vm125, %v2375, 0
  %2378 = vmatprep.subr.mxu0 0.0
  %2379 = vmatpush1.msra.mxu0 0.0
  %2380 = vmatprep.subr.mxu0 0.0
  %2381 = vmatpush1.msra.mxu0 0.0
  %2382 = vmatprep.subr.mxu0 0.0
  %2383 = vmatpush1.msra.mxu0 0.0
  %2384 = vmatprep.subr.mxu0 0.0
  %2385 = vmatpush1.msra.mxu0 0.0
  %2386 = vmatprep.subr.mxu0 0.0
  %2387 = vmatpush1.msra.mxu0 0.0
  %2388 = vmatprep.subr.mxu0 0.0
  %2389 = vmatpush1.msra.mxu0 0.0
  %2390 = vmatprep.subr.mxu0 0.0
  %2391 = vmatpush1.msra.mxu0 0.0
  %2392 = vmatprep.subr.mxu0 0.0
  %2393 = vmatpush1.msra.mxu0 0.0
  %2394 = vmatprep.subr.mxu0 0.0
  %2395 = vmatpush1.msra.mxu0 0.0
  %2396 = vmatprep.subr.mxu0 0.0
  %2397 = vmatpush1.msra.mxu0 0.0
  %2398 = vmatprep.subr.mxu0 0.0
  %2399 = vmatpush1.msra.mxu0 0.0
  %2400 = vmatprep.subr.mxu0 0.0
  %2401 = vmatpush1.msra.mxu0 0.0
  %2402 = vmatprep.subr.mxu0 0.0
  %2403 = vmatpush1.msra.mxu0 %v39
  %2404 = vmatprep.subr.mxu0 0.0
  %2405 = vmatpush1.msra.mxu0 %v38
  %2406 = vmatprep.subr.mxu0 0.0
  %2407 = vmatpush1.msra.mxu0 %v37
  %2408 = vmatprep.subr.mxu0 0.0
  %2409 = vmatpush1.msra.mxu0 %v36
  %2410 = vmatprep.subr.mxu0 0.0
  %2411 = vmatpush2.msra.mxu0 0.0
  %2412 = vmatprep.subr.mxu0 0.0
  %2413 = vmatpush2.msra.mxu0 0.0
  %2414 = vmatprep.subr.mxu0 0.0
  %2415 = vmatpush2.msra.mxu0 0.0
  %2416 = vmatprep.subr.mxu0 0.0
  %2417 = vmatpush2.msra.mxu0 0.0
  %2418 = vmatprep.subr.mxu0 0.0
  %2419 = vmatpush2.msra.mxu0 0.0
  %2420 = vmatprep.subr.mxu0 0.0
  %2421 = vmatpush2.msra.mxu0 0.0
  %2422 = vmatprep.subr.mxu0 0.0
  %2423 = vmatpush2.msra.mxu0 0.0
  %2424 = vmatprep.subr.mxu0 0.0
  %2425 = vmatpush2.msra.mxu0 0.0
  %2426 = vmatprep.subr.mxu0 0.0
  %2427 = vmatpush2.msra.mxu0 0.0
  %2428 = vmatprep.subr.mxu0 0.0
  %2429 = vmatpush2.msra.mxu0 0.0
  %2430 = vmatprep.subr.mxu0 0.0
  %2431 = vmatpush2.msra.mxu0 0.0
  %2432 = vmatprep.subr.mxu0 0.0
  %2433 = vmatpush2.msra.mxu0 0.0
  %2434 = vmatprep.subr.mxu0 0.0
  %2435 = vmatpush2.msra.mxu0 0.0
  %2436 = vmatprep.subr.mxu0 0.0
  %2437 = vmatpush2.msra.mxu0 0.0
  %2438 = vmatprep.subr.mxu0 0.0
  %2439 = vmatpush2.msra.mxu0 0.0
  %2440 = vmatprep.subr.mxu0 0.0
  %2441 = vmatpush2.msra.mxu0 0.0
  %2442 = vmatprep.mubr.f32.mxu0 0.0
  %2443 = vmatmul.mubr.f32.gmra.mxu0 %v2376
  %v2444 = vpop.f32.mrf.mxu0
  %v2445 = vadd.f32 0.0, %v2444
  %v2446 = vpop.f32.mrf.mxu0
  %2447 = vdwg.mxu0
  %v2448 = vsel %vm125, %v2196, 0
  %2450 = vmatprep.subr.mxu0 0.0
  %2451 = vmatpush1.msra.mxu0 0.0
  %2452 = vmatprep.subr.mxu0 0.0
  %2453 = vmatpush1.msra.mxu0 0.0
  %2454 = vmatprep.subr.mxu0 0.0
  %2455 = vmatpush1.msra.mxu0 0.0
  %2456 = vmatprep.subr.mxu0 0.0
  %2457 = vmatpush1.msra.mxu0 0.0
  %2458 = vmatprep.subr.mxu0 0.0
  %2459 = vmatpush1.msra.mxu0 0.0
  %2460 = vmatprep.subr.mxu0 0.0
  %2461 = vmatpush1.msra.mxu0 0.0
  %2462 = vmatprep.subr.mxu0 0.0
  %2463 = vmatpush1.msra.mxu0 0.0
  %2464 = vmatprep.subr.mxu0 0.0
  %2465 = vmatpush1.msra.mxu0 0.0
  %2466 = vmatprep.subr.mxu0 0.0
  %2467 = vmatpush1.msra.mxu0 0.0
  %2468 = vmatprep.subr.mxu0 0.0
  %2469 = vmatpush1.msra.mxu0 0.0
  %2470 = vmatprep.subr.mxu0 0.0
  %2471 = vmatpush1.msra.mxu0 0.0
  %2472 = vmatprep.subr.mxu0 0.0
  %2473 = vmatpush1.msra.mxu0 0.0
  %2474 = vmatprep.subr.mxu0 0.0
  %2475 = vmatpush1.msra.mxu0 %v47
  %2476 = vmatprep.subr.mxu0 0.0
  %2477 = vmatpush1.msra.mxu0 %v46
  %2478 = vmatprep.subr.mxu0 0.0
  %2479 = vmatpush1.msra.mxu0 %v45
  %2480 = vmatprep.subr.mxu0 0.0
  %2481 = vmatpush1.msra.mxu0 %v44
  %2482 = vmatprep.subr.mxu0 0.0
  %2483 = vmatpush2.msra.mxu0 0.0
  %2484 = vmatprep.subr.mxu0 0.0
  %2485 = vmatpush2.msra.mxu0 0.0
  %2486 = vmatprep.subr.mxu0 0.0
  %2487 = vmatpush2.msra.mxu0 0.0
  %2488 = vmatprep.subr.mxu0 0.0
  %2489 = vmatpush2.msra.mxu0 0.0
  %2490 = vmatprep.subr.mxu0 0.0
  %2491 = vmatpush2.msra.mxu0 0.0
  %2492 = vmatprep.subr.mxu0 0.0
  %2493 = vmatpush2.msra.mxu0 0.0
  %2494 = vmatprep.subr.mxu0 0.0
  %2495 = vmatpush2.msra.mxu0 0.0
  %2496 = vmatprep.subr.mxu0 0.0
  %2497 = vmatpush2.msra.mxu0 0.0
  %2498 = vmatprep.subr.mxu0 0.0
  %2499 = vmatpush2.msra.mxu0 0.0
  %2500 = vmatprep.subr.mxu0 0.0
  %2501 = vmatpush2.msra.mxu0 0.0
  %2502 = vmatprep.subr.mxu0 0.0
  %2503 = vmatpush2.msra.mxu0 0.0
  %2504 = vmatprep.subr.mxu0 0.0
  %2505 = vmatpush2.msra.mxu0 0.0
  %2506 = vmatprep.subr.mxu0 0.0
  %2507 = vmatpush2.msra.mxu0 0.0
  %2508 = vmatprep.subr.mxu0 0.0
  %2509 = vmatpush2.msra.mxu0 0.0
  %2510 = vmatprep.subr.mxu0 0.0
  %2511 = vmatpush2.msra.mxu0 0.0
  %2512 = vmatprep.subr.mxu0 0.0
  %2513 = vmatpush2.msra.mxu0 0.0
  %2514 = vmatprep.mubr.f32.mxu0 0.0
  %2515 = vmatmul.mubr.f32.gmra.mxu0 %v2448
  %v2516 = vpop.f32.mrf.mxu0
  %v2517 = vadd.f32 0.0, %v2516
  %v2518 = vpop.f32.mrf.mxu0
  %2519 = vdwg.mxu0
  %v2520 = vadd.f32 %v2445, %v2517
  %v2521 = vadd.f32 %v2520, %v385
  %v2522 = vxor.u32 %v2521, 2147483648
  %v2523 = vmul.f32 %v2522, 1.442695
  %v2524 = vpow.pop %v2523
  %v2525 = vadd.f32 %v2524, 1.0
  %v2526 = vrcp.pop %v2525
  %v2527 = vmul.f32 1.0, %v2526
  %v2528 = vadd.f32 %v2445, %v385
  %v2529 = vadd.f32 %v2517, %v396
  %2531 = vrot.lane.b32.xlu0 %v2529, 64
  %v2532 = vpop.permute.xlu0 %2531
  %v2534 = vmul.f32 %v2527, %v2532
  %2536 = vrot.lane.b32.xlu0 %v2534, 64
  %v2537 = vpop.permute.xlu0 %2536
  %v2539 = vadd.f32 %v2528, %v2537
  %v2540 = vtanh.pop %v2539
  %v2541 = vsub.f32 1.0, %v2527
  %2543 = vrot.lane.b32.xlu0 %v2540, 96
  %v2544 = vpop.permute.xlu0 %2543
  %v2546 = vmul.f32 %v2541, %v2544
  %v2547 = vmul.f32 %v2527, %v2193
  %v2548 = vadd.f32 %v2546, %v2547
  %2550 = vrot.lane.b32.xlu0 %v2548, 96
  %v2551 = vpop.permute.xlu0 %2550
  %2553 = vst.msk [vmem:[#allocation2 + $0x18] sm:$0xf] %vm422, %v2551
  %s2554 = scalar_lea.vmem %s0, 28
  %v2555 = vld [vmem:[%s2554] sm:$0xf]
  %v2557 = vsel %vm51, %v2555, 0
  %2559 = vmatprep.subr.mxu0 0.0
  %2560 = vmatpush1.msra.mxu0 0.0
  %2561 = vmatprep.subr.mxu0 0.0
  %2562 = vmatpush1.msra.mxu0 0.0
  %2563 = vmatprep.subr.mxu0 0.0
  %2564 = vmatpush1.msra.mxu0 0.0
  %2565 = vmatprep.subr.mxu0 0.0
  %2566 = vmatpush1.msra.mxu0 0.0
  %2567 = vmatprep.subr.mxu0 0.0
  %2568 = vmatpush1.msra.mxu0 0.0
  %2569 = vmatprep.subr.mxu0 0.0
  %2570 = vmatpush1.msra.mxu0 0.0
  %2571 = vmatprep.subr.mxu0 0.0
  %2572 = vmatpush1.msra.mxu0 0.0
  %2573 = vmatprep.subr.mxu0 0.0
  %2574 = vmatpush1.msra.mxu0 0.0
  %2575 = vmatprep.subr.mxu0 0.0
  %2576 = vmatpush1.msra.mxu0 0.0
  %2577 = vmatprep.subr.mxu0 0.0
  %2578 = vmatpush1.msra.mxu0 0.0
  %2579 = vmatprep.subr.mxu0 0.0
  %2580 = vmatpush1.msra.mxu0 0.0
  %2581 = vmatprep.subr.mxu0 0.0
  %2582 = vmatpush1.msra.mxu0 0.0
  %2583 = vmatprep.subr.mxu0 0.0
  %2584 = vmatpush1.msra.mxu0 0.0
  %2585 = vmatprep.subr.mxu0 0.0
  %2586 = vmatpush1.msra.mxu0 0.0
  %2587 = vmatprep.subr.mxu0 0.0
  %2588 = vmatpush1.msra.mxu0 %v35
  %2589 = vmatprep.subr.mxu0 0.0
  %2590 = vmatpush1.msra.mxu0 %v34
  %2591 = vmatprep.subr.mxu0 0.0
  %2592 = vmatpush2.msra.mxu0 0.0
  %2593 = vmatprep.subr.mxu0 0.0
  %2594 = vmatpush2.msra.mxu0 0.0
  %2595 = vmatprep.subr.mxu0 0.0
  %2596 = vmatpush2.msra.mxu0 0.0
  %2597 = vmatprep.subr.mxu0 0.0
  %2598 = vmatpush2.msra.mxu0 0.0
  %2599 = vmatprep.subr.mxu0 0.0
  %2600 = vmatpush2.msra.mxu0 0.0
  %2601 = vmatprep.subr.mxu0 0.0
  %2602 = vmatpush2.msra.mxu0 0.0
  %2603 = vmatprep.subr.mxu0 0.0
  %2604 = vmatpush2.msra.mxu0 0.0
  %2605 = vmatprep.subr.mxu0 0.0
  %2606 = vmatpush2.msra.mxu0 0.0
  %2607 = vmatprep.subr.mxu0 0.0
  %2608 = vmatpush2.msra.mxu0 0.0
  %2609 = vmatprep.subr.mxu0 0.0
  %2610 = vmatpush2.msra.mxu0 0.0
  %2611 = vmatprep.subr.mxu0 0.0
  %2612 = vmatpush2.msra.mxu0 0.0
  %2613 = vmatprep.subr.mxu0 0.0
  %2614 = vmatpush2.msra.mxu0 0.0
  %2615 = vmatprep.subr.mxu0 0.0
  %2616 = vmatpush2.msra.mxu0 0.0
  %2617 = vmatprep.subr.mxu0 0.0
  %2618 = vmatpush2.msra.mxu0 0.0
  %2619 = vmatprep.subr.mxu0 0.0
  %2620 = vmatpush2.msra.mxu0 0.0
  %2621 = vmatprep.subr.mxu0 0.0
  %2622 = vmatpush2.msra.mxu0 0.0
  %2623 = vmatprep.mubr.f32.mxu0 0.0
  %2624 = vmatmul.mubr.f32.gmra.mxu0 %v2557
  %v2625 = vpop.f32.mrf.mxu0
  %v2626 = vadd.f32 0.0, %v2625
  %v2627 = vpop.f32.mrf.mxu0
  %2628 = vdwg.mxu0
  %2629 = vmatprep.subr.mxu0 0.0
  %2630 = vmatpush1.msra.mxu0 0.0
  %2631 = vmatprep.subr.mxu0 0.0
  %2632 = vmatpush1.msra.mxu0 0.0
  %2633 = vmatprep.subr.mxu0 0.0
  %2634 = vmatpush1.msra.mxu0 0.0
  %2635 = vmatprep.subr.mxu0 0.0
  %2636 = vmatpush1.msra.mxu0 0.0
  %2637 = vmatprep.subr.mxu0 0.0
  %2638 = vmatpush1.msra.mxu0 0.0
  %2639 = vmatprep.subr.mxu0 0.0
  %2640 = vmatpush1.msra.mxu0 0.0
  %2641 = vmatprep.subr.mxu0 0.0
  %2642 = vmatpush1.msra.mxu0 0.0
  %2643 = vmatprep.subr.mxu0 0.0
  %2644 = vmatpush1.msra.mxu0 0.0
  %2645 = vmatprep.subr.mxu0 0.0
  %2646 = vmatpush1.msra.mxu0 0.0
  %2647 = vmatprep.subr.mxu0 0.0
  %2648 = vmatpush1.msra.mxu0 0.0
  %2649 = vmatprep.subr.mxu0 0.0
  %2650 = vmatpush1.msra.mxu0 0.0
  %2651 = vmatprep.subr.mxu0 0.0
  %2652 = vmatpush1.msra.mxu0 0.0
  %2653 = vmatprep.subr.mxu0 0.0
  %2654 = vmatpush1.msra.mxu0 %v43
  %2655 = vmatprep.subr.mxu0 0.0
  %2656 = vmatpush1.msra.mxu0 %v42
  %2657 = vmatprep.subr.mxu0 0.0
  %2658 = vmatpush1.msra.mxu0 %v41
  %2659 = vmatprep.subr.mxu0 0.0
  %2660 = vmatpush1.msra.mxu0 %v40
  %2661 = vmatprep.subr.mxu0 0.0
  %2662 = vmatpush2.msra.mxu0 0.0
  %2663 = vmatprep.subr.mxu0 0.0
  %2664 = vmatpush2.msra.mxu0 0.0
  %2665 = vmatprep.subr.mxu0 0.0
  %2666 = vmatpush2.msra.mxu0 0.0
  %2667 = vmatprep.subr.mxu0 0.0
  %2668 = vmatpush2.msra.mxu0 0.0
  %2669 = vmatprep.subr.mxu0 0.0
  %2670 = vmatpush2.msra.mxu0 0.0
  %2671 = vmatprep.subr.mxu0 0.0
  %2672 = vmatpush2.msra.mxu0 0.0
  %2673 = vmatprep.subr.mxu0 0.0
  %2674 = vmatpush2.msra.mxu0 0.0
  %2675 = vmatprep.subr.mxu0 0.0
  %2676 = vmatpush2.msra.mxu0 0.0
  %2677 = vmatprep.subr.mxu0 0.0
  %2678 = vmatpush2.msra.mxu0 0.0
  %2679 = vmatprep.subr.mxu0 0.0
  %2680 = vmatpush2.msra.mxu0 0.0
  %2681 = vmatprep.subr.mxu0 0.0
  %2682 = vmatpush2.msra.mxu0 0.0
  %2683 = vmatprep.subr.mxu0 0.0
  %2684 = vmatpush2.msra.mxu0 0.0
  %2685 = vmatprep.subr.mxu0 0.0
  %2686 = vmatpush2.msra.mxu0 0.0
  %2687 = vmatprep.subr.mxu0 0.0
  %2688 = vmatpush2.msra.mxu0 0.0
  %2689 = vmatprep.subr.mxu0 0.0
  %2690 = vmatpush2.msra.mxu0 0.0
  %2691 = vmatprep.subr.mxu0 0.0
  %2692 = vmatpush2.msra.mxu0 0.0
  %2693 = vmatprep.mubr.f32.mxu0 0.0
  %2694 = vmatmul.mubr.f32.gmra.mxu0 %v2376
  %v2695 = vpop.f32.mrf.mxu0
  %v2696 = vadd.f32 0.0, %v2695
  %v2697 = vpop.f32.mrf.mxu0
  %2698 = vdwg.mxu0
  %v2699 = vadd.f32 %v2626, %v2696
  %v2700 = vadd.f32 %v2699, %v203
  %v2701 = vxor.u32 %v2700, 2147483648
  %v2702 = vmul.f32 %v2701, 1.442695
  %v2703 = vpow.pop %v2702
  %v2704 = vadd.f32 %v2703, 1.0
  %v2705 = vrcp.pop %v2704
  %v2706 = vmul.f32 1.0, %v2705
  %v2707 = vadd.f32 %v2626, %v203
  %v2708 = vadd.f32 %v2696, %v214
  %2710 = vrot.lane.b32.xlu0 %v2708, 64
  %v2711 = vpop.permute.xlu0 %2710
  %v2713 = vmul.f32 %v2706, %v2711
  %2715 = vrot.lane.b32.xlu0 %v2713, 64
  %v2716 = vpop.permute.xlu0 %2715
  %v2718 = vadd.f32 %v2707, %v2716
  %v2719 = vtanh.pop %v2718
  %v2720 = vsub.f32 1.0, %v2706
  %2722 = vrot.lane.b32.xlu0 %v2719, 96
  %v2723 = vpop.permute.xlu0 %2722
  %v2725 = vmul.f32 %v2720, %v2723
  %v2726 = vmul.f32 %v2706, %v2372
  %v2727 = vadd.f32 %v2725, %v2726
  %2729 = vrot.lane.b32.xlu0 %v2727, 96
  %v2730 = vpop.permute.xlu0 %2729
  %v2731 = vsel %vm125, %v2730, 0
  %2733 = vmatprep.subr.mxu0 0.0
  %2734 = vmatpush1.msra.mxu0 0.0
  %2735 = vmatprep.subr.mxu0 0.0
  %2736 = vmatpush1.msra.mxu0 0.0
  %2737 = vmatprep.subr.mxu0 0.0
  %2738 = vmatpush1.msra.mxu0 0.0
  %2739 = vmatprep.subr.mxu0 0.0
  %2740 = vmatpush1.msra.mxu0 0.0
  %2741 = vmatprep.subr.mxu0 0.0
  %2742 = vmatpush1.msra.mxu0 0.0
  %2743 = vmatprep.subr.mxu0 0.0
  %2744 = vmatpush1.msra.mxu0 0.0
  %2745 = vmatprep.subr.mxu0 0.0
  %2746 = vmatpush1.msra.mxu0 0.0
  %2747 = vmatprep.subr.mxu0 0.0
  %2748 = vmatpush1.msra.mxu0 0.0
  %2749 = vmatprep.subr.mxu0 0.0
  %2750 = vmatpush1.msra.mxu0 0.0
  %2751 = vmatprep.subr.mxu0 0.0
  %2752 = vmatpush1.msra.mxu0 0.0
  %2753 = vmatprep.subr.mxu0 0.0
  %2754 = vmatpush1.msra.mxu0 0.0
  %2755 = vmatprep.subr.mxu0 0.0
  %2756 = vmatpush1.msra.mxu0 0.0
  %2757 = vmatprep.subr.mxu0 0.0
  %2758 = vmatpush1.msra.mxu0 %v39
  %2759 = vmatprep.subr.mxu0 0.0
  %2760 = vmatpush1.msra.mxu0 %v38
  %2761 = vmatprep.subr.mxu0 0.0
  %2762 = vmatpush1.msra.mxu0 %v37
  %2763 = vmatprep.subr.mxu0 0.0
  %2764 = vmatpush1.msra.mxu0 %v36
  %2765 = vmatprep.subr.mxu0 0.0
  %2766 = vmatpush2.msra.mxu0 0.0
  %2767 = vmatprep.subr.mxu0 0.0
  %2768 = vmatpush2.msra.mxu0 0.0
  %2769 = vmatprep.subr.mxu0 0.0
  %2770 = vmatpush2.msra.mxu0 0.0
  %2771 = vmatprep.subr.mxu0 0.0
  %2772 = vmatpush2.msra.mxu0 0.0
  %2773 = vmatprep.subr.mxu0 0.0
  %2774 = vmatpush2.msra.mxu0 0.0
  %2775 = vmatprep.subr.mxu0 0.0
  %2776 = vmatpush2.msra.mxu0 0.0
  %2777 = vmatprep.subr.mxu0 0.0
  %2778 = vmatpush2.msra.mxu0 0.0
  %2779 = vmatprep.subr.mxu0 0.0
  %2780 = vmatpush2.msra.mxu0 0.0
  %2781 = vmatprep.subr.mxu0 0.0
  %2782 = vmatpush2.msra.mxu0 0.0
  %2783 = vmatprep.subr.mxu0 0.0
  %2784 = vmatpush2.msra.mxu0 0.0
  %2785 = vmatprep.subr.mxu0 0.0
  %2786 = vmatpush2.msra.mxu0 0.0
  %2787 = vmatprep.subr.mxu0 0.0
  %2788 = vmatpush2.msra.mxu0 0.0
  %2789 = vmatprep.subr.mxu0 0.0
  %2790 = vmatpush2.msra.mxu0 0.0
  %2791 = vmatprep.subr.mxu0 0.0
  %2792 = vmatpush2.msra.mxu0 0.0
  %2793 = vmatprep.subr.mxu0 0.0
  %2794 = vmatpush2.msra.mxu0 0.0
  %2795 = vmatprep.subr.mxu0 0.0
  %2796 = vmatpush2.msra.mxu0 0.0
  %2797 = vmatprep.mubr.f32.mxu0 0.0
  %2798 = vmatmul.mubr.f32.gmra.mxu0 %v2731
  %v2799 = vpop.f32.mrf.mxu0
  %v2800 = vadd.f32 0.0, %v2799
  %v2801 = vpop.f32.mrf.mxu0
  %2802 = vdwg.mxu0
  %v2803 = vsel %vm125, %v2551, 0
  %2805 = vmatprep.subr.mxu0 0.0
  %2806 = vmatpush1.msra.mxu0 0.0
  %2807 = vmatprep.subr.mxu0 0.0
  %2808 = vmatpush1.msra.mxu0 0.0
  %2809 = vmatprep.subr.mxu0 0.0
  %2810 = vmatpush1.msra.mxu0 0.0
  %2811 = vmatprep.subr.mxu0 0.0
  %2812 = vmatpush1.msra.mxu0 0.0
  %2813 = vmatprep.subr.mxu0 0.0
  %2814 = vmatpush1.msra.mxu0 0.0
  %2815 = vmatprep.subr.mxu0 0.0
  %2816 = vmatpush1.msra.mxu0 0.0
  %2817 = vmatprep.subr.mxu0 0.0
  %2818 = vmatpush1.msra.mxu0 0.0
  %2819 = vmatprep.subr.mxu0 0.0
  %2820 = vmatpush1.msra.mxu0 0.0
  %2821 = vmatprep.subr.mxu0 0.0
  %2822 = vmatpush1.msra.mxu0 0.0
  %2823 = vmatprep.subr.mxu0 0.0
  %2824 = vmatpush1.msra.mxu0 0.0
  %2825 = vmatprep.subr.mxu0 0.0
  %2826 = vmatpush1.msra.mxu0 0.0
  %2827 = vmatprep.subr.mxu0 0.0
  %2828 = vmatpush1.msra.mxu0 0.0
  %2829 = vmatprep.subr.mxu0 0.0
  %2830 = vmatpush1.msra.mxu0 %v47
  %2831 = vmatprep.subr.mxu0 0.0
  %2832 = vmatpush1.msra.mxu0 %v46
  %2833 = vmatprep.subr.mxu0 0.0
  %2834 = vmatpush1.msra.mxu0 %v45
  %2835 = vmatprep.subr.mxu0 0.0
  %2836 = vmatpush1.msra.mxu0 %v44
  %2837 = vmatprep.subr.mxu0 0.0
  %2838 = vmatpush2.msra.mxu0 0.0
  %2839 = vmatprep.subr.mxu0 0.0
  %2840 = vmatpush2.msra.mxu0 0.0
  %2841 = vmatprep.subr.mxu0 0.0
  %2842 = vmatpush2.msra.mxu0 0.0
  %2843 = vmatprep.subr.mxu0 0.0
  %2844 = vmatpush2.msra.mxu0 0.0
  %2845 = vmatprep.subr.mxu0 0.0
  %2846 = vmatpush2.msra.mxu0 0.0
  %2847 = vmatprep.subr.mxu0 0.0
  %2848 = vmatpush2.msra.mxu0 0.0
  %2849 = vmatprep.subr.mxu0 0.0
  %2850 = vmatpush2.msra.mxu0 0.0
  %2851 = vmatprep.subr.mxu0 0.0
  %2852 = vmatpush2.msra.mxu0 0.0
  %2853 = vmatprep.subr.mxu0 0.0
  %2854 = vmatpush2.msra.mxu0 0.0
  %2855 = vmatprep.subr.mxu0 0.0
  %2856 = vmatpush2.msra.mxu0 0.0
  %2857 = vmatprep.subr.mxu0 0.0
  %2858 = vmatpush2.msra.mxu0 0.0
  %2859 = vmatprep.subr.mxu0 0.0
  %2860 = vmatpush2.msra.mxu0 0.0
  %2861 = vmatprep.subr.mxu0 0.0
  %2862 = vmatpush2.msra.mxu0 0.0
  %2863 = vmatprep.subr.mxu0 0.0
  %2864 = vmatpush2.msra.mxu0 0.0
  %2865 = vmatprep.subr.mxu0 0.0
  %2866 = vmatpush2.msra.mxu0 0.0
  %2867 = vmatprep.subr.mxu0 0.0
  %2868 = vmatpush2.msra.mxu0 0.0
  %2869 = vmatprep.mubr.f32.mxu0 0.0
  %2870 = vmatmul.mubr.f32.gmra.mxu0 %v2803
  %v2871 = vpop.f32.mrf.mxu0
  %v2872 = vadd.f32 0.0, %v2871
  %v2873 = vpop.f32.mrf.mxu0
  %2874 = vdwg.mxu0
  %v2875 = vadd.f32 %v2800, %v2872
  %v2876 = vadd.f32 %v2875, %v385
  %v2877 = vxor.u32 %v2876, 2147483648
  %v2878 = vmul.f32 %v2877, 1.442695
  %v2879 = vpow.pop %v2878
  %v2880 = vadd.f32 %v2879, 1.0
  %v2881 = vrcp.pop %v2880
  %v2882 = vmul.f32 1.0, %v2881
  %v2883 = vadd.f32 %v2800, %v385
  %v2884 = vadd.f32 %v2872, %v396
  %2886 = vrot.lane.b32.xlu0 %v2884, 64
  %v2887 = vpop.permute.xlu0 %2886
  %v2889 = vmul.f32 %v2882, %v2887
  %2891 = vrot.lane.b32.xlu0 %v2889, 64
  %v2892 = vpop.permute.xlu0 %2891
  %v2894 = vadd.f32 %v2883, %v2892
  %v2895 = vtanh.pop %v2894
  %v2896 = vsub.f32 1.0, %v2882
  %2898 = vrot.lane.b32.xlu0 %v2895, 96
  %v2899 = vpop.permute.xlu0 %2898
  %v2901 = vmul.f32 %v2896, %v2899
  %v2902 = vmul.f32 %v2882, %v2548
  %v2903 = vadd.f32 %v2901, %v2902
  %2905 = vrot.lane.b32.xlu0 %v2903, 96
  %v2906 = vpop.permute.xlu0 %2905
  %2908 = vst.msk [vmem:[#allocation2 + $0x1c] sm:$0xf] %vm422, %v2906
  %v2909 = vld [vmem:[#allocation2] sm:$0xff]
  %v2910 = vld [vmem:[#allocation2 + $0x8] sm:$0xff]
  %v2911 = vld [vmem:[#allocation2 + $0x10] sm:$0xff]
  %v2912 = vld [vmem:[#allocation2 + $0x18] sm:$0xff]
  %v2913 = vld [vmem:[%s1] sm:$0xff]
  %v2914 = vld [vmem:[%s1 + $0x8] sm:$0xff]
  %v2915 = vld [vmem:[%s1 + $0x10] sm:$0xff]
  %v2916 = vld [vmem:[%s1 + $0x18] sm:$0xff]
  %v2917 = vld [vmem:[%s5] sm:$0xff]
  %v2918 = vld [vmem:[%s5 + $0x8] sm:$0xff]
  %v2919 = vld [vmem:[%s5 + $0x10] sm:$0xff]
  %v2920 = vld [vmem:[%s5 + $0x18] sm:$0xff]
  %v2921 = vld [vmem:[%s5 + $0x20] sm:$0xff]
  %v2922 = vld [vmem:[%s5 + $0x28] sm:$0xff]
  %v2924 = vsel %vm51, %v2913, 0
  %v2927 = vsel %vm51, %v2914, 0
  %v2930 = vsel %vm51, %v2915, 0
  %v2933 = vsel %vm51, %v2916, 0
  %2935 = vmatprep.subr.mxu0 0.0
  %2936 = vmatpush1.msra.mxu0 0.0
  %2937 = vmatprep.subr.mxu0 0.0
  %2938 = vmatpush1.msra.mxu0 0.0
  %2939 = vmatprep.subr.mxu0 0.0
  %2940 = vmatpush1.msra.mxu0 0.0
  %2941 = vmatprep.subr.mxu0 0.0
  %2942 = vmatpush1.msra.mxu0 0.0
  %2943 = vmatprep.subr.mxu0 0.0
  %2944 = vmatpush1.msra.mxu0 0.0
  %2945 = vmatprep.subr.mxu0 0.0
  %2946 = vmatpush1.msra.mxu0 0.0
  %2947 = vmatprep.subr.mxu0 0.0
  %2948 = vmatpush1.msra.mxu0 0.0
  %2949 = vmatprep.subr.mxu0 0.0
  %2950 = vmatpush1.msra.mxu0 0.0
  %2951 = vmatprep.subr.mxu0 0.0
  %2952 = vmatpush1.msra.mxu0 0.0
  %2953 = vmatprep.subr.mxu0 0.0
  %2954 = vmatpush1.msra.mxu0 0.0
  %2955 = vmatprep.subr.mxu0 0.0
  %2956 = vmatpush1.msra.mxu0 0.0
  %2957 = vmatprep.subr.mxu0 0.0
  %2958 = vmatpush1.msra.mxu0 0.0
  %2959 = vmatprep.subr.mxu0 0.0
  %2960 = vmatpush1.msra.mxu0 0.0
  %2961 = vmatprep.subr.mxu0 0.0
  %2962 = vmatpush1.msra.mxu0 0.0
  %2963 = vmatprep.subr.mxu0 0.0
  %2964 = vmatpush1.msra.mxu0 %v2922
  %2965 = vmatprep.subr.mxu0 0.0
  %2966 = vmatpush1.msra.mxu0 %v2921
  %2967 = vmatprep.subr.mxu0 0.0
  %2968 = vmatpush2.msra.mxu0 0.0
  %2969 = vmatprep.subr.mxu0 0.0
  %2970 = vmatpush2.msra.mxu0 0.0
  %2971 = vmatprep.subr.mxu0 0.0
  %2972 = vmatpush2.msra.mxu0 0.0
  %2973 = vmatprep.subr.mxu0 0.0
  %2974 = vmatpush2.msra.mxu0 0.0
  %2975 = vmatprep.subr.mxu0 0.0
  %2976 = vmatpush2.msra.mxu0 0.0
  %2977 = vmatprep.subr.mxu0 0.0
  %2978 = vmatpush2.msra.mxu0 0.0
  %2979 = vmatprep.subr.mxu0 0.0
  %2980 = vmatpush2.msra.mxu0 0.0
  %2981 = vmatprep.subr.mxu0 0.0
  %2982 = vmatpush2.msra.mxu0 0.0
  %2983 = vmatprep.subr.mxu0 0.0
  %2984 = vmatpush2.msra.mxu0 0.0
  %2985 = vmatprep.subr.mxu0 0.0
  %2986 = vmatpush2.msra.mxu0 0.0
  %2987 = vmatprep.subr.mxu0 0.0
  %2988 = vmatpush2.msra.mxu0 0.0
  %2989 = vmatprep.subr.mxu0 0.0
  %2990 = vmatpush2.msra.mxu0 0.0
  %2991 = vmatprep.subr.mxu0 0.0
  %2992 = vmatpush2.msra.mxu0 0.0
  %2993 = vmatprep.subr.mxu0 0.0
  %2994 = vmatpush2.msra.mxu0 0.0
  %2995 = vmatprep.subr.mxu0 0.0
  %2996 = vmatpush2.msra.mxu0 0.0
  %2997 = vmatprep.subr.mxu0 0.0
  %2998 = vmatpush2.msra.mxu0 0.0
  %2999 = vmatprep.mubr.f32.mxu0 0.0
  %3000 = vmatmul.mubr.f32.gmra.mxu0 %v2924
  %v3001 = vpop.f32.mrf.mxu0
  %v3002 = vadd.f32 0.0, %v3001
  %v3003 = vpop.f32.mrf.mxu0
  %3004 = vmatprep.mubr.f32.mxu0 0.0
  %3005 = vmatmul.mubr.f32.gmra.mxu0 %v2927
  %v3006 = vpop.f32.mrf.mxu0
  %v3007 = vadd.f32 0.0, %v3006
  %v3008 = vpop.f32.mrf.mxu0
  %3009 = vmatprep.mubr.f32.mxu0 0.0
  %3010 = vmatmul.mubr.f32.gmra.mxu0 %v2930
  %v3011 = vpop.f32.mrf.mxu0
  %v3012 = vadd.f32 0.0, %v3011
  %v3013 = vpop.f32.mrf.mxu0
  %3014 = vmatprep.mubr.f32.mxu0 0.0
  %3015 = vmatmul.mubr.f32.gmra.mxu0 %v2933
  %v3016 = vpop.f32.mrf.mxu0
  %v3017 = vadd.f32 0.0, %v3016
  %v3018 = vpop.f32.mrf.mxu0
  %3019 = vdwg.mxu0
  %v3021 = vsel %vm125, %v2909, 0
  %v3024 = vsel %vm125, %v2910, 0
  %v3027 = vsel %vm125, %v2911, 0
  %v3030 = vsel %vm125, %v2912, 0
  %3032 = vmatprep.subr.mxu0 0.0
  %3033 = vmatpush1.msra.mxu0 0.0
  %3034 = vmatprep.subr.mxu0 0.0
  %3035 = vmatpush1.msra.mxu0 0.0
  %3036 = vmatprep.subr.mxu0 0.0
  %3037 = vmatpush1.msra.mxu0 0.0
  %3038 = vmatprep.subr.mxu0 0.0
  %3039 = vmatpush1.msra.mxu0 0.0
  %3040 = vmatprep.subr.mxu0 0.0
  %3041 = vmatpush1.msra.mxu0 0.0
  %3042 = vmatprep.subr.mxu0 0.0
  %3043 = vmatpush1.msra.mxu0 0.0
  %3044 = vmatprep.subr.mxu0 0.0
  %3045 = vmatpush1.msra.mxu0 0.0
  %3046 = vmatprep.subr.mxu0 0.0
  %3047 = vmatpush1.msra.mxu0 0.0
  %3048 = vmatprep.subr.mxu0 0.0
  %3049 = vmatpush1.msra.mxu0 0.0
  %3050 = vmatprep.subr.mxu0 0.0
  %3051 = vmatpush1.msra.mxu0 0.0
  %3052 = vmatprep.subr.mxu0 0.0
  %3053 = vmatpush1.msra.mxu0 0.0
  %3054 = vmatprep.subr.mxu0 0.0
  %3055 = vmatpush1.msra.mxu0 0.0
  %3056 = vmatprep.subr.mxu0 0.0
  %3057 = vmatpush1.msra.mxu0 %v2920
  %3058 = vmatprep.subr.mxu0 0.0
  %3059 = vmatpush1.msra.mxu0 %v2919
  %3060 = vmatprep.subr.mxu0 0.0
  %3061 = vmatpush1.msra.mxu0 %v2918
  %3062 = vmatprep.subr.mxu0 0.0
  %3063 = vmatpush1.msra.mxu0 %v2917
  %3064 = vmatprep.subr.mxu0 0.0
  %3065 = vmatpush2.msra.mxu0 0.0
  %3066 = vmatprep.subr.mxu0 0.0
  %3067 = vmatpush2.msra.mxu0 0.0
  %3068 = vmatprep.subr.mxu0 0.0
  %3069 = vmatpush2.msra.mxu0 0.0
  %3070 = vmatprep.subr.mxu0 0.0
  %3071 = vmatpush2.msra.mxu0 0.0
  %3072 = vmatprep.subr.mxu0 0.0
  %3073 = vmatpush2.msra.mxu0 0.0
  %3074 = vmatprep.subr.mxu0 0.0
  %3075 = vmatpush2.msra.mxu0 0.0
  %3076 = vmatprep.subr.mxu0 0.0
  %3077 = vmatpush2.msra.mxu0 0.0
  %3078 = vmatprep.subr.mxu0 0.0
  %3079 = vmatpush2.msra.mxu0 0.0
  %3080 = vmatprep.subr.mxu0 0.0
  %3081 = vmatpush2.msra.mxu0 0.0
  %3082 = vmatprep.subr.mxu0 0.0
  %3083 = vmatpush2.msra.mxu0 0.0
  %3084 = vmatprep.subr.mxu0 0.0
  %3085 = vmatpush2.msra.mxu0 0.0
  %3086 = vmatprep.subr.mxu0 0.0
  %3087 = vmatpush2.msra.mxu0 0.0
  %3088 = vmatprep.subr.mxu0 0.0
  %3089 = vmatpush2.msra.mxu0 0.0
  %3090 = vmatprep.subr.mxu0 0.0
  %3091 = vmatpush2.msra.mxu0 0.0
  %3092 = vmatprep.subr.mxu0 0.0
  %3093 = vmatpush2.msra.mxu0 0.0
  %3094 = vmatprep.subr.mxu0 0.0
  %3095 = vmatpush2.msra.mxu0 0.0
  %3096 = vmatprep.mubr.f32.mxu0 0.0
  %3097 = vmatmul.mubr.f32.gmra.mxu0 %v3021
  %v3098 = vpop.f32.mrf.mxu0
  %v3099 = vadd.f32 %v3002, %v3098
  %v3100 = vpop.f32.mrf.mxu0
  %3101 = vmatprep.mubr.f32.mxu0 0.0
  %3102 = vmatmul.mubr.f32.gmra.mxu0 %v3024
  %v3103 = vpop.f32.mrf.mxu0
  %v3104 = vadd.f32 %v3007, %v3103
  %v3105 = vpop.f32.mrf.mxu0
  %3106 = vmatprep.mubr.f32.mxu0 0.0
  %3107 = vmatmul.mubr.f32.gmra.mxu0 %v3027
  %v3108 = vpop.f32.mrf.mxu0
  %v3109 = vadd.f32 %v3012, %v3108
  %v3110 = vpop.f32.mrf.mxu0
  %3111 = vmatprep.mubr.f32.mxu0 0.0
  %3112 = vmatmul.mubr.f32.gmra.mxu0 %v3030
  %v3113 = vpop.f32.mrf.mxu0
  %v3114 = vadd.f32 %v3017, %v3113
  %v3115 = vpop.f32.mrf.mxu0
  %3116 = vdwg.mxu0
  %v3117 = vld [vmem:[%s6] sm:$0x1]
  %v3119 = vlaneseq
  %v3120 = vshrl.u32 %v3119, 7
  %v3121 = vsub.s32 0, %v3120
  %v3122 = vrot.slane %v3117, %v3121
  %v3124 = vadd.f32 %v3099, %v3122
  %v3125 = vadd.f32 %v3104, %v3122
  %v3126 = vadd.f32 %v3109, %v3122
  %v3127 = vadd.f32 %v3114, %v3122
  %v3128 = vmax.f32 %v3124, 0.0
  %v3129 = vmax.f32 %v3125, 0.0
  %v3130 = vmax.f32 %v3126, 0.0
  %v3131 = vmax.f32 %v3127, 0.0
  %v3132 = vld [vmem:[%s7] sm:$0xff]
  %v3133 = vld [vmem:[%s7 + $0x8] sm:$0xff]
  %v3134 = vld [vmem:[%s7 + $0x10] sm:$0xff]
  %v3135 = vld [vmem:[%s7 + $0x18] sm:$0xff]
  %v3136 = vld [vmem:[#allocation3] sm:$0x1]
  %v3138 = vlaneseq
  %v3139 = vshrl.u32 %v3138, 7
  %v3140 = vsub.s32 0, %v3139
  %v3141 = vrot.slane %v3136, %v3140
  %v3144 = vsel %vm125, %v3128, 0
  %v3147 = vsel %vm125, %v3129, 0
  %v3150 = vsel %vm125, %v3130, 0
  %v3153 = vsel %vm125, %v3131, 0
  %3155 = vmatprep.subr.mxu0 0.0
  %3156 = vmatpush1.msra.mxu0 0.0
  %3157 = vmatprep.subr.mxu0 0.0
  %3158 = vmatpush1.msra.mxu0 0.0
  %3159 = vmatprep.subr.mxu0 0.0
  %3160 = vmatpush1.msra.mxu0 0.0
  %3161 = vmatprep.subr.mxu0 0.0
  %3162 = vmatpush1.msra.mxu0 0.0
  %3163 = vmatprep.subr.mxu0 0.0
  %3164 = vmatpush1.msra.mxu0 0.0
  %3165 = vmatprep.subr.mxu0 0.0
  %3166 = vmatpush1.msra.mxu0 0.0
  %3167 = vmatprep.subr.mxu0 0.0
  %3168 = vmatpush1.msra.mxu0 0.0
  %3169 = vmatprep.subr.mxu0 0.0
  %3170 = vmatpush1.msra.mxu0 0.0
  %3171 = vmatprep.subr.mxu0 0.0
  %3172 = vmatpush1.msra.mxu0 0.0
  %3173 = vmatprep.subr.mxu0 0.0
  %3174 = vmatpush1.msra.mxu0 0.0
  %3175 = vmatprep.subr.mxu0 0.0
  %3176 = vmatpush1.msra.mxu0 0.0
  %3177 = vmatprep.subr.mxu0 0.0
  %3178 = vmatpush1.msra.mxu0 0.0
  %3179 = vmatprep.subr.mxu0 0.0
  %3180 = vmatpush1.msra.mxu0 %v3135
  %3181 = vmatprep.subr.mxu0 0.0
  %3182 = vmatpush1.msra.mxu0 %v3134
  %3183 = vmatprep.subr.mxu0 0.0
  %3184 = vmatpush1.msra.mxu0 %v3133
  %3185 = vmatprep.subr.mxu0 0.0
  %3186 = vmatpush1.msra.mxu0 %v3132
  %3187 = vmatprep.subr.mxu0 0.0
  %3188 = vmatpush2.msra.mxu0 0.0
  %3189 = vmatprep.subr.mxu0 0.0
  %3190 = vmatpush2.msra.mxu0 0.0
  %3191 = vmatprep.subr.mxu0 0.0
  %3192 = vmatpush2.msra.mxu0 0.0
  %3193 = vmatprep.subr.mxu0 0.0
  %3194 = vmatpush2.msra.mxu0 0.0
  %3195 = vmatprep.subr.mxu0 0.0
  %3196 = vmatpush2.msra.mxu0 0.0
  %3197 = vmatprep.subr.mxu0 0.0
  %3198 = vmatpush2.msra.mxu0 0.0
  %3199 = vmatprep.subr.mxu0 0.0
  %3200 = vmatpush2.msra.mxu0 0.0
  %3201 = vmatprep.subr.mxu0 0.0
  %3202 = vmatpush2.msra.mxu0 0.0
  %3203 = vmatprep.subr.mxu0 0.0
  %3204 = vmatpush2.msra.mxu0 0.0
  %3205 = vmatprep.subr.mxu0 0.0
  %3206 = vmatpush2.msra.mxu0 0.0
  %3207 = vmatprep.subr.mxu0 0.0
  %3208 = vmatpush2.msra.mxu0 0.0
  %3209 = vmatprep.subr.mxu0 0.0
  %3210 = vmatpush2.msra.mxu0 0.0
  %3211 = vmatprep.subr.mxu0 0.0
  %3212 = vmatpush2.msra.mxu0 0.0
  %3213 = vmatprep.subr.mxu0 0.0
  %3214 = vmatpush2.msra.mxu0 0.0
  %3215 = vmatprep.subr.mxu0 0.0
  %3216 = vmatpush2.msra.mxu0 0.0
  %3217 = vmatprep.subr.mxu0 0.0
  %3218 = vmatpush2.msra.mxu0 0.0
  %3219 = vmatprep.mubr.f32.mxu0 0.0
  %3220 = vmatmul.mubr.f32.gmra.mxu0 %v3144
  %v3221 = vpop.f32.mrf.mxu0
  %v3222 = vadd.f32 %v3141, %v3221
  %v3223 = vpop.f32.mrf.mxu0
  %3224 = vmatprep.mubr.f32.mxu0 0.0
  %3225 = vmatmul.mubr.f32.gmra.mxu0 %v3147
  %v3226 = vpop.f32.mrf.mxu0
  %v3227 = vadd.f32 %v3141, %v3226
  %v3228 = vpop.f32.mrf.mxu0
  %3229 = vmatprep.mubr.f32.mxu0 0.0
  %3230 = vmatmul.mubr.f32.gmra.mxu0 %v3150
  %v3231 = vpop.f32.mrf.mxu0
  %v3232 = vadd.f32 %v3141, %v3231
  %v3233 = vpop.f32.mrf.mxu0
  %3234 = vmatprep.mubr.f32.mxu0 0.0
  %3235 = vmatmul.mubr.f32.gmra.mxu0 %v3153
  %v3236 = vpop.f32.mrf.mxu0
  %v3237 = vadd.f32 %v3141, %v3236
  %v3238 = vpop.f32.mrf.mxu0
  %3239 = vdwg.mxu0
  %v3240 = vxor.u32 %v3222, 2147483648
  %v3241 = vxor.u32 %v3227, 2147483648
  %v3242 = vxor.u32 %v3232, 2147483648
  %v3243 = vxor.u32 %v3237, 2147483648
  %v3244 = vmul.f32 %v3240, 1.442695
  %v3245 = vpow.pop %v3244
  %v3246 = vmul.f32 %v3241, 1.442695
  %v3247 = vpow.pop %v3246
  %v3248 = vmul.f32 %v3242, 1.442695
  %v3249 = vpow.pop %v3248
  %v3250 = vmul.f32 %v3243, 1.442695
  %v3251 = vpow.pop %v3250
  %v3252 = vadd.f32 %v3245, 1.0
  %v3253 = vadd.f32 %v3247, 1.0
  %v3254 = vadd.f32 %v3249, 1.0
  %v3255 = vadd.f32 %v3251, 1.0
  %v3256 = vrcp.pop %v3252
  %v3257 = vmul.f32 1.0, %v3256
  %v3258 = vrcp.pop %v3253
  %v3259 = vmul.f32 1.0, %v3258
  %v3260 = vrcp.pop %v3254
  %v3261 = vmul.f32 1.0, %v3260
  %v3262 = vrcp.pop %v3255
  %v3263 = vmul.f32 1.0, %v3262
  %vm3264 = vcmask 7168
  %3265 = vst.msk [vmem:[%s9] sm:$0xff] %vm3264, %v3257
  %3266 = vst.msk [vmem:[%s9 + $0x8] sm:$0xff] %vm3264, %v3259
  %3267 = vst.msk [vmem:[%s9 + $0x10] sm:$0xff] %vm3264, %v3261
  %3268 = vst.msk [vmem:[%s9 + $0x18] sm:$0xff] %vm3264, %v3263
  // Predicated region
  $region38: #{tpu_custom_call.1} parent=0 // pred_check
    _
  $region39: #{tpu_custom_call.1} parent=0 // pred_check_branch
    %3270 = sbr.rel (0) target = $region41
  $region40: #{tpu_custom_call.1} parent=0 // pred_region
    _
  $region41: #{tpu_custom_call.1} parent=0 // pred_fallthru
    _
  // Predicated region
  $region42: #{tpu_custom_call.1} parent=0 // pred_check
    _
  $region43: #{tpu_custom_call.1} parent=0 // pred_check_branch
    %3272 = sbr.rel (0) target = $region45
  $region44: #{tpu_custom_call.1} parent=0 // pred_region
    _
  $region45: #{tpu_custom_call.1} parent=0 // pred_fallthru
    _

</llo_original>
